<compile_context>
chip_gen: v5e
topology: v5e:2x2
jax: 0.10.0
libtpu: 0.0.40
codegen_flags: <defaults>
</compile_context>

<pallas_src>
import functools

import jax
import jax.numpy as jnp
import numpy as np
from jax.experimental import pallas as pl
from jax.experimental.pallas import tpu as pltpu


# ----------------------------------------------------------------------------
# helpers
# ----------------------------------------------------------------------------
def _round_up(x, m):
    return ((x + m - 1) // m) * m


def _pick_chunk(T, max_chunk):
    """Largest divisor of T that is <= max_chunk (always >= 1)."""
    for c in range(min(T, max_chunk), 0, -1):
        if T % c == 0:
            return c
    return 1


def _device_limits():
    """Per-generation VMEM budget and chunk cap (v7x: 64 MiB VMEM, others: 128 MiB)."""
    try:
        kind = jax.devices()[0].device_kind.lower()
    except Exception:
        kind = ""
    if "v7" in kind:
        return {"vmem_limit_bytes": 48 * 1024 * 1024, "max_chunk": 8}
    return {"vmem_limit_bytes": 64 * 1024 * 1024, "max_chunk": 16}


# ----------------------------------------------------------------------------
# Fused per-layer kernel: input projection + bidirectional recurrence
# (+ MLP head epilogue on the last layer).
#
# grid = (T // chunk,) sequential ("arbitrary").  Per grid step the kernel:
#   - computes GI_fwd / GI_bwd for the chunk from the pipelined activation blocks
#     (forward-ordered and reverse-ordered streams of the SAME arrays),
#   - runs `chunk` GRU steps per direction, carrying h_fwd/h_bwd as SSA values,
#   - (non-last layers) stores the chunk of seq_fwd / seq_bwd lane-dense,
#   - (last layer, last step) runs the 3-layer MLP head on the final hiddens.
# ----------------------------------------------------------------------------
def _gru_layer_kernel(*refs, n_in, hidden_p, chunk, batch_p, last):
    H, B = hidden_p, batch_p

    i0 = 0
    xf = refs[i0:i0 + n_in]; i0 += n_in              # fwd-ordered activation streams
    xb = refs[i0:i0 + n_in]; i0 += n_in              # bwd-ordered activation streams
    wf = refs[i0:i0 + n_in]; i0 += n_in              # W_ih^T parts, fwd direction
    wb = refs[i0:i0 + n_in]; i0 += n_in              # W_ih^T parts, bwd direction
    (bih_f_ref, bih_b_ref, whh_f_ref, whh_b_ref,
     bhh_f_ref, bhh_b_ref) = refs[i0:i0 + 6]; i0 += 6
    if last:
        (w1f_ref, w1b_ref, b1_ref, w2_ref, b2_ref,
         w3_ref, b3_ref) = refs[i0:i0 + 7]; i0 += 7
        logits_ref = refs[i0]; i0 += 1
        seqf_ref = seqb_ref = None
    else:
        seqf_ref, seqb_ref = refs[i0:i0 + 2]; i0 += 2
    hf_scr, hb_scr = refs[i0:i0 + 2]

    c = pl.program_id(0)
    nc = pl.num_programs(0)

    @pl.when(c == 0)
    def _init():
        hf_scr[...] = jnp.zeros_like(hf_scr)
        hb_scr[...] = jnp.zeros_like(hb_scr)

    # --- fused input projection for this chunk, both directions (f32 accumulate)
    gi_f = bih_f_ref[...]                            # (1, 3H_p) f32, broadcasts
    gi_b = bih_b_ref[...]
    for k in range(n_in):
        gi_f = gi_f + jnp.dot(xf[k][...], wf[k][...],
                              preferred_element_type=jnp.float32)
        gi_b = gi_b + jnp.dot(xb[k][...], wb[k][...],
                              preferred_element_type=jnp.float32)

    whh_f = whh_f_ref[...]                           # f32, VMEM-resident
    whh_b = whh_b_ref[...]
    bhh_f = bhh_f_ref[...]
    bhh_b = bhh_b_ref[...]

    def cell(h_prev, gi, whh, bhh):
        # recurrence kept fully in f32: h is never quantized across timesteps
        gh = jnp.dot(h_prev, whh, preferred_element_type=jnp.float32) + bhh
        r = jax.nn.sigmoid(gi[:, 0:H] + gh[:, 0:H])
        z = jax.nn.sigmoid(gi[:, H:2 * H] + gh[:, H:2 * H])
        n = jnp.tanh(gi[:, 2 * H:3 * H] + r * gh[:, 2 * H:3 * H])
        return (1.0 - z) * n + z * h_prev

    # h carried as SSA values through the statically-unrolled chunk;
    # scratch touched only once per chunk (top read, bottom write).
    h_f = hf_scr[...]
    h_b = hb_scr[...]
    for i in range(chunk):
        j = chunk - 1 - i
        # forward: original time t = c*chunk + i
        h_f = cell(h_f, gi_f[i * B:(i + 1) * B, :], whh_f, bhh_f)
        # backward: original time t = (nc-1-c)*chunk + j  (runs T-1 .. 0)
        h_b = cell(h_b, gi_b[j * B:(j + 1) * B, :], whh_b, bhh_b)
        if not last:
            seqf_ref[pl.ds(i * B, B), :] = h_f.astype(seqf_ref.dtype)
            seqb_ref[pl.ds(j * B, B), :] = h_b.astype(seqb_ref.dtype)
    hf_scr[...] = h_f
    hb_scr[...] = h_b

    if last:
        # MLP head epilogue on final hiddens (h_n[-2], h_n[-1]); the (B, 2H) concat is
        # never materialized (W1 pre-split into fwd/bwd halves). Dropouts = identity.
        @pl.when(c == nc - 1)
        def _head():
            cdt = w1f_ref.dtype
            h1 = jnp.maximum(
                jnp.dot(h_f.astype(cdt), w1f_ref[...],
                        preferred_element_type=jnp.float32)
                + jnp.dot(h_b.astype(cdt), w1b_ref[...],
                          preferred_element_type=jnp.float32)
                + b1_ref[...], 0.0)
            h2 = jnp.maximum(
                jnp.dot(h1.astype(cdt), w2_ref[...],
                        preferred_element_type=jnp.float32)
                + b2_ref[...], 0.0)
            logits_ref[...] = (
                jnp.dot(h2.astype(cdt), w3_ref[...],
                        preferred_element_type=jnp.float32)
                + b3_ref[...])


def _gru_layer_call(xs, lp, *, head, nc, chunk, batch_p, hidden_p,
                    seq_dtype, vmem_limit):
    """One fused pallas_call for one bidirectional GRU layer."""
    n_in = len(xs)
    R = chunk * batch_p
    G = 3 * hidden_p
    last = head is not None
    TB = xs[0].shape[0]

    wf_parts = lp["fwd"]["wih_parts"]
    wb_parts = lp["bwd"]["wih_parts"]
    assert len(wf_parts) == n_in and len(wb_parts) == n_in

    in_specs = []
    operands = []
    # forward-ordered activation streams
    for x in xs:
        in_specs.append(pl.BlockSpec((R, x.shape[1]), lambda c: (c, 0)))
        operands.append(x)
    # backward-ordered activation streams (same arrays, reversed chunk order)
    for x in xs:
        in_specs.append(pl.BlockSpec((R, x.shape[1]), lambda c: (nc - 1 - c, 0)))
        operands.append(x)
    # VMEM-resident weights / biases (constant index maps)
    # TODO(synk): pipeline_mode=pl.Buffered(1) on these for v7x VMEM budgeting.
    for w in list(wf_parts) + list(wb_parts):
        in_specs.append(pl.BlockSpec(w.shape, lambda c: (0, 0)))
        operands.append(w)
    for a in (lp["fwd"]["bih"], lp["bwd"]["bih"],
              lp["fwd"]["whh"], lp["bwd"]["whh"],
              lp["fwd"]["bhh"], lp["bwd"]["bhh"]):
        in_specs.append(pl.BlockSpec(a.shape, lambda c: (0, 0)))
        operands.append(a)
    if last:
        for a in (head["w1f"], head["w1b"], head["b1"],
                  head["w2"], head["b2"], head["w3"], head["b3"]):
            in_specs.append(pl.BlockSpec(a.shape, lambda c: (0, 0)))
            operands.append(a)

    if last:
        C_p = head["w3"].shape[1]
        out_shape = jax.ShapeDtypeStruct((batch_p, C_p), jnp.float32)
        out_specs = pl.BlockSpec((batch_p, C_p), lambda c: (0, 0))
    else:
        out_shape = (jax.ShapeDtypeStruct((TB, hidden_p), seq_dtype),
                     jax.ShapeDtypeStruct((TB, hidden_p), seq_dtype))
        out_specs = [pl.BlockSpec((R, hidden_p), lambda c: (c, 0)),
                     pl.BlockSpec((R, hidden_p), lambda c: (nc - 1 - c, 0))]

    kernel = functools.partial(_gru_layer_kernel, n_in=n_in, hidden_p=hidden_p,
                               chunk=chunk, batch_p=batch_p, last=last)
    return pl.pallas_call(
        kernel,
        out_shape=out_shape,
        grid_spec=pltpu.PrefetchScalarGridSpec(
            num_scalar_prefetch=0,
            grid=(nc,),
            in_specs=in_specs,
            out_specs=out_specs,
            scratch_shapes=[pltpu.VMEM((batch_p, hidden_p), jnp.float32),
                            pltpu.VMEM((batch_p, hidden_p), jnp.float32)],
        ),
        compiler_params=pltpu.CompilerParams(
            dimension_semantics=("arbitrary",),
            vmem_limit_bytes=vmem_limit),
        name="gru_layer_head" if last else "gru_layer",
    )(*operands)


# ----------------------------------------------------------------------------
# One-time parameter preparation: pad to lane-dense shapes (per-gate), transpose
# already done at init, cast once to compute_dtype. Recurrent W_hh / all biases
# stay f32 (recurrence + accumulations are f32 for numerical stability).
# ----------------------------------------------------------------------------
def prepare_params(params, *, input_size, hidden_size, num_layers, num_classes,
                   compute_dtype=jnp.float32, lane_multiple=128):
    H = hidden_size
    H_p = _round_up(H, lane_multiple)
    D_p = _round_up(input_size, 8)
    H2 = max(hidden_size // 2, 1)
    H2_p = _round_up(H2, lane_multiple)
    C_p = _round_up(num_classes, lane_multiple)
    cd = compute_dtype

    def pad_w_gates(w_t, rows_p):
        # (rows, 3H) -> (rows_p, 3H_p) with per-gate column padding (zeros)
        rows = w_t.shape[0]
        w = w_t.reshape(rows, 3, H)
        w = jnp.pad(w, ((0, rows_p - rows), (0, 0), (0, H_p - H)))
        return w.reshape(rows_p, 3 * H_p)

    def pad_b_gates(b):
        b = b.reshape(3, H)
        b = jnp.pad(b, ((0, 0), (0, H_p - H)))
        return b.reshape(1, 3 * H_p).astype(jnp.float32)

    gru = []
    for l in range(num_layers):
        layer = {}
        for d in ("fwd", "bwd"):
            p = params["gru"][l][d]
            if l == 0:
                parts = [pad_w_gates(p["wih_t"], D_p).astype(cd)]
            else:
                # previous layer's concat(seq_f, seq_b) is fed as two streams, so the
                # corresponding W_ih^T halves are kept separate (no concat needed).
                parts = [pad_w_gates(p["wih_t"][:H], H_p).astype(cd),
                         pad_w_gates(p["wih_t"][H:], H_p).astype(cd)]
            layer[d] = {
                "wih_parts": parts,
                "bih": pad_b_gates(p["bih"]),
                "whh": pad_w_gates(p["whh_t"], H_p).astype(jnp.float32),
                "bhh": pad_b_gates(p["bhh"]),
            }
        gru.append(layer)

    def pad2(w, r_p, c_p):
        return jnp.pad(w, ((0, r_p - w.shape[0]), (0, c_p - w.shape[1])))

    m = params["mlp"]
    head = {
        "w1f": pad2(m["w1_t"][:H], H_p, H_p).astype(cd),
        "w1b": pad2(m["w1_t"][H:], H_p, H_p).astype(cd),
        "b1": jnp.pad(m["b1"], (0, H_p - H)).reshape(1, H_p).astype(jnp.float32),
        "w2": pad2(m["w2_t"], H_p, H2_p).astype(cd),
        "b2": jnp.pad(m["b2"], (0, H2_p - H2)).reshape(1, H2_p).astype(jnp.float32),
        "w3": pad2(m["w3_t"], H2_p, C_p).astype(cd),
        "b3": jnp.pad(m["b3"], (0, C_p - num_classes)).reshape(1, C_p).astype(jnp.float32),
    }

    limits = _device_limits()
    meta = {
        "input_size": input_size, "hidden_size": hidden_size,
        "num_layers": num_layers, "num_classes": num_classes,
        "H_p": H_p, "D_p": D_p, "H2_p": H2_p, "C_p": C_p,
        "act_dtype": cd,
        "batch_multiple": 16 if np.dtype(cd) == np.dtype(jnp.bfloat16) else 8,
        "max_chunk": limits["max_chunk"],
        "vmem_limit_bytes": limits["vmem_limit_bytes"],
    }
    return {"gru": gru, "mlp": head, "meta": meta}


# ----------------------------------------------------------------------------
# Full forward (matches SignGRUClassifier_MLP.forward, bidirectional=True)
# ----------------------------------------------------------------------------
def sign_gru_classifier_mlp(x_btf, prep):
    meta = prep["meta"]
    B, T, D = x_btf.shape
    assert D == meta["input_size"]
    H_p = meta["H_p"]
    B_p = _round_up(B, meta["batch_multiple"])
    chunk = _pick_chunk(T, meta["max_chunk"])
    nc = T // chunk

    # one-time layout change: (B, T, D) -> flat time-major (T*B_p, D_p), pre-cast once
    x = jnp.transpose(x_btf, (1, 0, 2)).astype(jnp.float32)
    x = jnp.pad(x, ((0, 0), (0, B_p - B), (0, meta["D_p"] - D)))
    x = x.reshape(T * B_p, meta["D_p"]).astype(meta["act_dtype"])

    xs = [x]
    logits_p = None
    num_layers = meta["num_layers"]
    for l in range(num_layers):
        last = (l == num_layers - 1)
        out = _gru_layer_call(
            xs, prep["gru"][l],
            head=prep["mlp"] if last else None,
            nc=nc, chunk=chunk, batch_p=B_p, hidden_p=H_p,
            seq_dtype=meta["act_dtype"],
            vmem_limit=meta["vmem_limit_bytes"])
        if last:
            logits_p = out                      # (B_p, C_p) f32
        else:
            xs = [out[0], out[1]]               # seq_f, seq_b (no concat materialized)
        # inter-layer dropout = identity (eval)

    return logits_p[:B, :meta["num_classes"]]


# ----------------------------------------------------------------------------
# Deterministic parameter init (PyTorch-style uniform bounds; synthetic weights)
# ----------------------------------------------------------------------------
def init_params(key, input_size, hidden_size, num_layers, num_classes):
    H = hidden_size
    Hh = H // 2

    def u(k, shape, fan_in):
        b = 1.0 / float(np.sqrt(fan_in))
        return jax.random.uniform(k, shape, jnp.float32, -b, b)

    params = {"gru": [], "mlp": {}}
    k = key
    for l in range(num_layers):
        in_dim = input_size if l == 0 else 2 * H
        layer = {}
        for d in ("fwd", "bwd"):
            k, k1, k2, k3, k4 = jax.random.split(k, 5)
            layer[d] = {
                "wih_t": u(k1, (in_dim, 3 * H), H),   # = weight_ih^T
                "whh_t": u(k2, (H, 3 * H), H),        # = weight_hh^T
                "bih": u(k3, (3 * H,), H),
                "bhh": u(k4, (3 * H,), H),
            }
        params["gru"].append(layer)

    k, k1, k2, k3, k4, k5, k6 = jax.random.split(k, 7)
    params["mlp"] = {
        "w1_t": u(k1, (2 * H, H), 2 * H), "b1": u(k2, (H,), 2 * H),
        "w2_t": u(k3, (H, Hh), H),        "b2": u(k4, (Hh,), H),
        "w3_t": u(k5, (Hh, num_classes), Hh), "b3": u(k6, (num_classes,), Hh),
    }
    return params


# ----------------------------------------------------------------------------
# Pure-JAX reference (lax.scan GRU) for correctness check
# ----------------------------------------------------------------------------
def _ref_cell(h, x_t, p, H):
    gi = x_t @ p["wih_t"] + p["bih"]
    gh = h @ p["whh_t"] + p["bhh"]
    r = jax.nn.sigmoid(gi[:, :H] + gh[:, :H])
    z = jax.nn.sigmoid(gi[:, H:2 * H] + gh[:, H:2 * H])
    n = jnp.tanh(gi[:, 2 * H:] + r * gh[:, 2 * H:])
    return (1.0 - z) * n + z * h


def ref_forward(x_btf, params, H, num_layers):
    x = jnp.transpose(x_btf, (1, 0, 2)).astype(jnp.float32)
    B = x.shape[1]
    last = None
    for l in range(num_layers):
        pf, pb = params["gru"][l]["fwd"], params["gru"][l]["bwd"]
        h0 = jnp.zeros((B, H), jnp.float32)
        hF, seqF = jax.lax.scan(lambda h, xt: ((hn := _ref_cell(h, xt, pf, H)), hn), h0, x)
        hB, seqBr = jax.lax.scan(lambda h, xt: ((hn := _ref_cell(h, xt, pb, H)), hn), h0, x[::-1])
        x = jnp.concatenate([seqF, seqBr[::-1]], axis=-1)
        last = jnp.concatenate([hF, hB], axis=-1)
    m = params["mlp"]
    h1 = jnp.maximum(last @ m["w1_t"] + m["b1"], 0.0)
    h2 = jnp.maximum(h1 @ m["w2_t"] + m["b2"], 0.0)
    return h2 @ m["w3_t"] + m["b3"]


if __name__ == "__main__":
    B, T = 2, 8
    input_size, hidden_size, num_layers, num_classes = 16, 32, 2, 5

    key = jax.random.PRNGKey(0)
    kx, kp = jax.random.split(key)
    x = jax.random.normal(kx, (B, T, input_size), jnp.float32)
    params = init_params(kp, input_size, hidden_size, num_layers, num_classes)

    ref = ref_forward(x, params, hidden_size, num_layers)

    # f32 path: matches the reference closely
    prep32 = prepare_params(params, input_size=input_size, hidden_size=hidden_size,
                            num_layers=num_layers, num_classes=num_classes,
                            compute_dtype=jnp.float32)
    out = sign_gru_classifier_mlp(x, prep32)
    out = jax.block_until_ready(out)
    assert out.shape == (B, num_classes)
    assert np.allclose(np.asarray(out), np.asarray(ref), rtol=1e-4, atol=1e-4), \
        "f32 kernel mismatch vs reference"

    # bf16 path: input-projection weights / activations / head in bf16,
    # recurrent state and W_hh stay f32 (no compounding quantization over T)
    prep16 = prepare_params(params, input_size=input_size, hidden_size=hidden_size,
                            num_layers=num_layers, num_classes=num_classes,
                            compute_dtype=jnp.bfloat16)
    out_bf16 = sign_gru_classifier_mlp(x, prep16)
    out_bf16 = jax.block_until_ready(out_bf16)
    assert np.allclose(np.asarray(out_bf16), np.asarray(ref), rtol=5e-2, atol=5e-2), \
        "bf16 kernel mismatch vs reference"

    print("KERNEL_OK")
</pallas_src>

<mosaic_0001>
module attributes {stable_mosaic.version = 11 : i64} {
  func.func @gru_layer(%arg0: i32, %arg1: memref<64x16xf32, #tpu.memory_space<vmem>>, %arg2: memref<64x16xf32, #tpu.memory_space<vmem>>, %arg3: memref<16x384xf32, #tpu.memory_space<vmem>>, %arg4: memref<16x384xf32, #tpu.memory_space<vmem>>, %arg5: memref<1x384xf32, #tpu.memory_space<vmem>>, %arg6: memref<1x384xf32, #tpu.memory_space<vmem>>, %arg7: memref<128x384xf32, #tpu.memory_space<vmem>>, %arg8: memref<128x384xf32, #tpu.memory_space<vmem>>, %arg9: memref<1x384xf32, #tpu.memory_space<vmem>>, %arg10: memref<1x384xf32, #tpu.memory_space<vmem>>, %arg11: memref<64x128xf32, #tpu.memory_space<vmem>>, %arg12: memref<64x128xf32, #tpu.memory_space<vmem>>, %arg13: memref<8x128xf32, #tpu.memory_space<vmem>>, %arg14: memref<8x128xf32, #tpu.memory_space<vmem>>) attributes {dimension_semantics = [#tpu.dimension_semantics<arbitrary>], iteration_bounds = array<i64: 1>, scalar_prefetch = 0 : i64, scratch_operands = 2 : i64, tpu.core_type = #tpu.core_type<tc>, window_params = [{transform_indices = @transform_0, window_bounds = array<i64: 64, 16>}, {transform_indices = @transform_1, window_bounds = array<i64: 64, 16>}, {pipeline_mode = #tpu.pipeline_mode<synchronous>, transform_indices = @transform_2, window_bounds = array<i64: 16, 384>}, {pipeline_mode = #tpu.pipeline_mode<synchronous>, transform_indices = @transform_3, window_bounds = array<i64: 16, 384>}, {pipeline_mode = #tpu.pipeline_mode<synchronous>, transform_indices = @transform_4, window_bounds = array<i64: 1, 384>}, {pipeline_mode = #tpu.pipeline_mode<synchronous>, transform_indices = @transform_5, window_bounds = array<i64: 1, 384>}, {pipeline_mode = #tpu.pipeline_mode<synchronous>, transform_indices = @transform_6, window_bounds = array<i64: 128, 384>}, {pipeline_mode = #tpu.pipeline_mode<synchronous>, transform_indices = @transform_7, window_bounds = array<i64: 128, 384>}, {pipeline_mode = #tpu.pipeline_mode<synchronous>, transform_indices = @transform_8, window_bounds = array<i64: 1, 384>}, {pipeline_mode = #tpu.pipeline_mode<synchronous>, transform_indices = @transform_9, window_bounds = array<i64: 1, 384>}, {transform_indices = @transform_10, window_bounds = array<i64: 64, 128>}, {transform_indices = @transform_11, window_bounds = array<i64: 64, 128>}]} {
    %c0_i32 = arith.constant 0 : i32
    %0 = arith.cmpi eq, %arg0, %c0_i32 : i32
    %1 = arith.extui %0 : i1 to i32
    %c0_i32_0 = arith.constant 0 : i32
    %2 = arith.cmpi ne, %1, %c0_i32_0 : i32
    scf.if %2 {
      %cst_118 = arith.constant 0.000000e+00 : f32
      %519 = vector.broadcast %cst_118 : f32 to vector<8x128xf32>
      %c0_119 = arith.constant 0 : index
      %c0_120 = arith.constant 0 : index
      %520 = vector.load %arg13[%c0_119, %c0_120] : memref<8x128xf32, #tpu.memory_space<vmem>>, vector<8x128xf32>
      tpu.vector_store %arg13[%c0_119, %c0_120], %519 {strides = array<i32>} : memref<8x128xf32, #tpu.memory_space<vmem>>, vector<8x128xf32>,
      %cst_121 = arith.constant 0.000000e+00 : f32
      %521 = vector.broadcast %cst_121 : f32 to vector<8x128xf32>
      %c0_122 = arith.constant 0 : index
      %c0_123 = arith.constant 0 : index
      %522 = vector.load %arg14[%c0_122, %c0_123] : memref<8x128xf32, #tpu.memory_space<vmem>>, vector<8x128xf32>
      tpu.vector_store %arg14[%c0_122, %c0_123], %521 {strides = array<i32>} : memref<8x128xf32, #tpu.memory_space<vmem>>, vector<8x128xf32>,
    } else {
    }
    %c0 = arith.constant 0 : index
    %c0_1 = arith.constant 0 : index
    %3 = vector.load %arg5[%c0, %c0_1] : memref<1x384xf32, #tpu.memory_space<vmem>>, vector<1x384xf32>
    %c0_2 = arith.constant 0 : index
    %c0_3 = arith.constant 0 : index
    %4 = vector.load %arg6[%c0_2, %c0_3] : memref<1x384xf32, #tpu.memory_space<vmem>>, vector<1x384xf32>
    %c0_4 = arith.constant 0 : index
    %c0_5 = arith.constant 0 : index
    %5 = vector.load %arg1[%c0_4, %c0_5] : memref<64x16xf32, #tpu.memory_space<vmem>>, vector<64x16xf32>
    %c0_6 = arith.constant 0 : index
    %c0_7 = arith.constant 0 : index
    %6 = vector.load %arg3[%c0_6, %c0_7] : memref<16x384xf32, #tpu.memory_space<vmem>>, vector<16x384xf32>
    %cst = arith.constant dense<0.000000e+00> : vector<64x384xf32>
    %7 = tpu.matmul %5, %6, %cst {dimension_numbers = #tpu.dot_dimension_numbers<[1], [0], [0], [1], [0, 0, 1, 1], [], []>} : vector<64x16xf32>, vector<16x384xf32>, vector<64x384xf32> -> vector<64x384xf32>
    %8 = vector.broadcast %3 : vector<1x384xf32> to vector<64x384xf32>
    %9 = arith.addf %8, %7 : vector<64x384xf32>
    %c0_8 = arith.constant 0 : index
    %c0_9 = arith.constant 0 : index
    %10 = vector.load %arg2[%c0_8, %c0_9] : memref<64x16xf32, #tpu.memory_space<vmem>>, vector<64x16xf32>
    %c0_10 = arith.constant 0 : index
    %c0_11 = arith.constant 0 : index
    %11 = vector.load %arg4[%c0_10, %c0_11] : memref<16x384xf32, #tpu.memory_space<vmem>>, vector<16x384xf32>
    %cst_12 = arith.constant dense<0.000000e+00> : vector<64x384xf32>
    %12 = tpu.matmul %10, %11, %cst_12 {dimension_numbers = #tpu.dot_dimension_numbers<[1], [0], [0], [1], [0, 0, 1, 1], [], []>} : vector<64x16xf32>, vector<16x384xf32>, vector<64x384xf32> -> vector<64x384xf32>
    %13 = vector.broadcast %4 : vector<1x384xf32> to vector<64x384xf32>
    %14 = arith.addf %13, %12 : vector<64x384xf32>
    %c0_13 = arith.constant 0 : index
    %c0_14 = arith.constant 0 : index
    %15 = vector.load %arg7[%c0_13, %c0_14] : memref<128x384xf32, #tpu.memory_space<vmem>>, vector<128x384xf32>
    %c0_15 = arith.constant 0 : index
    %c0_16 = arith.constant 0 : index
    %16 = vector.load %arg8[%c0_15, %c0_16] : memref<128x384xf32, #tpu.memory_space<vmem>>, vector<128x384xf32>
    %c0_17 = arith.constant 0 : index
    %c0_18 = arith.constant 0 : index
    %17 = vector.load %arg9[%c0_17, %c0_18] : memref<1x384xf32, #tpu.memory_space<vmem>>, vector<1x384xf32>
    %c0_19 = arith.constant 0 : index
    %c0_20 = arith.constant 0 : index
    %18 = vector.load %arg10[%c0_19, %c0_20] : memref<1x384xf32, #tpu.memory_space<vmem>>, vector<1x384xf32>
    %c0_21 = arith.constant 0 : index
    %c0_22 = arith.constant 0 : index
    %19 = vector.load %arg13[%c0_21, %c0_22] : memref<8x128xf32, #tpu.memory_space<vmem>>, vector<8x128xf32>
    %c0_23 = arith.constant 0 : index
    %c0_24 = arith.constant 0 : index
    %20 = vector.load %arg14[%c0_23, %c0_24] : memref<8x128xf32, #tpu.memory_space<vmem>>, vector<8x128xf32>
    %21 = vector.extract_strided_slice %9 {offsets = [0, 0], sizes = [8, 384], strides = [1, 1]} : vector<64x384xf32> to vector<8x384xf32>
    %cst_25 = arith.constant dense<0.000000e+00> : vector<8x384xf32>
    %22 = tpu.matmul %19, %15, %cst_25 {dimension_numbers = #tpu.dot_dimension_numbers<[1], [0], [0], [1], [0, 0, 1, 1], [], []>} : vector<8x128xf32>, vector<128x384xf32>, vector<8x384xf32> -> vector<8x384xf32>
    %23 = vector.broadcast %17 : vector<1x384xf32> to vector<8x384xf32>
    %24 = arith.addf %22, %23 : vector<8x384xf32>
    %25 = vector.extract_strided_slice %21 {offsets = [0, 0], sizes = [8, 128], strides = [1, 1]} : vector<8x384xf32> to vector<8x128xf32>
    %26 = vector.extract_strided_slice %24 {offsets = [0, 0], sizes = [8, 128], strides = [1, 1]} : vector<8x384xf32> to vector<8x128xf32>
    %27 = arith.addf %25, %26 : vector<8x128xf32>
    %28 = arith.negf %27 : vector<8x128xf32>
    %29 = math.exp %28 : vector<8x128xf32>
    %cst_26 = arith.constant 1.000000e+00 : f32
    %30 = vector.broadcast %cst_26 : f32 to vector<8x128xf32>
    %31 = arith.addf %30, %29 : vector<8x128xf32>
    %32 = arith.divf %30, %31 : vector<8x128xf32>
    %33 = vector.extract_strided_slice %21 {offsets = [0, 128], sizes = [8, 128], strides = [1, 1]} : vector<8x384xf32> to vector<8x128xf32>
    %34 = vector.extract_strided_slice %24 {offsets = [0, 128], sizes = [8, 128], strides = [1, 1]} : vector<8x384xf32> to vector<8x128xf32>
    %35 = arith.addf %33, %34 : vector<8x128xf32>
    %36 = arith.negf %35 : vector<8x128xf32>
    %37 = math.exp %36 : vector<8x128xf32>
    %cst_27 = arith.constant 1.000000e+00 : f32
    %38 = vector.broadcast %cst_27 : f32 to vector<8x128xf32>
    %39 = arith.addf %38, %37 : vector<8x128xf32>
    %40 = arith.divf %38, %39 : vector<8x128xf32>
    %41 = vector.extract_strided_slice %21 {offsets = [0, 256], sizes = [8, 128], strides = [1, 1]} : vector<8x384xf32> to vector<8x128xf32>
    %42 = vector.extract_strided_slice %24 {offsets = [0, 256], sizes = [8, 128], strides = [1, 1]} : vector<8x384xf32> to vector<8x128xf32>
    %43 = arith.mulf %32, %42 : vector<8x128xf32>
    %44 = arith.addf %41, %43 : vector<8x128xf32>
    %45 = math.tanh %44 : vector<8x128xf32>
    %cst_28 = arith.constant 1.000000e+00 : f32
    %46 = vector.broadcast %cst_28 : f32 to vector<8x128xf32>
    %47 = arith.subf %46, %40 : vector<8x128xf32>
    %48 = arith.mulf %47, %45 : vector<8x128xf32>
    %49 = arith.mulf %40, %19 : vector<8x128xf32>
    %50 = arith.addf %48, %49 : vector<8x128xf32>
    %51 = vector.extract_strided_slice %14 {offsets = [56, 0], sizes = [8, 384], strides = [1, 1]} : vector<64x384xf32> to vector<8x384xf32>
    %cst_29 = arith.constant dense<0.000000e+00> : vector<8x384xf32>
    %52 = tpu.matmul %20, %16, %cst_29 {dimension_numbers = #tpu.dot_dimension_numbers<[1], [0], [0], [1], [0, 0, 1, 1], [], []>} : vector<8x128xf32>, vector<128x384xf32>, vector<8x384xf32> -> vector<8x384xf32>
    %53 = vector.broadcast %18 : vector<1x384xf32> to vector<8x384xf32>
    %54 = arith.addf %52, %53 : vector<8x384xf32>
    %55 = vector.extract_strided_slice %51 {offsets = [0, 0], sizes = [8, 128], strides = [1, 1]} : vector<8x384xf32> to vector<8x128xf32>
    %56 = vector.extract_strided_slice %54 {offsets = [0, 0], sizes = [8, 128], strides = [1, 1]} : vector<8x384xf32> to vector<8x128xf32>
    %57 = arith.addf %55, %56 : vector<8x128xf32>
    %58 = arith.negf %57 : vector<8x128xf32>
    %59 = math.exp %58 : vector<8x128xf32>
    %cst_30 = arith.constant 1.000000e+00 : f32
    %60 = vector.broadcast %cst_30 : f32 to vector<8x128xf32>
    %61 = arith.addf %60, %59 : vector<8x128xf32>
    %62 = arith.divf %60, %61 : vector<8x128xf32>
    %63 = vector.extract_strided_slice %51 {offsets = [0, 128], sizes = [8, 128], strides = [1, 1]} : vector<8x384xf32> to vector<8x128xf32>
    %64 = vector.extract_strided_slice %54 {offsets = [0, 128], sizes = [8, 128], strides = [1, 1]} : vector<8x384xf32> to vector<8x128xf32>
    %65 = arith.addf %63, %64 : vector<8x128xf32>
    %66 = arith.negf %65 : vector<8x128xf32>
    %67 = math.exp %66 : vector<8x128xf32>
    %cst_31 = arith.constant 1.000000e+00 : f32
    %68 = vector.broadcast %cst_31 : f32 to vector<8x128xf32>
    %69 = arith.addf %68, %67 : vector<8x128xf32>
    %70 = arith.divf %68, %69 : vector<8x128xf32>
    %71 = vector.extract_strided_slice %51 {offsets = [0, 256], sizes = [8, 128], strides = [1, 1]} : vector<8x384xf32> to vector<8x128xf32>
    %72 = vector.extract_strided_slice %54 {offsets = [0, 256], sizes = [8, 128], strides = [1, 1]} : vector<8x384xf32> to vector<8x128xf32>
    %73 = arith.mulf %62, %72 : vector<8x128xf32>
    %74 = arith.addf %71, %73 : vector<8x128xf32>
    %75 = math.tanh %74 : vector<8x128xf32>
    %cst_32 = arith.constant 1.000000e+00 : f32
    %76 = vector.broadcast %cst_32 : f32 to vector<8x128xf32>
    %77 = arith.subf %76, %70 : vector<8x128xf32>
    %78 = arith.mulf %77, %75 : vector<8x128xf32>
    %79 = arith.mulf %70, %20 : vector<8x128xf32>
    %80 = arith.addf %78, %79 : vector<8x128xf32>
    %c0_33 = arith.constant 0 : index
    %c0_34 = arith.constant 0 : index
    %81 = vector.load %arg11[%c0_33, %c0_34] : memref<64x128xf32, #tpu.memory_space<vmem>>, vector<8x128xf32>
    tpu.vector_store %arg11[%c0_33, %c0_34], %50 {strides = array<i32>} : memref<64x128xf32, #tpu.memory_space<vmem>>, vector<8x128xf32>,
    %c56 = arith.constant 56 : index
    %c0_35 = arith.constant 0 : index
    %82 = vector.load %arg12[%c56, %c0_35] : memref<64x128xf32, #tpu.memory_space<vmem>>, vector<8x128xf32>
    tpu.vector_store %arg12[%c56, %c0_35], %80 {strides = array<i32>} : memref<64x128xf32, #tpu.memory_space<vmem>>, vector<8x128xf32>,
    %83 = vector.extract_strided_slice %9 {offsets = [8, 0], sizes = [8, 384], strides = [1, 1]} : vector<64x384xf32> to vector<8x384xf32>
    %cst_36 = arith.constant dense<0.000000e+00> : vector<8x384xf32>
    %84 = tpu.matmul %50, %15, %cst_36 {dimension_numbers = #tpu.dot_dimension_numbers<[1], [0], [0], [1], [0, 0, 1, 1], [], []>} : vector<8x128xf32>, vector<128x384xf32>, vector<8x384xf32> -> vector<8x384xf32>
    %85 = vector.broadcast %17 : vector<1x384xf32> to vector<8x384xf32>
    %86 = arith.addf %84, %85 : vector<8x384xf32>
    %87 = vector.extract_strided_slice %83 {offsets = [0, 0], sizes = [8, 128], strides = [1, 1]} : vector<8x384xf32> to vector<8x128xf32>
    %88 = vector.extract_strided_slice %86 {offsets = [0, 0], sizes = [8, 128], strides = [1, 1]} : vector<8x384xf32> to vector<8x128xf32>
    %89 = arith.addf %87, %88 : vector<8x128xf32>
    %90 = arith.negf %89 : vector<8x128xf32>
    %91 = math.exp %90 : vector<8x128xf32>
    %cst_37 = arith.constant 1.000000e+00 : f32
    %92 = vector.broadcast %cst_37 : f32 to vector<8x128xf32>
    %93 = arith.addf %92, %91 : vector<8x128xf32>
    %94 = arith.divf %92, %93 : vector<8x128xf32>
    %95 = vector.extract_strided_slice %83 {offsets = [0, 128], sizes = [8, 128], strides = [1, 1]} : vector<8x384xf32> to vector<8x128xf32>
    %96 = vector.extract_strided_slice %86 {offsets = [0, 128], sizes = [8, 128], strides = [1, 1]} : vector<8x384xf32> to vector<8x128xf32>
    %97 = arith.addf %95, %96 : vector<8x128xf32>
    %98 = arith.negf %97 : vector<8x128xf32>
    %99 = math.exp %98 : vector<8x128xf32>
    %cst_38 = arith.constant 1.000000e+00 : f32
    %100 = vector.broadcast %cst_38 : f32 to vector<8x128xf32>
    %101 = arith.addf %100, %99 : vector<8x128xf32>
    %102 = arith.divf %100, %101 : vector<8x128xf32>
    %103 = vector.extract_strided_slice %83 {offsets = [0, 256], sizes = [8, 128], strides = [1, 1]} : vector<8x384xf32> to vector<8x128xf32>
    %104 = vector.extract_strided_slice %86 {offsets = [0, 256], sizes = [8, 128], strides = [1, 1]} : vector<8x384xf32> to vector<8x128xf32>
    %105 = arith.mulf %94, %104 : vector<8x128xf32>
    %106 = arith.addf %103, %105 : vector<8x128xf32>
    %107 = math.tanh %106 : vector<8x128xf32>
    %cst_39 = arith.constant 1.000000e+00 : f32
    %108 = vector.broadcast %cst_39 : f32 to vector<8x128xf32>
    %109 = arith.subf %108, %102 : vector<8x128xf32>
    %110 = arith.mulf %109, %107 : vector<8x128xf32>
    %111 = arith.mulf %102, %50 : vector<8x128xf32>
    %112 = arith.addf %110, %111 : vector<8x128xf32>
    %113 = vector.extract_strided_slice %14 {offsets = [48, 0], sizes = [8, 384], strides = [1, 1]} : vector<64x384xf32> to vector<8x384xf32>
    %cst_40 = arith.constant dense<0.000000e+00> : vector<8x384xf32>
    %114 = tpu.matmul %80, %16, %cst_40 {dimension_numbers = #tpu.dot_dimension_numbers<[1], [0], [0], [1], [0, 0, 1, 1], [], []>} : vector<8x128xf32>, vector<128x384xf32>, vector<8x384xf32> -> vector<8x384xf32>
    %115 = vector.broadcast %18 : vector<1x384xf32> to vector<8x384xf32>
    %116 = arith.addf %114, %115 : vector<8x384xf32>
    %117 = vector.extract_strided_slice %113 {offsets = [0, 0], sizes = [8, 128], strides = [1, 1]} : vector<8x384xf32> to vector<8x128xf32>
    %118 = vector.extract_strided_slice %116 {offsets = [0, 0], sizes = [8, 128], strides = [1, 1]} : vector<8x384xf32> to vector<8x128xf32>
    %119 = arith.addf %117, %118 : vector<8x128xf32>
    %120 = arith.negf %119 : vector<8x128xf32>
    %121 = math.exp %120 : vector<8x128xf32>
    %cst_41 = arith.constant 1.000000e+00 : f32
    %122 = vector.broadcast %cst_41 : f32 to vector<8x128xf32>
    %123 = arith.addf %122, %121 : vector<8x128xf32>
    %124 = arith.divf %122, %123 : vector<8x128xf32>
    %125 = vector.extract_strided_slice %113 {offsets = [0, 128], sizes = [8, 128], strides = [1, 1]} : vector<8x384xf32> to vector<8x128xf32>
    %126 = vector.extract_strided_slice %116 {offsets = [0, 128], sizes = [8, 128], strides = [1, 1]} : vector<8x384xf32> to vector<8x128xf32>
    %127 = arith.addf %125, %126 : vector<8x128xf32>
    %128 = arith.negf %127 : vector<8x128xf32>
    %129 = math.exp %128 : vector<8x128xf32>
    %cst_42 = arith.constant 1.000000e+00 : f32
    %130 = vector.broadcast %cst_42 : f32 to vector<8x128xf32>
    %131 = arith.addf %130, %129 : vector<8x128xf32>
    %132 = arith.divf %130, %131 : vector<8x128xf32>
    %133 = vector.extract_strided_slice %113 {offsets = [0, 256], sizes = [8, 128], strides = [1, 1]} : vector<8x384xf32> to vector<8x128xf32>
    %134 = vector.extract_strided_slice %116 {offsets = [0, 256], sizes = [8, 128], strides = [1, 1]} : vector<8x384xf32> to vector<8x128xf32>
    %135 = arith.mulf %124, %134 : vector<8x128xf32>
    %136 = arith.addf %133, %135 : vector<8x128xf32>
    %137 = math.tanh %136 : vector<8x128xf32>
    %cst_43 = arith.constant 1.000000e+00 : f32
    %138 = vector.broadcast %cst_43 : f32 to vector<8x128xf32>
    %139 = arith.subf %138, %132 : vector<8x128xf32>
    %140 = arith.mulf %139, %137 : vector<8x128xf32>
    %141 = arith.mulf %132, %80 : vector<8x128xf32>
    %142 = arith.addf %140, %141 : vector<8x128xf32>
    %c8 = arith.constant 8 : index
    %c0_44 = arith.constant 0 : index
    %143 = vector.load %arg11[%c8, %c0_44] : memref<64x128xf32, #tpu.memory_space<vmem>>, vector<8x128xf32>
    tpu.vector_store %arg11[%c8, %c0_44], %112 {strides = array<i32>} : memref<64x128xf32, #tpu.memory_space<vmem>>, vector<8x128xf32>,
    %c48 = arith.constant 48 : index
    %c0_45 = arith.constant 0 : index
    %144 = vector.load %arg12[%c48, %c0_45] : memref<64x128xf32, #tpu.memory_space<vmem>>, vector<8x128xf32>
    tpu.vector_store %arg12[%c48, %c0_45], %142 {strides = array<i32>} : memref<64x128xf32, #tpu.memory_space<vmem>>, vector<8x128xf32>,
    %145 = vector.extract_strided_slice %9 {offsets = [16, 0], sizes = [8, 384], strides = [1, 1]} : vector<64x384xf32> to vector<8x384xf32>
    %cst_46 = arith.constant dense<0.000000e+00> : vector<8x384xf32>
    %146 = tpu.matmul %112, %15, %cst_46 {dimension_numbers = #tpu.dot_dimension_numbers<[1], [0], [0], [1], [0, 0, 1, 1], [], []>} : vector<8x128xf32>, vector<128x384xf32>, vector<8x384xf32> -> vector<8x384xf32>
    %147 = vector.broadcast %17 : vector<1x384xf32> to vector<8x384xf32>
    %148 = arith.addf %146, %147 : vector<8x384xf32>
    %149 = vector.extract_strided_slice %145 {offsets = [0, 0], sizes = [8, 128], strides = [1, 1]} : vector<8x384xf32> to vector<8x128xf32>
    %150 = vector.extract_strided_slice %148 {offsets = [0, 0], sizes = [8, 128], strides = [1, 1]} : vector<8x384xf32> to vector<8x128xf32>
    %151 = arith.addf %149, %150 : vector<8x128xf32>
    %152 = arith.negf %151 : vector<8x128xf32>
    %153 = math.exp %152 : vector<8x128xf32>
    %cst_47 = arith.constant 1.000000e+00 : f32
    %154 = vector.broadcast %cst_47 : f32 to vector<8x128xf32>
    %155 = arith.addf %154, %153 : vector<8x128xf32>
    %156 = arith.divf %154, %155 : vector<8x128xf32>
    %157 = vector.extract_strided_slice %145 {offsets = [0, 128], sizes = [8, 128], strides = [1, 1]} : vector<8x384xf32> to vector<8x128xf32>
    %158 = vector.extract_strided_slice %148 {offsets = [0, 128], sizes = [8, 128], strides = [1, 1]} : vector<8x384xf32> to vector<8x128xf32>
    %159 = arith.addf %157, %158 : vector<8x128xf32>
    %160 = arith.negf %159 : vector<8x128xf32>
    %161 = math.exp %160 : vector<8x128xf32>
    %cst_48 = arith.constant 1.000000e+00 : f32
    %162 = vector.broadcast %cst_48 : f32 to vector<8x128xf32>
    %163 = arith.addf %162, %161 : vector<8x128xf32>
    %164 = arith.divf %162, %163 : vector<8x128xf32>
    %165 = vector.extract_strided_slice %145 {offsets = [0, 256], sizes = [8, 128], strides = [1, 1]} : vector<8x384xf32> to vector<8x128xf32>
    %166 = vector.extract_strided_slice %148 {offsets = [0, 256], sizes = [8, 128], strides = [1, 1]} : vector<8x384xf32> to vector<8x128xf32>
    %167 = arith.mulf %156, %166 : vector<8x128xf32>
    %168 = arith.addf %165, %167 : vector<8x128xf32>
    %169 = math.tanh %168 : vector<8x128xf32>
    %cst_49 = arith.constant 1.000000e+00 : f32
    %170 = vector.broadcast %cst_49 : f32 to vector<8x128xf32>
    %171 = arith.subf %170, %164 : vector<8x128xf32>
    %172 = arith.mulf %171, %169 : vector<8x128xf32>
    %173 = arith.mulf %164, %112 : vector<8x128xf32>
    %174 = arith.addf %172, %173 : vector<8x128xf32>
    %175 = vector.extract_strided_slice %14 {offsets = [40, 0], sizes = [8, 384], strides = [1, 1]} : vector<64x384xf32> to vector<8x384xf32>
    %cst_50 = arith.constant dense<0.000000e+00> : vector<8x384xf32>
    %176 = tpu.matmul %142, %16, %cst_50 {dimension_numbers = #tpu.dot_dimension_numbers<[1], [0], [0], [1], [0, 0, 1, 1], [], []>} : vector<8x128xf32>, vector<128x384xf32>, vector<8x384xf32> -> vector<8x384xf32>
    %177 = vector.broadcast %18 : vector<1x384xf32> to vector<8x384xf32>
    %178 = arith.addf %176, %177 : vector<8x384xf32>
    %179 = vector.extract_strided_slice %175 {offsets = [0, 0], sizes = [8, 128], strides = [1, 1]} : vector<8x384xf32> to vector<8x128xf32>
    %180 = vector.extract_strided_slice %178 {offsets = [0, 0], sizes = [8, 128], strides = [1, 1]} : vector<8x384xf32> to vector<8x128xf32>
    %181 = arith.addf %179, %180 : vector<8x128xf32>
    %182 = arith.negf %181 : vector<8x128xf32>
    %183 = math.exp %182 : vector<8x128xf32>
    %cst_51 = arith.constant 1.000000e+00 : f32
    %184 = vector.broadcast %cst_51 : f32 to vector<8x128xf32>
    %185 = arith.addf %184, %183 : vector<8x128xf32>
    %186 = arith.divf %184, %185 : vector<8x128xf32>
    %187 = vector.extract_strided_slice %175 {offsets = [0, 128], sizes = [8, 128], strides = [1, 1]} : vector<8x384xf32> to vector<8x128xf32>
    %188 = vector.extract_strided_slice %178 {offsets = [0, 128], sizes = [8, 128], strides = [1, 1]} : vector<8x384xf32> to vector<8x128xf32>
    %189 = arith.addf %187, %188 : vector<8x128xf32>
    %190 = arith.negf %189 : vector<8x128xf32>
    %191 = math.exp %190 : vector<8x128xf32>
    %cst_52 = arith.constant 1.000000e+00 : f32
    %192 = vector.broadcast %cst_52 : f32 to vector<8x128xf32>
    %193 = arith.addf %192, %191 : vector<8x128xf32>
    %194 = arith.divf %192, %193 : vector<8x128xf32>
    %195 = vector.extract_strided_slice %175 {offsets = [0, 256], sizes = [8, 128], strides = [1, 1]} : vector<8x384xf32> to vector<8x128xf32>
    %196 = vector.extract_strided_slice %178 {offsets = [0, 256], sizes = [8, 128], strides = [1, 1]} : vector<8x384xf32> to vector<8x128xf32>
    %197 = arith.mulf %186, %196 : vector<8x128xf32>
    %198 = arith.addf %195, %197 : vector<8x128xf32>
    %199 = math.tanh %198 : vector<8x128xf32>
    %cst_53 = arith.constant 1.000000e+00 : f32
    %200 = vector.broadcast %cst_53 : f32 to vector<8x128xf32>
    %201 = arith.subf %200, %194 : vector<8x128xf32>
    %202 = arith.mulf %201, %199 : vector<8x128xf32>
    %203 = arith.mulf %194, %142 : vector<8x128xf32>
    %204 = arith.addf %202, %203 : vector<8x128xf32>
    %c16 = arith.constant 16 : index
    %c0_54 = arith.constant 0 : index
    %205 = vector.load %arg11[%c16, %c0_54] : memref<64x128xf32, #tpu.memory_space<vmem>>, vector<8x128xf32>
    tpu.vector_store %arg11[%c16, %c0_54], %174 {strides = array<i32>} : memref<64x128xf32, #tpu.memory_space<vmem>>, vector<8x128xf32>,
    %c40 = arith.constant 40 : index
    %c0_55 = arith.constant 0 : index
    %206 = vector.load %arg12[%c40, %c0_55] : memref<64x128xf32, #tpu.memory_space<vmem>>, vector<8x128xf32>
    tpu.vector_store %arg12[%c40, %c0_55], %204 {strides = array<i32>} : memref<64x128xf32, #tpu.memory_space<vmem>>, vector<8x128xf32>,
    %207 = vector.extract_strided_slice %9 {offsets = [24, 0], sizes = [8, 384], strides = [1, 1]} : vector<64x384xf32> to vector<8x384xf32>
    %cst_56 = arith.constant dense<0.000000e+00> : vector<8x384xf32>
    %208 = tpu.matmul %174, %15, %cst_56 {dimension_numbers = #tpu.dot_dimension_numbers<[1], [0], [0], [1], [0, 0, 1, 1], [], []>} : vector<8x128xf32>, vector<128x384xf32>, vector<8x384xf32> -> vector<8x384xf32>
    %209 = vector.broadcast %17 : vector<1x384xf32> to vector<8x384xf32>
    %210 = arith.addf %208, %209 : vector<8x384xf32>
    %211 = vector.extract_strided_slice %207 {offsets = [0, 0], sizes = [8, 128], strides = [1, 1]} : vector<8x384xf32> to vector<8x128xf32>
    %212 = vector.extract_strided_slice %210 {offsets = [0, 0], sizes = [8, 128], strides = [1, 1]} : vector<8x384xf32> to vector<8x128xf32>
    %213 = arith.addf %211, %212 : vector<8x128xf32>
    %214 = arith.negf %213 : vector<8x128xf32>
    %215 = math.exp %214 : vector<8x128xf32>
    %cst_57 = arith.constant 1.000000e+00 : f32
    %216 = vector.broadcast %cst_57 : f32 to vector<8x128xf32>
    %217 = arith.addf %216, %215 : vector<8x128xf32>
    %218 = arith.divf %216, %217 : vector<8x128xf32>
    %219 = vector.extract_strided_slice %207 {offsets = [0, 128], sizes = [8, 128], strides = [1, 1]} : vector<8x384xf32> to vector<8x128xf32>
    %220 = vector.extract_strided_slice %210 {offsets = [0, 128], sizes = [8, 128], strides = [1, 1]} : vector<8x384xf32> to vector<8x128xf32>
    %221 = arith.addf %219, %220 : vector<8x128xf32>
    %222 = arith.negf %221 : vector<8x128xf32>
    %223 = math.exp %222 : vector<8x128xf32>
    %cst_58 = arith.constant 1.000000e+00 : f32
    %224 = vector.broadcast %cst_58 : f32 to vector<8x128xf32>
    %225 = arith.addf %224, %223 : vector<8x128xf32>
    %226 = arith.divf %224, %225 : vector<8x128xf32>
    %227 = vector.extract_strided_slice %207 {offsets = [0, 256], sizes = [8, 128], strides = [1, 1]} : vector<8x384xf32> to vector<8x128xf32>
    %228 = vector.extract_strided_slice %210 {offsets = [0, 256], sizes = [8, 128], strides = [1, 1]} : vector<8x384xf32> to vector<8x128xf32>
    %229 = arith.mulf %218, %228 : vector<8x128xf32>
    %230 = arith.addf %227, %229 : vector<8x128xf32>
    %231 = math.tanh %230 : vector<8x128xf32>
    %cst_59 = arith.constant 1.000000e+00 : f32
    %232 = vector.broadcast %cst_59 : f32 to vector<8x128xf32>
    %233 = arith.subf %232, %226 : vector<8x128xf32>
    %234 = arith.mulf %233, %231 : vector<8x128xf32>
    %235 = arith.mulf %226, %174 : vector<8x128xf32>
    %236 = arith.addf %234, %235 : vector<8x128xf32>
    %237 = vector.extract_strided_slice %14 {offsets = [32, 0], sizes = [8, 384], strides = [1, 1]} : vector<64x384xf32> to vector<8x384xf32>
    %cst_60 = arith.constant dense<0.000000e+00> : vector<8x384xf32>
    %238 = tpu.matmul %204, %16, %cst_60 {dimension_numbers = #tpu.dot_dimension_numbers<[1], [0], [0], [1], [0, 0, 1, 1], [], []>} : vector<8x128xf32>, vector<128x384xf32>, vector<8x384xf32> -> vector<8x384xf32>
    %239 = vector.broadcast %18 : vector<1x384xf32> to vector<8x384xf32>
    %240 = arith.addf %238, %239 : vector<8x384xf32>
    %241 = vector.extract_strided_slice %237 {offsets = [0, 0], sizes = [8, 128], strides = [1, 1]} : vector<8x384xf32> to vector<8x128xf32>
    %242 = vector.extract_strided_slice %240 {offsets = [0, 0], sizes = [8, 128], strides = [1, 1]} : vector<8x384xf32> to vector<8x128xf32>
    %243 = arith.addf %241, %242 : vector<8x128xf32>
    %244 = arith.negf %243 : vector<8x128xf32>
    %245 = math.exp %244 : vector<8x128xf32>
    %cst_61 = arith.constant 1.000000e+00 : f32
    %246 = vector.broadcast %cst_61 : f32 to vector<8x128xf32>
    %247 = arith.addf %246, %245 : vector<8x128xf32>
    %248 = arith.divf %246, %247 : vector<8x128xf32>
    %249 = vector.extract_strided_slice %237 {offsets = [0, 128], sizes = [8, 128], strides = [1, 1]} : vector<8x384xf32> to vector<8x128xf32>
    %250 = vector.extract_strided_slice %240 {offsets = [0, 128], sizes = [8, 128], strides = [1, 1]} : vector<8x384xf32> to vector<8x128xf32>
    %251 = arith.addf %249, %250 : vector<8x128xf32>
    %252 = arith.negf %251 : vector<8x128xf32>
    %253 = math.exp %252 : vector<8x128xf32>
    %cst_62 = arith.constant 1.000000e+00 : f32
    %254 = vector.broadcast %cst_62 : f32 to vector<8x128xf32>
    %255 = arith.addf %254, %253 : vector<8x128xf32>
    %256 = arith.divf %254, %255 : vector<8x128xf32>
    %257 = vector.extract_strided_slice %237 {offsets = [0, 256], sizes = [8, 128], strides = [1, 1]} : vector<8x384xf32> to vector<8x128xf32>
    %258 = vector.extract_strided_slice %240 {offsets = [0, 256], sizes = [8, 128], strides = [1, 1]} : vector<8x384xf32> to vector<8x128xf32>
    %259 = arith.mulf %248, %258 : vector<8x128xf32>
    %260 = arith.addf %257, %259 : vector<8x128xf32>
    %261 = math.tanh %260 : vector<8x128xf32>
    %cst_63 = arith.constant 1.000000e+00 : f32
    %262 = vector.broadcast %cst_63 : f32 to vector<8x128xf32>
    %263 = arith.subf %262, %256 : vector<8x128xf32>
    %264 = arith.mulf %263, %261 : vector<8x128xf32>
    %265 = arith.mulf %256, %204 : vector<8x128xf32>
    %266 = arith.addf %264, %265 : vector<8x128xf32>
    %c24 = arith.constant 24 : index
    %c0_64 = arith.constant 0 : index
    %267 = vector.load %arg11[%c24, %c0_64] : memref<64x128xf32, #tpu.memory_space<vmem>>, vector<8x128xf32>
    tpu.vector_store %arg11[%c24, %c0_64], %236 {strides = array<i32>} : memref<64x128xf32, #tpu.memory_space<vmem>>, vector<8x128xf32>,
    %c32 = arith.constant 32 : index
    %c0_65 = arith.constant 0 : index
    %268 = vector.load %arg12[%c32, %c0_65] : memref<64x128xf32, #tpu.memory_space<vmem>>, vector<8x128xf32>
    tpu.vector_store %arg12[%c32, %c0_65], %266 {strides = array<i32>} : memref<64x128xf32, #tpu.memory_space<vmem>>, vector<8x128xf32>,
    %269 = vector.extract_strided_slice %9 {offsets = [32, 0], sizes = [8, 384], strides = [1, 1]} : vector<64x384xf32> to vector<8x384xf32>
    %cst_66 = arith.constant dense<0.000000e+00> : vector<8x384xf32>
    %270 = tpu.matmul %236, %15, %cst_66 {dimension_numbers = #tpu.dot_dimension_numbers<[1], [0], [0], [1], [0, 0, 1, 1], [], []>} : vector<8x128xf32>, vector<128x384xf32>, vector<8x384xf32> -> vector<8x384xf32>
    %271 = vector.broadcast %17 : vector<1x384xf32> to vector<8x384xf32>
    %272 = arith.addf %270, %271 : vector<8x384xf32>
    %273 = vector.extract_strided_slice %269 {offsets = [0, 0], sizes = [8, 128], strides = [1, 1]} : vector<8x384xf32> to vector<8x128xf32>
    %274 = vector.extract_strided_slice %272 {offsets = [0, 0], sizes = [8, 128], strides = [1, 1]} : vector<8x384xf32> to vector<8x128xf32>
    %275 = arith.addf %273, %274 : vector<8x128xf32>
    %276 = arith.negf %275 : vector<8x128xf32>
    %277 = math.exp %276 : vector<8x128xf32>
    %cst_67 = arith.constant 1.000000e+00 : f32
    %278 = vector.broadcast %cst_67 : f32 to vector<8x128xf32>
    %279 = arith.addf %278, %277 : vector<8x128xf32>
    %280 = arith.divf %278, %279 : vector<8x128xf32>
    %281 = vector.extract_strided_slice %269 {offsets = [0, 128], sizes = [8, 128], strides = [1, 1]} : vector<8x384xf32> to vector<8x128xf32>
    %282 = vector.extract_strided_slice %272 {offsets = [0, 128], sizes = [8, 128], strides = [1, 1]} : vector<8x384xf32> to vector<8x128xf32>
    %283 = arith.addf %281, %282 : vector<8x128xf32>
    %284 = arith.negf %283 : vector<8x128xf32>
    %285 = math.exp %284 : vector<8x128xf32>
    %cst_68 = arith.constant 1.000000e+00 : f32
    %286 = vector.broadcast %cst_68 : f32 to vector<8x128xf32>
    %287 = arith.addf %286, %285 : vector<8x128xf32>
    %288 = arith.divf %286, %287 : vector<8x128xf32>
    %289 = vector.extract_strided_slice %269 {offsets = [0, 256], sizes = [8, 128], strides = [1, 1]} : vector<8x384xf32> to vector<8x128xf32>
    %290 = vector.extract_strided_slice %272 {offsets = [0, 256], sizes = [8, 128], strides = [1, 1]} : vector<8x384xf32> to vector<8x128xf32>
    %291 = arith.mulf %280, %290 : vector<8x128xf32>
    %292 = arith.addf %289, %291 : vector<8x128xf32>
    %293 = math.tanh %292 : vector<8x128xf32>
    %cst_69 = arith.constant 1.000000e+00 : f32
    %294 = vector.broadcast %cst_69 : f32 to vector<8x128xf32>
    %295 = arith.subf %294, %288 : vector<8x128xf32>
    %296 = arith.mulf %295, %293 : vector<8x128xf32>
    %297 = arith.mulf %288, %236 : vector<8x128xf32>
    %298 = arith.addf %296, %297 : vector<8x128xf32>
    %299 = vector.extract_strided_slice %14 {offsets = [24, 0], sizes = [8, 384], strides = [1, 1]} : vector<64x384xf32> to vector<8x384xf32>
    %cst_70 = arith.constant dense<0.000000e+00> : vector<8x384xf32>
    %300 = tpu.matmul %266, %16, %cst_70 {dimension_numbers = #tpu.dot_dimension_numbers<[1], [0], [0], [1], [0, 0, 1, 1], [], []>} : vector<8x128xf32>, vector<128x384xf32>, vector<8x384xf32> -> vector<8x384xf32>
    %301 = vector.broadcast %18 : vector<1x384xf32> to vector<8x384xf32>
    %302 = arith.addf %300, %301 : vector<8x384xf32>
    %303 = vector.extract_strided_slice %299 {offsets = [0, 0], sizes = [8, 128], strides = [1, 1]} : vector<8x384xf32> to vector<8x128xf32>
    %304 = vector.extract_strided_slice %302 {offsets = [0, 0], sizes = [8, 128], strides = [1, 1]} : vector<8x384xf32> to vector<8x128xf32>
    %305 = arith.addf %303, %304 : vector<8x128xf32>
    %306 = arith.negf %305 : vector<8x128xf32>
    %307 = math.exp %306 : vector<8x128xf32>
    %cst_71 = arith.constant 1.000000e+00 : f32
    %308 = vector.broadcast %cst_71 : f32 to vector<8x128xf32>
    %309 = arith.addf %308, %307 : vector<8x128xf32>
    %310 = arith.divf %308, %309 : vector<8x128xf32>
    %311 = vector.extract_strided_slice %299 {offsets = [0, 128], sizes = [8, 128], strides = [1, 1]} : vector<8x384xf32> to vector<8x128xf32>
    %312 = vector.extract_strided_slice %302 {offsets = [0, 128], sizes = [8, 128], strides = [1, 1]} : vector<8x384xf32> to vector<8x128xf32>
    %313 = arith.addf %311, %312 : vector<8x128xf32>
    %314 = arith.negf %313 : vector<8x128xf32>
    %315 = math.exp %314 : vector<8x128xf32>
    %cst_72 = arith.constant 1.000000e+00 : f32
    %316 = vector.broadcast %cst_72 : f32 to vector<8x128xf32>
    %317 = arith.addf %316, %315 : vector<8x128xf32>
    %318 = arith.divf %316, %317 : vector<8x128xf32>
    %319 = vector.extract_strided_slice %299 {offsets = [0, 256], sizes = [8, 128], strides = [1, 1]} : vector<8x384xf32> to vector<8x128xf32>
    %320 = vector.extract_strided_slice %302 {offsets = [0, 256], sizes = [8, 128], strides = [1, 1]} : vector<8x384xf32> to vector<8x128xf32>
    %321 = arith.mulf %310, %320 : vector<8x128xf32>
    %322 = arith.addf %319, %321 : vector<8x128xf32>
    %323 = math.tanh %322 : vector<8x128xf32>
    %cst_73 = arith.constant 1.000000e+00 : f32
    %324 = vector.broadcast %cst_73 : f32 to vector<8x128xf32>
    %325 = arith.subf %324, %318 : vector<8x128xf32>
    %326 = arith.mulf %325, %323 : vector<8x128xf32>
    %327 = arith.mulf %318, %266 : vector<8x128xf32>
    %328 = arith.addf %326, %327 : vector<8x128xf32>
    %c32_74 = arith.constant 32 : index
    %c0_75 = arith.constant 0 : index
    %329 = vector.load %arg11[%c32_74, %c0_75] : memref<64x128xf32, #tpu.memory_space<vmem>>, vector<8x128xf32>
    tpu.vector_store %arg11[%c32_74, %c0_75], %298 {strides = array<i32>} : memref<64x128xf32, #tpu.memory_space<vmem>>, vector<8x128xf32>,
    %c24_76 = arith.constant 24 : index
    %c0_77 = arith.constant 0 : index
    %330 = vector.load %arg12[%c24_76, %c0_77] : memref<64x128xf32, #tpu.memory_space<vmem>>, vector<8x128xf32>
    tpu.vector_store %arg12[%c24_76, %c0_77], %328 {strides = array<i32>} : memref<64x128xf32, #tpu.memory_space<vmem>>, vector<8x128xf32>,
    %331 = vector.extract_strided_slice %9 {offsets = [40, 0], sizes = [8, 384], strides = [1, 1]} : vector<64x384xf32> to vector<8x384xf32>
    %cst_78 = arith.constant dense<0.000000e+00> : vector<8x384xf32>
    %332 = tpu.matmul %298, %15, %cst_78 {dimension_numbers = #tpu.dot_dimension_numbers<[1], [0], [0], [1], [0, 0, 1, 1], [], []>} : vector<8x128xf32>, vector<128x384xf32>, vector<8x384xf32> -> vector<8x384xf32>
    %333 = vector.broadcast %17 : vector<1x384xf32> to vector<8x384xf32>
    %334 = arith.addf %332, %333 : vector<8x384xf32>
    %335 = vector.extract_strided_slice %331 {offsets = [0, 0], sizes = [8, 128], strides = [1, 1]} : vector<8x384xf32> to vector<8x128xf32>
    %336 = vector.extract_strided_slice %334 {offsets = [0, 0], sizes = [8, 128], strides = [1, 1]} : vector<8x384xf32> to vector<8x128xf32>
    %337 = arith.addf %335, %336 : vector<8x128xf32>
    %338 = arith.negf %337 : vector<8x128xf32>
    %339 = math.exp %338 : vector<8x128xf32>
    %cst_79 = arith.constant 1.000000e+00 : f32
    %340 = vector.broadcast %cst_79 : f32 to vector<8x128xf32>
    %341 = arith.addf %340, %339 : vector<8x128xf32>
    %342 = arith.divf %340, %341 : vector<8x128xf32>
    %343 = vector.extract_strided_slice %331 {offsets = [0, 128], sizes = [8, 128], strides = [1, 1]} : vector<8x384xf32> to vector<8x128xf32>
    %344 = vector.extract_strided_slice %334 {offsets = [0, 128], sizes = [8, 128], strides = [1, 1]} : vector<8x384xf32> to vector<8x128xf32>
    %345 = arith.addf %343, %344 : vector<8x128xf32>
    %346 = arith.negf %345 : vector<8x128xf32>
    %347 = math.exp %346 : vector<8x128xf32>
    %cst_80 = arith.constant 1.000000e+00 : f32
    %348 = vector.broadcast %cst_80 : f32 to vector<8x128xf32>
    %349 = arith.addf %348, %347 : vector<8x128xf32>
    %350 = arith.divf %348, %349 : vector<8x128xf32>
    %351 = vector.extract_strided_slice %331 {offsets = [0, 256], sizes = [8, 128], strides = [1, 1]} : vector<8x384xf32> to vector<8x128xf32>
    %352 = vector.extract_strided_slice %334 {offsets = [0, 256], sizes = [8, 128], strides = [1, 1]} : vector<8x384xf32> to vector<8x128xf32>
    %353 = arith.mulf %342, %352 : vector<8x128xf32>
    %354 = arith.addf %351, %353 : vector<8x128xf32>
    %355 = math.tanh %354 : vector<8x128xf32>
    %cst_81 = arith.constant 1.000000e+00 : f32
    %356 = vector.broadcast %cst_81 : f32 to vector<8x128xf32>
    %357 = arith.subf %356, %350 : vector<8x128xf32>
    %358 = arith.mulf %357, %355 : vector<8x128xf32>
    %359 = arith.mulf %350, %298 : vector<8x128xf32>
    %360 = arith.addf %358, %359 : vector<8x128xf32>
    %361 = vector.extract_strided_slice %14 {offsets = [16, 0], sizes = [8, 384], strides = [1, 1]} : vector<64x384xf32> to vector<8x384xf32>
    %cst_82 = arith.constant dense<0.000000e+00> : vector<8x384xf32>
    %362 = tpu.matmul %328, %16, %cst_82 {dimension_numbers = #tpu.dot_dimension_numbers<[1], [0], [0], [1], [0, 0, 1, 1], [], []>} : vector<8x128xf32>, vector<128x384xf32>, vector<8x384xf32> -> vector<8x384xf32>
    %363 = vector.broadcast %18 : vector<1x384xf32> to vector<8x384xf32>
    %364 = arith.addf %362, %363 : vector<8x384xf32>
    %365 = vector.extract_strided_slice %361 {offsets = [0, 0], sizes = [8, 128], strides = [1, 1]} : vector<8x384xf32> to vector<8x128xf32>
    %366 = vector.extract_strided_slice %364 {offsets = [0, 0], sizes = [8, 128], strides = [1, 1]} : vector<8x384xf32> to vector<8x128xf32>
    %367 = arith.addf %365, %366 : vector<8x128xf32>
    %368 = arith.negf %367 : vector<8x128xf32>
    %369 = math.exp %368 : vector<8x128xf32>
    %cst_83 = arith.constant 1.000000e+00 : f32
    %370 = vector.broadcast %cst_83 : f32 to vector<8x128xf32>
    %371 = arith.addf %370, %369 : vector<8x128xf32>
    %372 = arith.divf %370, %371 : vector<8x128xf32>
    %373 = vector.extract_strided_slice %361 {offsets = [0, 128], sizes = [8, 128], strides = [1, 1]} : vector<8x384xf32> to vector<8x128xf32>
    %374 = vector.extract_strided_slice %364 {offsets = [0, 128], sizes = [8, 128], strides = [1, 1]} : vector<8x384xf32> to vector<8x128xf32>
    %375 = arith.addf %373, %374 : vector<8x128xf32>
    %376 = arith.negf %375 : vector<8x128xf32>
    %377 = math.exp %376 : vector<8x128xf32>
    %cst_84 = arith.constant 1.000000e+00 : f32
    %378 = vector.broadcast %cst_84 : f32 to vector<8x128xf32>
    %379 = arith.addf %378, %377 : vector<8x128xf32>
    %380 = arith.divf %378, %379 : vector<8x128xf32>
    %381 = vector.extract_strided_slice %361 {offsets = [0, 256], sizes = [8, 128], strides = [1, 1]} : vector<8x384xf32> to vector<8x128xf32>
    %382 = vector.extract_strided_slice %364 {offsets = [0, 256], sizes = [8, 128], strides = [1, 1]} : vector<8x384xf32> to vector<8x128xf32>
    %383 = arith.mulf %372, %382 : vector<8x128xf32>
    %384 = arith.addf %381, %383 : vector<8x128xf32>
    %385 = math.tanh %384 : vector<8x128xf32>
    %cst_85 = arith.constant 1.000000e+00 : f32
    %386 = vector.broadcast %cst_85 : f32 to vector<8x128xf32>
    %387 = arith.subf %386, %380 : vector<8x128xf32>
    %388 = arith.mulf %387, %385 : vector<8x128xf32>
    %389 = arith.mulf %380, %328 : vector<8x128xf32>
    %390 = arith.addf %388, %389 : vector<8x128xf32>
    %c40_86 = arith.constant 40 : index
    %c0_87 = arith.constant 0 : index
    %391 = vector.load %arg11[%c40_86, %c0_87] : memref<64x128xf32, #tpu.memory_space<vmem>>, vector<8x128xf32>
    tpu.vector_store %arg11[%c40_86, %c0_87], %360 {strides = array<i32>} : memref<64x128xf32, #tpu.memory_space<vmem>>, vector<8x128xf32>,
    %c16_88 = arith.constant 16 : index
    %c0_89 = arith.constant 0 : index
    %392 = vector.load %arg12[%c16_88, %c0_89] : memref<64x128xf32, #tpu.memory_space<vmem>>, vector<8x128xf32>
    tpu.vector_store %arg12[%c16_88, %c0_89], %390 {strides = array<i32>} : memref<64x128xf32, #tpu.memory_space<vmem>>, vector<8x128xf32>,
    %393 = vector.extract_strided_slice %9 {offsets = [48, 0], sizes = [8, 384], strides = [1, 1]} : vector<64x384xf32> to vector<8x384xf32>
    %cst_90 = arith.constant dense<0.000000e+00> : vector<8x384xf32>
    %394 = tpu.matmul %360, %15, %cst_90 {dimension_numbers = #tpu.dot_dimension_numbers<[1], [0], [0], [1], [0, 0, 1, 1], [], []>} : vector<8x128xf32>, vector<128x384xf32>, vector<8x384xf32> -> vector<8x384xf32>
    %395 = vector.broadcast %17 : vector<1x384xf32> to vector<8x384xf32>
    %396 = arith.addf %394, %395 : vector<8x384xf32>
    %397 = vector.extract_strided_slice %393 {offsets = [0, 0], sizes = [8, 128], strides = [1, 1]} : vector<8x384xf32> to vector<8x128xf32>
    %398 = vector.extract_strided_slice %396 {offsets = [0, 0], sizes = [8, 128], strides = [1, 1]} : vector<8x384xf32> to vector<8x128xf32>
    %399 = arith.addf %397, %398 : vector<8x128xf32>
    %400 = arith.negf %399 : vector<8x128xf32>
    %401 = math.exp %400 : vector<8x128xf32>
    %cst_91 = arith.constant 1.000000e+00 : f32
    %402 = vector.broadcast %cst_91 : f32 to vector<8x128xf32>
    %403 = arith.addf %402, %401 : vector<8x128xf32>
    %404 = arith.divf %402, %403 : vector<8x128xf32>
    %405 = vector.extract_strided_slice %393 {offsets = [0, 128], sizes = [8, 128], strides = [1, 1]} : vector<8x384xf32> to vector<8x128xf32>
    %406 = vector.extract_strided_slice %396 {offsets = [0, 128], sizes = [8, 128], strides = [1, 1]} : vector<8x384xf32> to vector<8x128xf32>
    %407 = arith.addf %405, %406 : vector<8x128xf32>
    %408 = arith.negf %407 : vector<8x128xf32>
    %409 = math.exp %408 : vector<8x128xf32>
    %cst_92 = arith.constant 1.000000e+00 : f32
    %410 = vector.broadcast %cst_92 : f32 to vector<8x128xf32>
    %411 = arith.addf %410, %409 : vector<8x128xf32>
    %412 = arith.divf %410, %411 : vector<8x128xf32>
    %413 = vector.extract_strided_slice %393 {offsets = [0, 256], sizes = [8, 128], strides = [1, 1]} : vector<8x384xf32> to vector<8x128xf32>
    %414 = vector.extract_strided_slice %396 {offsets = [0, 256], sizes = [8, 128], strides = [1, 1]} : vector<8x384xf32> to vector<8x128xf32>
    %415 = arith.mulf %404, %414 : vector<8x128xf32>
    %416 = arith.addf %413, %415 : vector<8x128xf32>
    %417 = math.tanh %416 : vector<8x128xf32>
    %cst_93 = arith.constant 1.000000e+00 : f32
    %418 = vector.broadcast %cst_93 : f32 to vector<8x128xf32>
    %419 = arith.subf %418, %412 : vector<8x128xf32>
    %420 = arith.mulf %419, %417 : vector<8x128xf32>
    %421 = arith.mulf %412, %360 : vector<8x128xf32>
    %422 = arith.addf %420, %421 : vector<8x128xf32>
    %423 = vector.extract_strided_slice %14 {offsets = [8, 0], sizes = [8, 384], strides = [1, 1]} : vector<64x384xf32> to vector<8x384xf32>
    %cst_94 = arith.constant dense<0.000000e+00> : vector<8x384xf32>
    %424 = tpu.matmul %390, %16, %cst_94 {dimension_numbers = #tpu.dot_dimension_numbers<[1], [0], [0], [1], [0, 0, 1, 1], [], []>} : vector<8x128xf32>, vector<128x384xf32>, vector<8x384xf32> -> vector<8x384xf32>
    %425 = vector.broadcast %18 : vector<1x384xf32> to vector<8x384xf32>
    %426 = arith.addf %424, %425 : vector<8x384xf32>
    %427 = vector.extract_strided_slice %423 {offsets = [0, 0], sizes = [8, 128], strides = [1, 1]} : vector<8x384xf32> to vector<8x128xf32>
    %428 = vector.extract_strided_slice %426 {offsets = [0, 0], sizes = [8, 128], strides = [1, 1]} : vector<8x384xf32> to vector<8x128xf32>
    %429 = arith.addf %427, %428 : vector<8x128xf32>
    %430 = arith.negf %429 : vector<8x128xf32>
    %431 = math.exp %430 : vector<8x128xf32>
    %cst_95 = arith.constant 1.000000e+00 : f32
    %432 = vector.broadcast %cst_95 : f32 to vector<8x128xf32>
    %433 = arith.addf %432, %431 : vector<8x128xf32>
    %434 = arith.divf %432, %433 : vector<8x128xf32>
    %435 = vector.extract_strided_slice %423 {offsets = [0, 128], sizes = [8, 128], strides = [1, 1]} : vector<8x384xf32> to vector<8x128xf32>
    %436 = vector.extract_strided_slice %426 {offsets = [0, 128], sizes = [8, 128], strides = [1, 1]} : vector<8x384xf32> to vector<8x128xf32>
    %437 = arith.addf %435, %436 : vector<8x128xf32>
    %438 = arith.negf %437 : vector<8x128xf32>
    %439 = math.exp %438 : vector<8x128xf32>
    %cst_96 = arith.constant 1.000000e+00 : f32
    %440 = vector.broadcast %cst_96 : f32 to vector<8x128xf32>
    %441 = arith.addf %440, %439 : vector<8x128xf32>
    %442 = arith.divf %440, %441 : vector<8x128xf32>
    %443 = vector.extract_strided_slice %423 {offsets = [0, 256], sizes = [8, 128], strides = [1, 1]} : vector<8x384xf32> to vector<8x128xf32>
    %444 = vector.extract_strided_slice %426 {offsets = [0, 256], sizes = [8, 128], strides = [1, 1]} : vector<8x384xf32> to vector<8x128xf32>
    %445 = arith.mulf %434, %444 : vector<8x128xf32>
    %446 = arith.addf %443, %445 : vector<8x128xf32>
    %447 = math.tanh %446 : vector<8x128xf32>
    %cst_97 = arith.constant 1.000000e+00 : f32
    %448 = vector.broadcast %cst_97 : f32 to vector<8x128xf32>
    %449 = arith.subf %448, %442 : vector<8x128xf32>
    %450 = arith.mulf %449, %447 : vector<8x128xf32>
    %451 = arith.mulf %442, %390 : vector<8x128xf32>
    %452 = arith.addf %450, %451 : vector<8x128xf32>
    %c48_98 = arith.constant 48 : index
    %c0_99 = arith.constant 0 : index
    %453 = vector.load %arg11[%c48_98, %c0_99] : memref<64x128xf32, #tpu.memory_space<vmem>>, vector<8x128xf32>
    tpu.vector_store %arg11[%c48_98, %c0_99], %422 {strides = array<i32>} : memref<64x128xf32, #tpu.memory_space<vmem>>, vector<8x128xf32>,
    %c8_100 = arith.constant 8 : index
    %c0_101 = arith.constant 0 : index
    %454 = vector.load %arg12[%c8_100, %c0_101] : memref<64x128xf32, #tpu.memory_space<vmem>>, vector<8x128xf32>
    tpu.vector_store %arg12[%c8_100, %c0_101], %452 {strides = array<i32>} : memref<64x128xf32, #tpu.memory_space<vmem>>, vector<8x128xf32>,
    %455 = vector.extract_strided_slice %9 {offsets = [56, 0], sizes = [8, 384], strides = [1, 1]} : vector<64x384xf32> to vector<8x384xf32>
    %cst_102 = arith.constant dense<0.000000e+00> : vector<8x384xf32>
    %456 = tpu.matmul %422, %15, %cst_102 {dimension_numbers = #tpu.dot_dimension_numbers<[1], [0], [0], [1], [0, 0, 1, 1], [], []>} : vector<8x128xf32>, vector<128x384xf32>, vector<8x384xf32> -> vector<8x384xf32>
    %457 = vector.broadcast %17 : vector<1x384xf32> to vector<8x384xf32>
    %458 = arith.addf %456, %457 : vector<8x384xf32>
    %459 = vector.extract_strided_slice %455 {offsets = [0, 0], sizes = [8, 128], strides = [1, 1]} : vector<8x384xf32> to vector<8x128xf32>
    %460 = vector.extract_strided_slice %458 {offsets = [0, 0], sizes = [8, 128], strides = [1, 1]} : vector<8x384xf32> to vector<8x128xf32>
    %461 = arith.addf %459, %460 : vector<8x128xf32>
    %462 = arith.negf %461 : vector<8x128xf32>
    %463 = math.exp %462 : vector<8x128xf32>
    %cst_103 = arith.constant 1.000000e+00 : f32
    %464 = vector.broadcast %cst_103 : f32 to vector<8x128xf32>
    %465 = arith.addf %464, %463 : vector<8x128xf32>
    %466 = arith.divf %464, %465 : vector<8x128xf32>
    %467 = vector.extract_strided_slice %455 {offsets = [0, 128], sizes = [8, 128], strides = [1, 1]} : vector<8x384xf32> to vector<8x128xf32>
    %468 = vector.extract_strided_slice %458 {offsets = [0, 128], sizes = [8, 128], strides = [1, 1]} : vector<8x384xf32> to vector<8x128xf32>
    %469 = arith.addf %467, %468 : vector<8x128xf32>
    %470 = arith.negf %469 : vector<8x128xf32>
    %471 = math.exp %470 : vector<8x128xf32>
    %cst_104 = arith.constant 1.000000e+00 : f32
    %472 = vector.broadcast %cst_104 : f32 to vector<8x128xf32>
    %473 = arith.addf %472, %471 : vector<8x128xf32>
    %474 = arith.divf %472, %473 : vector<8x128xf32>
    %475 = vector.extract_strided_slice %455 {offsets = [0, 256], sizes = [8, 128], strides = [1, 1]} : vector<8x384xf32> to vector<8x128xf32>
    %476 = vector.extract_strided_slice %458 {offsets = [0, 256], sizes = [8, 128], strides = [1, 1]} : vector<8x384xf32> to vector<8x128xf32>
    %477 = arith.mulf %466, %476 : vector<8x128xf32>
    %478 = arith.addf %475, %477 : vector<8x128xf32>
    %479 = math.tanh %478 : vector<8x128xf32>
    %cst_105 = arith.constant 1.000000e+00 : f32
    %480 = vector.broadcast %cst_105 : f32 to vector<8x128xf32>
    %481 = arith.subf %480, %474 : vector<8x128xf32>
    %482 = arith.mulf %481, %479 : vector<8x128xf32>
    %483 = arith.mulf %474, %422 : vector<8x128xf32>
    %484 = arith.addf %482, %483 : vector<8x128xf32>
    %485 = vector.extract_strided_slice %14 {offsets = [0, 0], sizes = [8, 384], strides = [1, 1]} : vector<64x384xf32> to vector<8x384xf32>
    %cst_106 = arith.constant dense<0.000000e+00> : vector<8x384xf32>
    %486 = tpu.matmul %452, %16, %cst_106 {dimension_numbers = #tpu.dot_dimension_numbers<[1], [0], [0], [1], [0, 0, 1, 1], [], []>} : vector<8x128xf32>, vector<128x384xf32>, vector<8x384xf32> -> vector<8x384xf32>
    %487 = vector.broadcast %18 : vector<1x384xf32> to vector<8x384xf32>
    %488 = arith.addf %486, %487 : vector<8x384xf32>
    %489 = vector.extract_strided_slice %485 {offsets = [0, 0], sizes = [8, 128], strides = [1, 1]} : vector<8x384xf32> to vector<8x128xf32>
    %490 = vector.extract_strided_slice %488 {offsets = [0, 0], sizes = [8, 128], strides = [1, 1]} : vector<8x384xf32> to vector<8x128xf32>
    %491 = arith.addf %489, %490 : vector<8x128xf32>
    %492 = arith.negf %491 : vector<8x128xf32>
    %493 = math.exp %492 : vector<8x128xf32>
    %cst_107 = arith.constant 1.000000e+00 : f32
    %494 = vector.broadcast %cst_107 : f32 to vector<8x128xf32>
    %495 = arith.addf %494, %493 : vector<8x128xf32>
    %496 = arith.divf %494, %495 : vector<8x128xf32>
    %497 = vector.extract_strided_slice %485 {offsets = [0, 128], sizes = [8, 128], strides = [1, 1]} : vector<8x384xf32> to vector<8x128xf32>
    %498 = vector.extract_strided_slice %488 {offsets = [0, 128], sizes = [8, 128], strides = [1, 1]} : vector<8x384xf32> to vector<8x128xf32>
    %499 = arith.addf %497, %498 : vector<8x128xf32>
    %500 = arith.negf %499 : vector<8x128xf32>
    %501 = math.exp %500 : vector<8x128xf32>
    %cst_108 = arith.constant 1.000000e+00 : f32
    %502 = vector.broadcast %cst_108 : f32 to vector<8x128xf32>
    %503 = arith.addf %502, %501 : vector<8x128xf32>
    %504 = arith.divf %502, %503 : vector<8x128xf32>
    %505 = vector.extract_strided_slice %485 {offsets = [0, 256], sizes = [8, 128], strides = [1, 1]} : vector<8x384xf32> to vector<8x128xf32>
    %506 = vector.extract_strided_slice %488 {offsets = [0, 256], sizes = [8, 128], strides = [1, 1]} : vector<8x384xf32> to vector<8x128xf32>
    %507 = arith.mulf %496, %506 : vector<8x128xf32>
    %508 = arith.addf %505, %507 : vector<8x128xf32>
    %509 = math.tanh %508 : vector<8x128xf32>
    %cst_109 = arith.constant 1.000000e+00 : f32
    %510 = vector.broadcast %cst_109 : f32 to vector<8x128xf32>
    %511 = arith.subf %510, %504 : vector<8x128xf32>
    %512 = arith.mulf %511, %509 : vector<8x128xf32>
    %513 = arith.mulf %504, %452 : vector<8x128xf32>
    %514 = arith.addf %512, %513 : vector<8x128xf32>
    %c56_110 = arith.constant 56 : index
    %c0_111 = arith.constant 0 : index
    %515 = vector.load %arg11[%c56_110, %c0_111] : memref<64x128xf32, #tpu.memory_space<vmem>>, vector<8x128xf32>
    tpu.vector_store %arg11[%c56_110, %c0_111], %484 {strides = array<i32>} : memref<64x128xf32, #tpu.memory_space<vmem>>, vector<8x128xf32>,
    %c0_112 = arith.constant 0 : index
    %c0_113 = arith.constant 0 : index
    %516 = vector.load %arg12[%c0_112, %c0_113] : memref<64x128xf32, #tpu.memory_space<vmem>>, vector<8x128xf32>
    tpu.vector_store %arg12[%c0_112, %c0_113], %514 {strides = array<i32>} : memref<64x128xf32, #tpu.memory_space<vmem>>, vector<8x128xf32>,
    %c0_114 = arith.constant 0 : index
    %c0_115 = arith.constant 0 : index
    %517 = vector.load %arg13[%c0_114, %c0_115] : memref<8x128xf32, #tpu.memory_space<vmem>>, vector<8x128xf32>
    tpu.vector_store %arg13[%c0_114, %c0_115], %484 {strides = array<i32>} : memref<8x128xf32, #tpu.memory_space<vmem>>, vector<8x128xf32>,
    %c0_116 = arith.constant 0 : index
    %c0_117 = arith.constant 0 : index
    %518 = vector.load %arg14[%c0_116, %c0_117] : memref<8x128xf32, #tpu.memory_space<vmem>>, vector<8x128xf32>
    tpu.vector_store %arg14[%c0_116, %c0_117], %514 {strides = array<i32>} : memref<8x128xf32, #tpu.memory_space<vmem>>, vector<8x128xf32>,
    return
  }
  func.func @transform_0(%arg0: i32) -> (i32, i32) {
    %c0_i32 = arith.constant 0 : i32
    %c0_i32_0 = arith.constant 0 : i32
    return %arg0, %c0_i32 : i32, i32
  }
  func.func @transform_1(%arg0: i32) -> (i32, i32) {
    %c0_i32 = arith.constant 0 : i32
    %0 = arith.subi %c0_i32, %arg0 : i32
    %c0_i32_0 = arith.constant 0 : i32
    %c0_i32_1 = arith.constant 0 : i32
    return %0, %c0_i32_0 : i32, i32
  }
  func.func @transform_2(%arg0: i32) -> (i32, i32) {
    %c0_i32 = arith.constant 0 : i32
    %c0_i32_0 = arith.constant 0 : i32
    %c0_i32_1 = arith.constant 0 : i32
    return %c0_i32, %c0_i32_0 : i32, i32
  }
  func.func @transform_3(%arg0: i32) -> (i32, i32) {
    %c0_i32 = arith.constant 0 : i32
    %c0_i32_0 = arith.constant 0 : i32
    %c0_i32_1 = arith.constant 0 : i32
    return %c0_i32, %c0_i32_0 : i32, i32
  }
  func.func @transform_4(%arg0: i32) -> (i32, i32) {
    %c0_i32 = arith.constant 0 : i32
    %c0_i32_0 = arith.constant 0 : i32
    %c0_i32_1 = arith.constant 0 : i32
    return %c0_i32, %c0_i32_0 : i32, i32
  }
  func.func @transform_5(%arg0: i32) -> (i32, i32) {
    %c0_i32 = arith.constant 0 : i32
    %c0_i32_0 = arith.constant 0 : i32
    %c0_i32_1 = arith.constant 0 : i32
    return %c0_i32, %c0_i32_0 : i32, i32
  }
  func.func @transform_6(%arg0: i32) -> (i32, i32) {
    %c0_i32 = arith.constant 0 : i32
    %c0_i32_0 = arith.constant 0 : i32
    %c0_i32_1 = arith.constant 0 : i32
    return %c0_i32, %c0_i32_0 : i32, i32
  }
  func.func @transform_7(%arg0: i32) -> (i32, i32) {
    %c0_i32 = arith.constant 0 : i32
    %c0_i32_0 = arith.constant 0 : i32
    %c0_i32_1 = arith.constant 0 : i32
    return %c0_i32, %c0_i32_0 : i32, i32
  }
  func.func @transform_8(%arg0: i32) -> (i32, i32) {
    %c0_i32 = arith.constant 0 : i32
    %c0_i32_0 = arith.constant 0 : i32
    %c0_i32_1 = arith.constant 0 : i32
    return %c0_i32, %c0_i32_0 : i32, i32
  }
  func.func @transform_9(%arg0: i32) -> (i32, i32) {
    %c0_i32 = arith.constant 0 : i32
    %c0_i32_0 = arith.constant 0 : i32
    %c0_i32_1 = arith.constant 0 : i32
    return %c0_i32, %c0_i32_0 : i32, i32
  }
  func.func @transform_10(%arg0: i32) -> (i32, i32) {
    %c0_i32 = arith.constant 0 : i32
    %c0_i32_0 = arith.constant 0 : i32
    return %arg0, %c0_i32 : i32, i32
  }
  func.func @transform_11(%arg0: i32) -> (i32, i32) {
    %c0_i32 = arith.constant 0 : i32
    %0 = arith.subi %c0_i32, %arg0 : i32
    %c0_i32_0 = arith.constant 0 : i32
    %c0_i32_1 = arith.constant 0 : i32
    return %0, %c0_i32_0 : i32, i32
  }
}

</mosaic_0001>

<llo_original>
// kernel: gru_layer.1
$region0: #{gru_layer.1}
  #allocation0 [shape = 'u32[]', space=smem, size = 0x4, offset = 0x4, fixed_abs, tag = 'smem constant byte address 0x4 - core index']
  #allocation1 [shape = 'u32[72,128]{1,0:T(1,128)}', space=vmem, size = 0x9000, scoped, tag = 'internal scratch']
  #allocation2 [shape = 'f32[8,128]{1,0:T(8,128)}', space=vmem, size = 0x1000, scoped, tag = 'scratch operand']
  #allocation3 [shape = 'f32[8,128]{1,0:T(8,128)}', space=vmem, size = 0x1000, scoped, tag = 'scratch operand']
  %s0 = inlined_call_operand.vmem [shape: f32[64,16], index: 0, kind: input, shape index: {}]
  %s1 = inlined_call_operand.vmem [shape: f32[64,16], index: 1, kind: input, shape index: {}]
  %s2 = inlined_call_operand.vmem [shape: f32[16,384], index: 2, kind: input, shape index: {}]
  %s3 = inlined_call_operand.vmem [shape: f32[16,384], index: 3, kind: input, shape index: {}]
  %s4 = inlined_call_operand.vmem [shape: f32[1,384], index: 4, kind: input, shape index: {}]
  %s5 = inlined_call_operand.vmem [shape: f32[1,384], index: 5, kind: input, shape index: {}]
  %s6 = inlined_call_operand.hbm [shape: f32[128,384], index: 6, kind: input, shape index: {}]
  %s7 = inlined_call_operand.hbm [shape: f32[128,384], index: 7, kind: input, shape index: {}]
  %s8 = inlined_call_operand.vmem [shape: f32[1,384], index: 8, kind: input, shape index: {}]
  %s9 = inlined_call_operand.vmem [shape: f32[1,384], index: 9, kind: input, shape index: {}]
  %s10 = inlined_call_operand.hbm [shape: f32[64,128], index: 10, kind: output, shape index: {0}]
  %s11 = inlined_call_operand.hbm [shape: f32[64,128], index: 11, kind: output, shape index: {1}]
  %12 = xla_tuple %s10, %s11
  %s13 = sld [smem:[#allocation0]]
  $region70: #{gru_layer.1} parent=0
    _
  %s15 = ssub.s32 1, %s13
  %s16 = scalar_select 0, %s15, %s13
  $region1: #{gru_layer.1} parent=0
    #allocation4 [shape = 'u8[196608]{0}', space=vmem, size = 0x30000, scoped, tag = 'input window, operand 6, single buffered']
    #allocation5 [shape = 's32[1]{0}', space=sflag, size = 0x4, scoped, tag = 'scoped memory for gru_layer.1']
    #allocation6 [shape = 's32[1]{0}', space=sflag, size = 0x4, scoped, tag = 'scoped memory for gru_layer.1']
    #allocation7 [shape = 'u8[196608]{0}', space=vmem, size = 0x30000, scoped, tag = 'input window, operand 7, single buffered']
    #allocation8 [shape = 's32[1]{0}', space=sflag, size = 0x4, scoped, tag = 'scoped memory for gru_layer.1']
    #allocation9 [shape = 'u8[32768]{0}', space=vmem, size = 0x8000, scoped, tag = 'output window, operand 0, single buffered']
    #allocation10 [shape = 'u8[32768]{0}', space=vmem, size = 0x8000, scoped, tag = 'output window, operand 1, single buffered']
    #allocation11 [shape = 's32[1]{0}', space=sflag, size = 0x4, scoped, tag = 'scoped memory for gru_layer.1']
    %17 = vsyncpa [#allocation5], 0
    %18 = vsyncpa [#allocation8], 0
    %19 = vsyncpa [#allocation6], 0
    %20 = vsyncpa [#allocation11], 0
    // Predicated region
    $region2: #{gru_layer.1} parent=1 // pred_check
      _
    $region3: #{gru_layer.1} parent=1 // pred_check_branch
      %22 = sbr.rel (0) target = $region5
    $region4: #{gru_layer.1} parent=1 // pred_region
      _
    $region5: #{gru_layer.1} parent=1 // pred_fallthru
      _
    // Predicated region
    $region6: #{gru_layer.1} parent=1 // pred_check
      _
    $region7: #{gru_layer.1} parent=1 // pred_check_branch
      %24 = sbr.rel (0) target = $region9
    $region8: #{gru_layer.1} parent=1 // pred_region
      %s25 = ssub.s32 0, 0
      %s26 = smul.u32 8, %s25
      %p27 = scmp.lt.s32.totalorder %s26, 7
      %s28 = scalar_select %p27, %s26, 7
      %s29 = smul.addr %s28, 8
      %s30 = scalar_lea.vmem %s1, %s29
      %s31 = ssub.s32 0, 0
      %s32 = smul.u32 8, %s31
    $region9: #{gru_layer.1} parent=1 // pred_fallthru
      _
    // Predicated region
    $region10: #{gru_layer.1} parent=1 // pred_check
      _
    $region11: #{gru_layer.1} parent=1 // pred_check_branch
      %34 = sbr.rel (0) target = $region13
    $region12: #{gru_layer.1} parent=1 // pred_region
      _
    $region13: #{gru_layer.1} parent=1 // pred_fallthru
      _
    // Predicated region
    $region14: #{gru_layer.1} parent=1 // pred_check
      _
    $region15: #{gru_layer.1} parent=1 // pred_check_branch
      %36 = sbr.rel (0) target = $region17
    $region16: #{gru_layer.1} parent=1 // pred_region
      _
    $region17: #{gru_layer.1} parent=1 // pred_fallthru
      _
    // Predicated region
    $region18: #{gru_layer.1} parent=1 // pred_check
      _
    $region19: #{gru_layer.1} parent=1 // pred_check_branch
      %38 = sbr.rel (0) target = $region21
    $region20: #{gru_layer.1} parent=1 // pred_region
      _
    $region21: #{gru_layer.1} parent=1 // pred_fallthru
      _
    // Predicated region
    $region22: #{gru_layer.1} parent=1 // pred_check
      _
    $region23: #{gru_layer.1} parent=1 // pred_check_branch
      %40 = sbr.rel (0) target = $region25
    $region24: #{gru_layer.1} parent=1 // pred_region
      _
    $region25: #{gru_layer.1} parent=1 // pred_fallthru
      _
    // Predicated region
    $region26: #{gru_layer.1} parent=1 // pred_check
      _
    $region27: #{gru_layer.1} parent=1 // pred_check_branch
      %42 = sbr.rel (0) target = $region29
    $region28: #{gru_layer.1} parent=1 // pred_region
      %44 = vsyncadd [#allocation5], 0
      %s45 = sshll.u32 %s6, 4
      %s46 = int_to_ptr.hbm [resolvable:$true] %s45
      %s47 = sshll.u32 [#allocation4], 4
      %s48 = int_to_ptr.vmem [resolvable:$true] %s47
      %53 = dma.hbm_to_vmem [thread:$0]  %s46, 6144, %s48, [#allocation5], 384, 384, 24
    $region29: #{gru_layer.1} parent=1 // pred_fallthru
      _
    // Predicated region
    $region30: #{gru_layer.1} parent=1 // pred_check
      _
    $region31: #{gru_layer.1} parent=1 // pred_check_branch
      %55 = sbr.rel (0) target = $region33
    $region32: #{gru_layer.1} parent=1 // pred_region
      %57 = vsyncadd [#allocation8], 0
      %s58 = sshll.u32 %s7, 4
      %s59 = int_to_ptr.hbm [resolvable:$true] %s58
      %s60 = sshll.u32 [#allocation7], 4
      %s61 = int_to_ptr.vmem [resolvable:$true] %s60
      %66 = dma.hbm_to_vmem [thread:$0]  %s59, 6144, %s61, [#allocation8], 384, 384, 24
    $region33: #{gru_layer.1} parent=1 // pred_fallthru
      _
    // Predicated region
    $region34: #{gru_layer.1} parent=1 // pred_check
      _
    $region35: #{gru_layer.1} parent=1 // pred_check_branch
      %68 = sbr.rel (0) target = $region37
    $region36: #{gru_layer.1} parent=1 // pred_region
      _
    $region37: #{gru_layer.1} parent=1 // pred_fallthru
      _
    // Predicated region
    $region38: #{gru_layer.1} parent=1 // pred_check
      _
    $region39: #{gru_layer.1} parent=1 // pred_check_branch
      %70 = sbr.rel (0) target = $region41
    $region40: #{gru_layer.1} parent=1 // pred_region
      _
    $region41: #{gru_layer.1} parent=1 // pred_fallthru
      _
    // Predicated region
    $region42: #{gru_layer.1} parent=1 // pred_check
      _
    $region43: #{gru_layer.1} parent=1 // pred_check_branch
      %72 = sbr.rel (0) target = $region45
    $region44: #{gru_layer.1} parent=1 // pred_region
      %74 = dma.done [#allocation5], 6144
    $region45: #{gru_layer.1} parent=1 // pred_fallthru
      _
    // Predicated region
    $region46: #{gru_layer.1} parent=1 // pred_check
      _
    $region47: #{gru_layer.1} parent=1 // pred_check_branch
      %76 = sbr.rel (0) target = $region49
    $region48: #{gru_layer.1} parent=1 // pred_region
      %78 = dma.done [#allocation8], 6144
    $region49: #{gru_layer.1} parent=1 // pred_fallthru
      _
    %s79 = ssub.s32 0, 0
    %s80 = smul.u32 8, %s79
    %p81 = scmp.lt.s32.totalorder %s80, 7
    %s82 = scalar_select %p81, %s80, 7
    %s83 = smul.addr %s82, 8
    %s84 = scalar_lea.vmem %s1, %s83
    %s85 = ssub.s32 0, 0
    %s86 = smul.u32 8, %s85
    %p87 = scmp.lt.s32.totalorder %s86, 7
    %s88 = scalar_select %p87, %s86, 7
    %s89 = smul.addr %s88, 8
    %s90 = scalar_lea.vmem %s1, %s89
    %s91 = ssub.s32 0, 0
    %s92 = smul.u32 8, %s91
    %s93 = ssub.s32 0, 0
    %s94 = smul.u32 8, %s93
    %p95 = scmp.eq.s32.totalorder 0, 0
    // Predicated region
    $region50: #{gru_layer.1} parent=1 // pred_check
      %p96 = pneg %p95
    $region51: #{gru_layer.1} parent=1 // pred_check_branch
      %98 = sbr.rel (%p96) target = $region53
    $region52: #{gru_layer.1} parent=1 // pred_region
      %99 = vst [vmem:[#allocation2] sm:$0xff] 0.0
      %100 = vst [vmem:[#allocation3] sm:$0xff] 0.0
    $region53: #{gru_layer.1} parent=1 // pred_fallthru
      _
    %v101 = vld [vmem:[%s4] sm:$0x7]
    %v102 = vld [vmem:[%s5] sm:$0x7]
    %v103 = vld [vmem:[%s0] sm:$0xff]
    %v104 = vld [vmem:[%s0 + $0x8] sm:$0xff]
    %v105 = vld [vmem:[%s0 + $0x10] sm:$0xff]
    %v106 = vld [vmem:[%s0 + $0x18] sm:$0xff]
    %v107 = vld [vmem:[%s0 + $0x20] sm:$0xff]
    %v108 = vld [vmem:[%s0 + $0x28] sm:$0xff]
    %v109 = vld [vmem:[%s0 + $0x30] sm:$0xff]
    %v110 = vld [vmem:[%s0 + $0x38] sm:$0xff]
    %v111 = vld [vmem:[%s2] sm:$0xff]
    %v112 = vld [vmem:[%s2 + $0x8] sm:$0xff]
    %v113 = vld [vmem:[%s2 + $0x10] sm:$0xff]
    %v114 = vld [vmem:[%s2 + $0x18] sm:$0xff]
    %v115 = vld [vmem:[%s2 + $0x20] sm:$0xff]
    %v116 = vld [vmem:[%s2 + $0x28] sm:$0xff]
    %vm117 = vcmask 130048
    %v119 = vsel %vm117, %v103, 0
    %v122 = vsel %vm117, %v104, 0
    %v125 = vsel %vm117, %v105, 0
    %v128 = vsel %vm117, %v106, 0
    %v131 = vsel %vm117, %v107, 0
    %v134 = vsel %vm117, %v108, 0
    %v137 = vsel %vm117, %v109, 0
    %v140 = vsel %vm117, %v110, 0
    %142 = vmatpush.msra.mxu0 0.0
    %143 = vmatpush.msra.mxu0 0.0
    %144 = vmatpush.msra.mxu0 0.0
    %145 = vmatpush.msra.mxu0 0.0
    %146 = vmatpush.msra.mxu0 0.0
    %147 = vmatpush.msra.mxu0 0.0
    %148 = vmatpush.msra.mxu0 0.0
    %149 = vmatpush.msra.mxu0 0.0
    %150 = vmatpush.msra.mxu0 0.0
    %151 = vmatpush.msra.mxu0 0.0
    %152 = vmatpush.msra.mxu0 0.0
    %153 = vmatpush.msra.mxu0 0.0
    %154 = vmatpush.msra.mxu0 0.0
    %155 = vmatpush.msra.mxu0 0.0
    %156 = vmatpush.msra.mxu0 %v114
    %157 = vmatpush.msra.mxu0 %v111
    %158 = vmatmul.f32.gmra.mxu0 %v119
    %v159 = vpop.f32.mrf.mxu0
    %v160 = vadd.f32 0.0, %v159
    %161 = vmatmul.f32.gmra.mxu0 %v122
    %v162 = vpop.f32.mrf.mxu0
    %v163 = vadd.f32 0.0, %v162
    %164 = vmatmul.f32.gmra.mxu0 %v125
    %v165 = vpop.f32.mrf.mxu0
    %v166 = vadd.f32 0.0, %v165
    %167 = vmatmul.f32.gmra.mxu0 %v128
    %v168 = vpop.f32.mrf.mxu0
    %v169 = vadd.f32 0.0, %v168
    %170 = vmatmul.f32.gmra.mxu0 %v131
    %v171 = vpop.f32.mrf.mxu0
    %v172 = vadd.f32 0.0, %v171
    %173 = vmatmul.f32.gmra.mxu0 %v134
    %v174 = vpop.f32.mrf.mxu0
    %v175 = vadd.f32 0.0, %v174
    %176 = vmatmul.f32.gmra.mxu0 %v137
    %v177 = vpop.f32.mrf.mxu0
    %v178 = vadd.f32 0.0, %v177
    %179 = vmatmul.f32.gmra.mxu0 %v140
    %v180 = vpop.f32.mrf.mxu0
    %v181 = vadd.f32 0.0, %v180
    %182 = vdwg.mxu0
    %183 = vmatpush.msra.mxu0 0.0
    %184 = vmatpush.msra.mxu0 0.0
    %185 = vmatpush.msra.mxu0 0.0
    %186 = vmatpush.msra.mxu0 0.0
    %187 = vmatpush.msra.mxu0 0.0
    %188 = vmatpush.msra.mxu0 0.0
    %189 = vmatpush.msra.mxu0 0.0
    %190 = vmatpush.msra.mxu0 0.0
    %191 = vmatpush.msra.mxu0 0.0
    %192 = vmatpush.msra.mxu0 0.0
    %193 = vmatpush.msra.mxu0 0.0
    %194 = vmatpush.msra.mxu0 0.0
    %195 = vmatpush.msra.mxu0 0.0
    %196 = vmatpush.msra.mxu0 0.0
    %197 = vmatpush.msra.mxu0 %v115
    %198 = vmatpush.msra.mxu0 %v112
    %199 = vmatmul.f32.gmra.mxu0 %v119
    %v200 = vpop.f32.mrf.mxu0
    %v201 = vadd.f32 0.0, %v200
    %202 = vmatmul.f32.gmra.mxu0 %v122
    %v203 = vpop.f32.mrf.mxu0
    %v204 = vadd.f32 0.0, %v203
    %205 = vmatmul.f32.gmra.mxu0 %v125
    %v206 = vpop.f32.mrf.mxu0
    %v207 = vadd.f32 0.0, %v206
    %208 = vmatmul.f32.gmra.mxu0 %v128
    %v209 = vpop.f32.mrf.mxu0
    %v210 = vadd.f32 0.0, %v209
    %211 = vmatmul.f32.gmra.mxu0 %v131
    %v212 = vpop.f32.mrf.mxu0
    %v213 = vadd.f32 0.0, %v212
    %214 = vmatmul.f32.gmra.mxu0 %v134
    %v215 = vpop.f32.mrf.mxu0
    %v216 = vadd.f32 0.0, %v215
    %217 = vmatmul.f32.gmra.mxu0 %v137
    %v218 = vpop.f32.mrf.mxu0
    %v219 = vadd.f32 0.0, %v218
    %220 = vmatmul.f32.gmra.mxu0 %v140
    %v221 = vpop.f32.mrf.mxu0
    %v222 = vadd.f32 0.0, %v221
    %223 = vdwg.mxu0
    %224 = vmatpush.msra.mxu0 0.0
    %225 = vmatpush.msra.mxu0 0.0
    %226 = vmatpush.msra.mxu0 0.0
    %227 = vmatpush.msra.mxu0 0.0
    %228 = vmatpush.msra.mxu0 0.0
    %229 = vmatpush.msra.mxu0 0.0
    %230 = vmatpush.msra.mxu0 0.0
    %231 = vmatpush.msra.mxu0 0.0
    %232 = vmatpush.msra.mxu0 0.0
    %233 = vmatpush.msra.mxu0 0.0
    %234 = vmatpush.msra.mxu0 0.0
    %235 = vmatpush.msra.mxu0 0.0
    %236 = vmatpush.msra.mxu0 0.0
    %237 = vmatpush.msra.mxu0 0.0
    %238 = vmatpush.msra.mxu0 %v116
    %239 = vmatpush.msra.mxu0 %v113
    %240 = vmatmul.f32.gmra.mxu0 %v119
    %v241 = vpop.f32.mrf.mxu0
    %v242 = vadd.f32 0.0, %v241
    %243 = vmatmul.f32.gmra.mxu0 %v122
    %v244 = vpop.f32.mrf.mxu0
    %v245 = vadd.f32 0.0, %v244
    %246 = vmatmul.f32.gmra.mxu0 %v125
    %v247 = vpop.f32.mrf.mxu0
    %v248 = vadd.f32 0.0, %v247
    %249 = vmatmul.f32.gmra.mxu0 %v128
    %v250 = vpop.f32.mrf.mxu0
    %v251 = vadd.f32 0.0, %v250
    %252 = vmatmul.f32.gmra.mxu0 %v131
    %v253 = vpop.f32.mrf.mxu0
    %v254 = vadd.f32 0.0, %v253
    %255 = vmatmul.f32.gmra.mxu0 %v134
    %v256 = vpop.f32.mrf.mxu0
    %v257 = vadd.f32 0.0, %v256
    %258 = vmatmul.f32.gmra.mxu0 %v137
    %v259 = vpop.f32.mrf.mxu0
    %v260 = vadd.f32 0.0, %v259
    %261 = vmatmul.f32.gmra.mxu0 %v140
    %v262 = vpop.f32.mrf.mxu0
    %v263 = vadd.f32 0.0, %v262
    %264 = vdwg.mxu0
    %v266 = vperm.slane %v101, 0
    %v267 = vperm.slane %v101, 1
    %v268 = vperm.slane %v101, 2
    %v272 = vadd.f32 %v266, %v160
    %v273 = vadd.f32 %v267, %v201
    %v274 = vadd.f32 %v268, %v242
    %v275 = vadd.f32 %v266, %v163
    %v276 = vadd.f32 %v267, %v204
    %v277 = vadd.f32 %v268, %v245
    %v278 = vadd.f32 %v266, %v166
    %v279 = vadd.f32 %v267, %v207
    %v280 = vadd.f32 %v268, %v248
    %v281 = vadd.f32 %v266, %v169
    %v282 = vadd.f32 %v267, %v210
    %v283 = vadd.f32 %v268, %v251
    %v284 = vadd.f32 %v266, %v172
    %v285 = vadd.f32 %v267, %v213
    %v286 = vadd.f32 %v268, %v254
    %v287 = vadd.f32 %v266, %v175
    %v288 = vadd.f32 %v267, %v216
    %v289 = vadd.f32 %v268, %v257
    %v290 = vadd.f32 %v266, %v178
    %v291 = vadd.f32 %v267, %v219
    %v292 = vadd.f32 %v268, %v260
    %v293 = vadd.f32 %v266, %v181
    %v294 = vadd.f32 %v267, %v222
    %v295 = vadd.f32 %v268, %v263
    %v296 = vld [vmem:[%s90] sm:$0xff]
    %v297 = vld [vmem:[%s90 + $0x8] sm:$0xff]
    %v298 = vld [vmem:[%s90 + $0x10] sm:$0xff]
    %v299 = vld [vmem:[%s90 + $0x18] sm:$0xff]
    %v300 = vld [vmem:[%s90 + $0x20] sm:$0xff]
    %v301 = vld [vmem:[%s90 + $0x28] sm:$0xff]
    %v302 = vld [vmem:[%s90 + $0x30] sm:$0xff]
    %v303 = vld [vmem:[%s90 + $0x38] sm:$0xff]
    %v304 = vld [vmem:[%s3] sm:$0xff]
    %v305 = vld [vmem:[%s3 + $0x8] sm:$0xff]
    %v306 = vld [vmem:[%s3 + $0x10] sm:$0xff]
    %v307 = vld [vmem:[%s3 + $0x18] sm:$0xff]
    %v308 = vld [vmem:[%s3 + $0x20] sm:$0xff]
    %v309 = vld [vmem:[%s3 + $0x28] sm:$0xff]
    %v311 = vsel %vm117, %v296, 0
    %v314 = vsel %vm117, %v297, 0
    %v317 = vsel %vm117, %v298, 0
    %v320 = vsel %vm117, %v299, 0
    %v323 = vsel %vm117, %v300, 0
    %v326 = vsel %vm117, %v301, 0
    %v329 = vsel %vm117, %v302, 0
    %v332 = vsel %vm117, %v303, 0
    %334 = vmatpush.msra.mxu0 0.0
    %335 = vmatpush.msra.mxu0 0.0
    %336 = vmatpush.msra.mxu0 0.0
    %337 = vmatpush.msra.mxu0 0.0
    %338 = vmatpush.msra.mxu0 0.0
    %339 = vmatpush.msra.mxu0 0.0
    %340 = vmatpush.msra.mxu0 0.0
    %341 = vmatpush.msra.mxu0 0.0
    %342 = vmatpush.msra.mxu0 0.0
    %343 = vmatpush.msra.mxu0 0.0
    %344 = vmatpush.msra.mxu0 0.0
    %345 = vmatpush.msra.mxu0 0.0
    %346 = vmatpush.msra.mxu0 0.0
    %347 = vmatpush.msra.mxu0 0.0
    %348 = vmatpush.msra.mxu0 %v307
    %349 = vmatpush.msra.mxu0 %v304
    %350 = vmatmul.f32.gmra.mxu0 %v311
    %v351 = vpop.f32.mrf.mxu0
    %v352 = vadd.f32 0.0, %v351
    %353 = vmatmul.f32.gmra.mxu0 %v314
    %v354 = vpop.f32.mrf.mxu0
    %v355 = vadd.f32 0.0, %v354
    %356 = vmatmul.f32.gmra.mxu0 %v317
    %v357 = vpop.f32.mrf.mxu0
    %v358 = vadd.f32 0.0, %v357
    %359 = vmatmul.f32.gmra.mxu0 %v320
    %v360 = vpop.f32.mrf.mxu0
    %v361 = vadd.f32 0.0, %v360
    %362 = vmatmul.f32.gmra.mxu0 %v323
    %v363 = vpop.f32.mrf.mxu0
    %v364 = vadd.f32 0.0, %v363
    %365 = vmatmul.f32.gmra.mxu0 %v326
    %v366 = vpop.f32.mrf.mxu0
    %v367 = vadd.f32 0.0, %v366
    %368 = vmatmul.f32.gmra.mxu0 %v329
    %v369 = vpop.f32.mrf.mxu0
    %v370 = vadd.f32 0.0, %v369
    %371 = vmatmul.f32.gmra.mxu0 %v332
    %v372 = vpop.f32.mrf.mxu0
    %v373 = vadd.f32 0.0, %v372
    %374 = vdwg.mxu0
    %375 = vmatpush.msra.mxu0 0.0
    %376 = vmatpush.msra.mxu0 0.0
    %377 = vmatpush.msra.mxu0 0.0
    %378 = vmatpush.msra.mxu0 0.0
    %379 = vmatpush.msra.mxu0 0.0
    %380 = vmatpush.msra.mxu0 0.0
    %381 = vmatpush.msra.mxu0 0.0
    %382 = vmatpush.msra.mxu0 0.0
    %383 = vmatpush.msra.mxu0 0.0
    %384 = vmatpush.msra.mxu0 0.0
    %385 = vmatpush.msra.mxu0 0.0
    %386 = vmatpush.msra.mxu0 0.0
    %387 = vmatpush.msra.mxu0 0.0
    %388 = vmatpush.msra.mxu0 0.0
    %389 = vmatpush.msra.mxu0 %v308
    %390 = vmatpush.msra.mxu0 %v305
    %391 = vmatmul.f32.gmra.mxu0 %v311
    %v392 = vpop.f32.mrf.mxu0
    %v393 = vadd.f32 0.0, %v392
    %394 = vmatmul.f32.gmra.mxu0 %v314
    %v395 = vpop.f32.mrf.mxu0
    %v396 = vadd.f32 0.0, %v395
    %397 = vmatmul.f32.gmra.mxu0 %v317
    %v398 = vpop.f32.mrf.mxu0
    %v399 = vadd.f32 0.0, %v398
    %400 = vmatmul.f32.gmra.mxu0 %v320
    %v401 = vpop.f32.mrf.mxu0
    %v402 = vadd.f32 0.0, %v401
    %403 = vmatmul.f32.gmra.mxu0 %v323
    %v404 = vpop.f32.mrf.mxu0
    %v405 = vadd.f32 0.0, %v404
    %406 = vmatmul.f32.gmra.mxu0 %v326
    %v407 = vpop.f32.mrf.mxu0
    %v408 = vadd.f32 0.0, %v407
    %409 = vmatmul.f32.gmra.mxu0 %v329
    %v410 = vpop.f32.mrf.mxu0
    %v411 = vadd.f32 0.0, %v410
    %412 = vmatmul.f32.gmra.mxu0 %v332
    %v413 = vpop.f32.mrf.mxu0
    %v414 = vadd.f32 0.0, %v413
    %415 = vdwg.mxu0
    %416 = vmatpush.msra.mxu0 0.0
    %417 = vmatpush.msra.mxu0 0.0
    %418 = vmatpush.msra.mxu0 0.0
    %419 = vmatpush.msra.mxu0 0.0
    %420 = vmatpush.msra.mxu0 0.0
    %421 = vmatpush.msra.mxu0 0.0
    %422 = vmatpush.msra.mxu0 0.0
    %423 = vmatpush.msra.mxu0 0.0
    %424 = vmatpush.msra.mxu0 0.0
    %425 = vmatpush.msra.mxu0 0.0
    %426 = vmatpush.msra.mxu0 0.0
    %427 = vmatpush.msra.mxu0 0.0
    %428 = vmatpush.msra.mxu0 0.0
    %429 = vmatpush.msra.mxu0 0.0
    %430 = vmatpush.msra.mxu0 %v309
    %431 = vmatpush.msra.mxu0 %v306
    %432 = vmatmul.f32.gmra.mxu0 %v311
    %v433 = vpop.f32.mrf.mxu0
    %v434 = vadd.f32 0.0, %v433
    %435 = vmatmul.f32.gmra.mxu0 %v314
    %v436 = vpop.f32.mrf.mxu0
    %v437 = vadd.f32 0.0, %v436
    %438 = vmatmul.f32.gmra.mxu0 %v317
    %v439 = vpop.f32.mrf.mxu0
    %v440 = vadd.f32 0.0, %v439
    %441 = vmatmul.f32.gmra.mxu0 %v320
    %v442 = vpop.f32.mrf.mxu0
    %v443 = vadd.f32 0.0, %v442
    %444 = vmatmul.f32.gmra.mxu0 %v323
    %v445 = vpop.f32.mrf.mxu0
    %v446 = vadd.f32 0.0, %v445
    %447 = vmatmul.f32.gmra.mxu0 %v326
    %v448 = vpop.f32.mrf.mxu0
    %v449 = vadd.f32 0.0, %v448
    %450 = vmatmul.f32.gmra.mxu0 %v329
    %v451 = vpop.f32.mrf.mxu0
    %v452 = vadd.f32 0.0, %v451
    %453 = vmatmul.f32.gmra.mxu0 %v332
    %v454 = vpop.f32.mrf.mxu0
    %v455 = vadd.f32 0.0, %v454
    %456 = vdwg.mxu0
    %v458 = vperm.slane %v102, 0
    %v459 = vperm.slane %v102, 1
    %v460 = vperm.slane %v102, 2
    %v464 = vadd.f32 %v458, %v352
    %v465 = vadd.f32 %v459, %v393
    %v466 = vadd.f32 %v460, %v434
    %v467 = vadd.f32 %v458, %v355
    %v468 = vadd.f32 %v459, %v396
    %v469 = vadd.f32 %v460, %v437
    %v470 = vadd.f32 %v458, %v358
    %v471 = vadd.f32 %v459, %v399
    %v472 = vadd.f32 %v460, %v440
    %v473 = vadd.f32 %v458, %v361
    %v474 = vadd.f32 %v459, %v402
    %v475 = vadd.f32 %v460, %v443
    %v476 = vadd.f32 %v458, %v364
    %v477 = vadd.f32 %v459, %v405
    %v478 = vadd.f32 %v460, %v446
    %v479 = vadd.f32 %v458, %v367
    %v480 = vadd.f32 %v459, %v408
    %v481 = vadd.f32 %v460, %v449
    %v482 = vadd.f32 %v458, %v370
    %v483 = vadd.f32 %v459, %v411
    %v484 = vadd.f32 %v460, %v452
    %v485 = vadd.f32 %v458, %v373
    %v486 = vadd.f32 %v459, %v414
    %v487 = vadd.f32 %v460, %v455
    %v488 = vld [vmem:[#allocation4] sm:$0xff]
    %v489 = vld [vmem:[#allocation4 + $0x8] sm:$0xff]
    %v490 = vld [vmem:[#allocation4 + $0x10] sm:$0xff]
    %v491 = vld [vmem:[#allocation4 + $0x18] sm:$0xff]
    %v492 = vld [vmem:[#allocation4 + $0x20] sm:$0xff]
    %v493 = vld [vmem:[#allocation4 + $0x28] sm:$0xff]
    %v494 = vld [vmem:[#allocation4 + $0x30] sm:$0xff]
    %v495 = vld [vmem:[#allocation4 + $0x38] sm:$0xff]
    %v496 = vld [vmem:[#allocation4 + $0x40] sm:$0xff]
    %v497 = vld [vmem:[#allocation4 + $0x48] sm:$0xff]
    %v498 = vld [vmem:[#allocation4 + $0x50] sm:$0xff]
    %v499 = vld [vmem:[#allocation4 + $0x58] sm:$0xff]
    %v500 = vld [vmem:[#allocation4 + $0x60] sm:$0xff]
    %v501 = vld [vmem:[#allocation4 + $0x68] sm:$0xff]
    %v502 = vld [vmem:[#allocation4 + $0x70] sm:$0xff]
    %v503 = vld [vmem:[#allocation4 + $0x78] sm:$0xff]
    %v504 = vld [vmem:[#allocation4 + $0x80] sm:$0xff]
    %v505 = vld [vmem:[#allocation4 + $0x88] sm:$0xff]
    %v506 = vld [vmem:[#allocation4 + $0x90] sm:$0xff]
    %v507 = vld [vmem:[#allocation4 + $0x98] sm:$0xff]
    %v508 = vld [vmem:[#allocation4 + $0xa0] sm:$0xff]
    %v509 = vld [vmem:[#allocation4 + $0xa8] sm:$0xff]
    %v510 = vld [vmem:[#allocation4 + $0xb0] sm:$0xff]
    %v511 = vld [vmem:[#allocation4 + $0xb8] sm:$0xff]
    %v512 = vld [vmem:[#allocation4 + $0xc0] sm:$0xff]
    %v513 = vld [vmem:[#allocation4 + $0xc8] sm:$0xff]
    %v514 = vld [vmem:[#allocation4 + $0xd0] sm:$0xff]
    %v515 = vld [vmem:[#allocation4 + $0xd8] sm:$0xff]
    %v516 = vld [vmem:[#allocation4 + $0xe0] sm:$0xff]
    %v517 = vld [vmem:[#allocation4 + $0xe8] sm:$0xff]
    %v518 = vld [vmem:[#allocation4 + $0xf0] sm:$0xff]
    %v519 = vld [vmem:[#allocation4 + $0xf8] sm:$0xff]
    %v520 = vld [vmem:[#allocation4 + $0x100] sm:$0xff]
    %v521 = vld [vmem:[#allocation4 + $0x108] sm:$0xff]
    %v522 = vld [vmem:[#allocation4 + $0x110] sm:$0xff]
    %v523 = vld [vmem:[#allocation4 + $0x118] sm:$0xff]
    %v524 = vld [vmem:[#allocation4 + $0x120] sm:$0xff]
    %v525 = vld [vmem:[#allocation4 + $0x128] sm:$0xff]
    %v526 = vld [vmem:[#allocation4 + $0x130] sm:$0xff]
    %v527 = vld [vmem:[#allocation4 + $0x138] sm:$0xff]
    %v528 = vld [vmem:[#allocation4 + $0x140] sm:$0xff]
    %v529 = vld [vmem:[#allocation4 + $0x148] sm:$0xff]
    %v530 = vld [vmem:[#allocation4 + $0x150] sm:$0xff]
    %v531 = vld [vmem:[#allocation4 + $0x158] sm:$0xff]
    %v532 = vld [vmem:[#allocation4 + $0x160] sm:$0xff]
    %v533 = vld [vmem:[#allocation4 + $0x168] sm:$0xff]
    %v534 = vld [vmem:[#allocation4 + $0x170] sm:$0xff]
    %v535 = vld [vmem:[#allocation4 + $0x178] sm:$0xff]
    %v536 = vld [vmem:[#allocation7] sm:$0xff]
    %v537 = vld [vmem:[#allocation7 + $0x8] sm:$0xff]
    %v538 = vld [vmem:[#allocation7 + $0x10] sm:$0xff]
    %v539 = vld [vmem:[#allocation7 + $0x18] sm:$0xff]
    %v540 = vld [vmem:[#allocation7 + $0x20] sm:$0xff]
    %v541 = vld [vmem:[#allocation7 + $0x28] sm:$0xff]
    %v542 = vld [vmem:[#allocation7 + $0x30] sm:$0xff]
    %v543 = vld [vmem:[#allocation7 + $0x38] sm:$0xff]
    %v544 = vld [vmem:[#allocation7 + $0x40] sm:$0xff]
    %v545 = vld [vmem:[#allocation7 + $0x48] sm:$0xff]
    %v546 = vld [vmem:[#allocation7 + $0x50] sm:$0xff]
    %v547 = vld [vmem:[#allocation7 + $0x58] sm:$0xff]
    %v548 = vld [vmem:[#allocation7 + $0x60] sm:$0xff]
    %v549 = vld [vmem:[#allocation7 + $0x68] sm:$0xff]
    %v550 = vld [vmem:[#allocation7 + $0x70] sm:$0xff]
    %v551 = vld [vmem:[#allocation7 + $0x78] sm:$0xff]
    %v552 = vld [vmem:[#allocation7 + $0x80] sm:$0xff]
    %v553 = vld [vmem:[#allocation7 + $0x88] sm:$0xff]
    %v554 = vld [vmem:[#allocation7 + $0x90] sm:$0xff]
    %v555 = vld [vmem:[#allocation7 + $0x98] sm:$0xff]
    %v556 = vld [vmem:[#allocation7 + $0xa0] sm:$0xff]
    %v557 = vld [vmem:[#allocation7 + $0xa8] sm:$0xff]
    %v558 = vld [vmem:[#allocation7 + $0xb0] sm:$0xff]
    %v559 = vld [vmem:[#allocation7 + $0xb8] sm:$0xff]
    %v560 = vld [vmem:[#allocation7 + $0xc0] sm:$0xff]
    %v561 = vld [vmem:[#allocation7 + $0xc8] sm:$0xff]
    %v562 = vld [vmem:[#allocation7 + $0xd0] sm:$0xff]
    %v563 = vld [vmem:[#allocation7 + $0xd8] sm:$0xff]
    %v564 = vld [vmem:[#allocation7 + $0xe0] sm:$0xff]
    %v565 = vld [vmem:[#allocation7 + $0xe8] sm:$0xff]
    %v566 = vld [vmem:[#allocation7 + $0xf0] sm:$0xff]
    %v567 = vld [vmem:[#allocation7 + $0xf8] sm:$0xff]
    %v568 = vld [vmem:[#allocation7 + $0x100] sm:$0xff]
    %v569 = vld [vmem:[#allocation7 + $0x108] sm:$0xff]
    %v570 = vld [vmem:[#allocation7 + $0x110] sm:$0xff]
    %v571 = vld [vmem:[#allocation7 + $0x118] sm:$0xff]
    %v572 = vld [vmem:[#allocation7 + $0x120] sm:$0xff]
    %v573 = vld [vmem:[#allocation7 + $0x128] sm:$0xff]
    %v574 = vld [vmem:[#allocation7 + $0x130] sm:$0xff]
    %v575 = vld [vmem:[#allocation7 + $0x138] sm:$0xff]
    %v576 = vld [vmem:[#allocation7 + $0x140] sm:$0xff]
    %v577 = vld [vmem:[#allocation7 + $0x148] sm:$0xff]
    %v578 = vld [vmem:[#allocation7 + $0x150] sm:$0xff]
    %v579 = vld [vmem:[#allocation7 + $0x158] sm:$0xff]
    %v580 = vld [vmem:[#allocation7 + $0x160] sm:$0xff]
    %v581 = vld [vmem:[#allocation7 + $0x168] sm:$0xff]
    %v582 = vld [vmem:[#allocation7 + $0x170] sm:$0xff]
    %v583 = vld [vmem:[#allocation7 + $0x178] sm:$0xff]
    %v584 = vld [vmem:[%s8] sm:$0x7]
    %v585 = vld [vmem:[%s9] sm:$0x7]
    %v586 = vld [vmem:[#allocation2] sm:$0xff]
    %v587 = vld [vmem:[#allocation3] sm:$0xff]
    %v589 = vperm.slane %v584, 0
    %v590 = vperm.slane %v584, 1
    %v591 = vperm.slane %v584, 2
    %595 = vmatpush.msra.mxu0 %v533
    %596 = vmatpush.msra.mxu0 %v530
    %597 = vmatpush.msra.mxu0 %v527
    %598 = vmatpush.msra.mxu0 %v524
    %599 = vmatpush.msra.mxu0 %v521
    %600 = vmatpush.msra.mxu0 %v518
    %601 = vmatpush.msra.mxu0 %v515
    %602 = vmatpush.msra.mxu0 %v512
    %603 = vmatpush.msra.mxu0 %v509
    %604 = vmatpush.msra.mxu0 %v506
    %605 = vmatpush.msra.mxu0 %v503
    %606 = vmatpush.msra.mxu0 %v500
    %607 = vmatpush.msra.mxu0 %v497
    %608 = vmatpush.msra.mxu0 %v494
    %609 = vmatpush.msra.mxu0 %v491
    %610 = vmatpush.msra.mxu0 %v488
    %611 = vmatmul.f32.gmra.mxu0 %v586
    %v612 = vpop.f32.mrf.mxu0
    %v613 = vadd.f32 %v589, %v612
    %614 = vdwg.mxu0
    %615 = vmatpush.msra.mxu0 %v534
    %616 = vmatpush.msra.mxu0 %v531
    %617 = vmatpush.msra.mxu0 %v528
    %618 = vmatpush.msra.mxu0 %v525
    %619 = vmatpush.msra.mxu0 %v522
    %620 = vmatpush.msra.mxu0 %v519
    %621 = vmatpush.msra.mxu0 %v516
    %622 = vmatpush.msra.mxu0 %v513
    %623 = vmatpush.msra.mxu0 %v510
    %624 = vmatpush.msra.mxu0 %v507
    %625 = vmatpush.msra.mxu0 %v504
    %626 = vmatpush.msra.mxu0 %v501
    %627 = vmatpush.msra.mxu0 %v498
    %628 = vmatpush.msra.mxu0 %v495
    %629 = vmatpush.msra.mxu0 %v492
    %630 = vmatpush.msra.mxu0 %v489
    %631 = vmatmul.f32.gmra.mxu0 %v586
    %v632 = vpop.f32.mrf.mxu0
    %v633 = vadd.f32 %v590, %v632
    %634 = vdwg.mxu0
    %635 = vmatpush.msra.mxu0 %v535
    %636 = vmatpush.msra.mxu0 %v532
    %637 = vmatpush.msra.mxu0 %v529
    %638 = vmatpush.msra.mxu0 %v526
    %639 = vmatpush.msra.mxu0 %v523
    %640 = vmatpush.msra.mxu0 %v520
    %641 = vmatpush.msra.mxu0 %v517
    %642 = vmatpush.msra.mxu0 %v514
    %643 = vmatpush.msra.mxu0 %v511
    %644 = vmatpush.msra.mxu0 %v508
    %645 = vmatpush.msra.mxu0 %v505
    %646 = vmatpush.msra.mxu0 %v502
    %647 = vmatpush.msra.mxu0 %v499
    %648 = vmatpush.msra.mxu0 %v496
    %649 = vmatpush.msra.mxu0 %v493
    %650 = vmatpush.msra.mxu0 %v490
    %651 = vmatmul.f32.gmra.mxu0 %v586
    %v652 = vpop.f32.mrf.mxu0
    %v653 = vadd.f32 %v591, %v652
    %654 = vdwg.mxu0
    %v655 = vadd.f32 %v272, %v613
    %v656 = vxor.u32 %v655, 2147483648
    %v657 = vmul.f32 %v656, 1.442695
    %v658 = vpow.pop %v657
    %v659 = vadd.f32 %v658, 1.0
    %v660 = vrcp.pop %v659
    %v661 = vmul.f32 %v659, %v660
    %v662 = vsub.f32 1.0, %v661
    %v663 = vmul.f32 %v660, %v662
    %v664 = vadd.f32 %v660, %v663
    %vm665 = vweird.f32 %v659
    %vm666 = vweird.f32 %v660
    %vm667 = vmor %vm665, %vm666
    %v668 = vsel %vm667, %v660, %v664
    %v669 = vand.u32 2147483647, %v659
    %vm670 = vcmp.eq.f32.partialorder %v669, 8.507059e+37
    %v671 = vand.u32 %v659, 2147483648
    %v672 = vor.u32 1.1754944e-38, %v671
    %v673 = vsel %vm670, %v672, %v668
    %v674 = vmul.f32 1.0, %v673
    %v675 = vadd.f32 %v273, %v633
    %v676 = vxor.u32 %v675, 2147483648
    %v677 = vmul.f32 %v676, 1.442695
    %v678 = vpow.pop %v677
    %v679 = vadd.f32 %v678, 1.0
    %v680 = vrcp.pop %v679
    %v681 = vmul.f32 %v679, %v680
    %v682 = vsub.f32 1.0, %v681
    %v683 = vmul.f32 %v680, %v682
    %v684 = vadd.f32 %v680, %v683
    %vm685 = vweird.f32 %v679
    %vm686 = vweird.f32 %v680
    %vm687 = vmor %vm685, %vm686
    %v688 = vsel %vm687, %v680, %v684
    %v689 = vand.u32 2147483647, %v679
    %vm690 = vcmp.eq.f32.partialorder %v689, 8.507059e+37
    %v691 = vand.u32 %v679, 2147483648
    %v692 = vor.u32 1.1754944e-38, %v691
    %v693 = vsel %vm690, %v692, %v688
    %v694 = vmul.f32 1.0, %v693
    %v695 = vmul.f32 %v674, %v653
    %v696 = vadd.f32 %v274, %v695
    %v697 = vtanh.pop %v696
    %v698 = vsub.f32 1.0, %v694
    %v699 = vmul.f32 %v698, %v697
    %v700 = vmul.f32 %v694, %v586
    %v701 = vadd.f32 %v699, %v700
    %v703 = vperm.slane %v585, 0
    %v704 = vperm.slane %v585, 1
    %v705 = vperm.slane %v585, 2
    %709 = vmatpush.msra.mxu0 %v581
    %710 = vmatpush.msra.mxu0 %v578
    %711 = vmatpush.msra.mxu0 %v575
    %712 = vmatpush.msra.mxu0 %v572
    %713 = vmatpush.msra.mxu0 %v569
    %714 = vmatpush.msra.mxu0 %v566
    %715 = vmatpush.msra.mxu0 %v563
    %716 = vmatpush.msra.mxu0 %v560
    %717 = vmatpush.msra.mxu0 %v557
    %718 = vmatpush.msra.mxu0 %v554
    %719 = vmatpush.msra.mxu0 %v551
    %720 = vmatpush.msra.mxu0 %v548
    %721 = vmatpush.msra.mxu0 %v545
    %722 = vmatpush.msra.mxu0 %v542
    %723 = vmatpush.msra.mxu0 %v539
    %724 = vmatpush.msra.mxu0 %v536
    %725 = vmatmul.f32.gmra.mxu0 %v587
    %v726 = vpop.f32.mrf.mxu0
    %v727 = vadd.f32 %v703, %v726
    %728 = vdwg.mxu0
    %729 = vmatpush.msra.mxu0 %v582
    %730 = vmatpush.msra.mxu0 %v579
    %731 = vmatpush.msra.mxu0 %v576
    %732 = vmatpush.msra.mxu0 %v573
    %733 = vmatpush.msra.mxu0 %v570
    %734 = vmatpush.msra.mxu0 %v567
    %735 = vmatpush.msra.mxu0 %v564
    %736 = vmatpush.msra.mxu0 %v561
    %737 = vmatpush.msra.mxu0 %v558
    %738 = vmatpush.msra.mxu0 %v555
    %739 = vmatpush.msra.mxu0 %v552
    %740 = vmatpush.msra.mxu0 %v549
    %741 = vmatpush.msra.mxu0 %v546
    %742 = vmatpush.msra.mxu0 %v543
    %743 = vmatpush.msra.mxu0 %v540
    %744 = vmatpush.msra.mxu0 %v537
    %745 = vmatmul.f32.gmra.mxu0 %v587
    %v746 = vpop.f32.mrf.mxu0
    %v747 = vadd.f32 %v704, %v746
    %748 = vdwg.mxu0
    %749 = vmatpush.msra.mxu0 %v583
    %750 = vmatpush.msra.mxu0 %v580
    %751 = vmatpush.msra.mxu0 %v577
    %752 = vmatpush.msra.mxu0 %v574
    %753 = vmatpush.msra.mxu0 %v571
    %754 = vmatpush.msra.mxu0 %v568
    %755 = vmatpush.msra.mxu0 %v565
    %756 = vmatpush.msra.mxu0 %v562
    %757 = vmatpush.msra.mxu0 %v559
    %758 = vmatpush.msra.mxu0 %v556
    %759 = vmatpush.msra.mxu0 %v553
    %760 = vmatpush.msra.mxu0 %v550
    %761 = vmatpush.msra.mxu0 %v547
    %762 = vmatpush.msra.mxu0 %v544
    %763 = vmatpush.msra.mxu0 %v541
    %764 = vmatpush.msra.mxu0 %v538
    %765 = vmatmul.f32.gmra.mxu0 %v587
    %v766 = vpop.f32.mrf.mxu0
    %v767 = vadd.f32 %v705, %v766
    %768 = vdwg.mxu0
    %v769 = vadd.f32 %v485, %v727
    %v770 = vxor.u32 %v769, 2147483648
    %v771 = vmul.f32 %v770, 1.442695
    %v772 = vpow.pop %v771
    %v773 = vadd.f32 %v772, 1.0
    %v774 = vrcp.pop %v773
    %v775 = vmul.f32 %v773, %v774
    %v776 = vsub.f32 1.0, %v775
    %v777 = vmul.f32 %v774, %v776
    %v778 = vadd.f32 %v774, %v777
    %vm779 = vweird.f32 %v773
    %vm780 = vweird.f32 %v774
    %vm781 = vmor %vm779, %vm780
    %v782 = vsel %vm781, %v774, %v778
    %v783 = vand.u32 2147483647, %v773
    %vm784 = vcmp.eq.f32.partialorder %v783, 8.507059e+37
    %v785 = vand.u32 %v773, 2147483648
    %v786 = vor.u32 1.1754944e-38, %v785
    %v787 = vsel %vm784, %v786, %v782
    %v788 = vmul.f32 1.0, %v787
    %v789 = vadd.f32 %v486, %v747
    %v790 = vxor.u32 %v789, 2147483648
    %v791 = vmul.f32 %v790, 1.442695
    %v792 = vpow.pop %v791
    %v793 = vadd.f32 %v792, 1.0
    %v794 = vrcp.pop %v793
    %v795 = vmul.f32 %v793, %v794
    %v796 = vsub.f32 1.0, %v795
    %v797 = vmul.f32 %v794, %v796
    %v798 = vadd.f32 %v794, %v797
    %vm799 = vweird.f32 %v793
    %vm800 = vweird.f32 %v794
    %vm801 = vmor %vm799, %vm800
    %v802 = vsel %vm801, %v794, %v798
    %v803 = vand.u32 2147483647, %v793
    %vm804 = vcmp.eq.f32.partialorder %v803, 8.507059e+37
    %v805 = vand.u32 %v793, 2147483648
    %v806 = vor.u32 1.1754944e-38, %v805
    %v807 = vsel %vm804, %v806, %v802
    %v808 = vmul.f32 1.0, %v807
    %v809 = vmul.f32 %v788, %v767
    %v810 = vadd.f32 %v487, %v809
    %v811 = vtanh.pop %v810
    %v812 = vsub.f32 1.0, %v808
    %v813 = vmul.f32 %v812, %v811
    %v814 = vmul.f32 %v808, %v587
    %v815 = vadd.f32 %v813, %v814
    %816 = vst [vmem:[#allocation9] sm:$0xff] %v701
    %817 = vst [vmem:[#allocation10 + $0x38] sm:$0xff] %v815
    %818 = vmatpush.msra.mxu0 %v533
    %819 = vmatpush.msra.mxu0 %v530
    %820 = vmatpush.msra.mxu0 %v527
    %821 = vmatpush.msra.mxu0 %v524
    %822 = vmatpush.msra.mxu0 %v521
    %823 = vmatpush.msra.mxu0 %v518
    %824 = vmatpush.msra.mxu0 %v515
    %825 = vmatpush.msra.mxu0 %v512
    %826 = vmatpush.msra.mxu0 %v509
    %827 = vmatpush.msra.mxu0 %v506
    %828 = vmatpush.msra.mxu0 %v503
    %829 = vmatpush.msra.mxu0 %v500
    %830 = vmatpush.msra.mxu0 %v497
    %831 = vmatpush.msra.mxu0 %v494
    %832 = vmatpush.msra.mxu0 %v491
    %833 = vmatpush.msra.mxu0 %v488
    %834 = vmatmul.f32.gmra.mxu0 %v701
    %v835 = vpop.f32.mrf.mxu0
    %v836 = vadd.f32 %v589, %v835
    %837 = vdwg.mxu0
    %838 = vmatpush.msra.mxu0 %v534
    %839 = vmatpush.msra.mxu0 %v531
    %840 = vmatpush.msra.mxu0 %v528
    %841 = vmatpush.msra.mxu0 %v525
    %842 = vmatpush.msra.mxu0 %v522
    %843 = vmatpush.msra.mxu0 %v519
    %844 = vmatpush.msra.mxu0 %v516
    %845 = vmatpush.msra.mxu0 %v513
    %846 = vmatpush.msra.mxu0 %v510
    %847 = vmatpush.msra.mxu0 %v507
    %848 = vmatpush.msra.mxu0 %v504
    %849 = vmatpush.msra.mxu0 %v501
    %850 = vmatpush.msra.mxu0 %v498
    %851 = vmatpush.msra.mxu0 %v495
    %852 = vmatpush.msra.mxu0 %v492
    %853 = vmatpush.msra.mxu0 %v489
    %854 = vmatmul.f32.gmra.mxu0 %v701
    %v855 = vpop.f32.mrf.mxu0
    %v856 = vadd.f32 %v590, %v855
    %857 = vdwg.mxu0
    %858 = vmatpush.msra.mxu0 %v535
    %859 = vmatpush.msra.mxu0 %v532
    %860 = vmatpush.msra.mxu0 %v529
    %861 = vmatpush.msra.mxu0 %v526
    %862 = vmatpush.msra.mxu0 %v523
    %863 = vmatpush.msra.mxu0 %v520
    %864 = vmatpush.msra.mxu0 %v517
    %865 = vmatpush.msra.mxu0 %v514
    %866 = vmatpush.msra.mxu0 %v511
    %867 = vmatpush.msra.mxu0 %v508
    %868 = vmatpush.msra.mxu0 %v505
    %869 = vmatpush.msra.mxu0 %v502
    %870 = vmatpush.msra.mxu0 %v499
    %871 = vmatpush.msra.mxu0 %v496
    %872 = vmatpush.msra.mxu0 %v493
    %873 = vmatpush.msra.mxu0 %v490
    %874 = vmatmul.f32.gmra.mxu0 %v701
    %v875 = vpop.f32.mrf.mxu0
    %v876 = vadd.f32 %v591, %v875
    %877 = vdwg.mxu0
    %v878 = vadd.f32 %v275, %v836
    %v879 = vxor.u32 %v878, 2147483648
    %v880 = vmul.f32 %v879, 1.442695
    %v881 = vpow.pop %v880
    %v882 = vadd.f32 %v881, 1.0
    %v883 = vrcp.pop %v882
    %v884 = vmul.f32 %v882, %v883
    %v885 = vsub.f32 1.0, %v884
    %v886 = vmul.f32 %v883, %v885
    %v887 = vadd.f32 %v883, %v886
    %vm888 = vweird.f32 %v882
    %vm889 = vweird.f32 %v883
    %vm890 = vmor %vm888, %vm889
    %v891 = vsel %vm890, %v883, %v887
    %v892 = vand.u32 2147483647, %v882
    %vm893 = vcmp.eq.f32.partialorder %v892, 8.507059e+37
    %v894 = vand.u32 %v882, 2147483648
    %v895 = vor.u32 1.1754944e-38, %v894
    %v896 = vsel %vm893, %v895, %v891
    %v897 = vmul.f32 1.0, %v896
    %v898 = vadd.f32 %v276, %v856
    %v899 = vxor.u32 %v898, 2147483648
    %v900 = vmul.f32 %v899, 1.442695
    %v901 = vpow.pop %v900
    %v902 = vadd.f32 %v901, 1.0
    %v903 = vrcp.pop %v902
    %v904 = vmul.f32 %v902, %v903
    %v905 = vsub.f32 1.0, %v904
    %v906 = vmul.f32 %v903, %v905
    %v907 = vadd.f32 %v903, %v906
    %vm908 = vweird.f32 %v902
    %vm909 = vweird.f32 %v903
    %vm910 = vmor %vm908, %vm909
    %v911 = vsel %vm910, %v903, %v907
    %v912 = vand.u32 2147483647, %v902
    %vm913 = vcmp.eq.f32.partialorder %v912, 8.507059e+37
    %v914 = vand.u32 %v902, 2147483648
    %v915 = vor.u32 1.1754944e-38, %v914
    %v916 = vsel %vm913, %v915, %v911
    %v917 = vmul.f32 1.0, %v916
    %v918 = vmul.f32 %v897, %v876
    %v919 = vadd.f32 %v277, %v918
    %v920 = vtanh.pop %v919
    %v921 = vsub.f32 1.0, %v917
    %v922 = vmul.f32 %v921, %v920
    %v923 = vmul.f32 %v917, %v701
    %v924 = vadd.f32 %v922, %v923
    %925 = vmatpush.msra.mxu0 %v581
    %926 = vmatpush.msra.mxu0 %v578
    %927 = vmatpush.msra.mxu0 %v575
    %928 = vmatpush.msra.mxu0 %v572
    %929 = vmatpush.msra.mxu0 %v569
    %930 = vmatpush.msra.mxu0 %v566
    %931 = vmatpush.msra.mxu0 %v563
    %932 = vmatpush.msra.mxu0 %v560
    %933 = vmatpush.msra.mxu0 %v557
    %934 = vmatpush.msra.mxu0 %v554
    %935 = vmatpush.msra.mxu0 %v551
    %936 = vmatpush.msra.mxu0 %v548
    %937 = vmatpush.msra.mxu0 %v545
    %938 = vmatpush.msra.mxu0 %v542
    %939 = vmatpush.msra.mxu0 %v539
    %940 = vmatpush.msra.mxu0 %v536
    %941 = vmatmul.f32.gmra.mxu0 %v815
    %v942 = vpop.f32.mrf.mxu0
    %v943 = vadd.f32 %v703, %v942
    %944 = vdwg.mxu0
    %945 = vmatpush.msra.mxu0 %v582
    %946 = vmatpush.msra.mxu0 %v579
    %947 = vmatpush.msra.mxu0 %v576
    %948 = vmatpush.msra.mxu0 %v573
    %949 = vmatpush.msra.mxu0 %v570
    %950 = vmatpush.msra.mxu0 %v567
    %951 = vmatpush.msra.mxu0 %v564
    %952 = vmatpush.msra.mxu0 %v561
    %953 = vmatpush.msra.mxu0 %v558
    %954 = vmatpush.msra.mxu0 %v555
    %955 = vmatpush.msra.mxu0 %v552
    %956 = vmatpush.msra.mxu0 %v549
    %957 = vmatpush.msra.mxu0 %v546
    %958 = vmatpush.msra.mxu0 %v543
    %959 = vmatpush.msra.mxu0 %v540
    %960 = vmatpush.msra.mxu0 %v537
    %961 = vmatmul.f32.gmra.mxu0 %v815
    %v962 = vpop.f32.mrf.mxu0
    %v963 = vadd.f32 %v704, %v962
    %964 = vdwg.mxu0
    %965 = vmatpush.msra.mxu0 %v583
    %966 = vmatpush.msra.mxu0 %v580
    %967 = vmatpush.msra.mxu0 %v577
    %968 = vmatpush.msra.mxu0 %v574
    %969 = vmatpush.msra.mxu0 %v571
    %970 = vmatpush.msra.mxu0 %v568
    %971 = vmatpush.msra.mxu0 %v565
    %972 = vmatpush.msra.mxu0 %v562
    %973 = vmatpush.msra.mxu0 %v559
    %974 = vmatpush.msra.mxu0 %v556
    %975 = vmatpush.msra.mxu0 %v553
    %976 = vmatpush.msra.mxu0 %v550
    %977 = vmatpush.msra.mxu0 %v547
    %978 = vmatpush.msra.mxu0 %v544
    %979 = vmatpush.msra.mxu0 %v541
    %980 = vmatpush.msra.mxu0 %v538
    %981 = vmatmul.f32.gmra.mxu0 %v815
    %v982 = vpop.f32.mrf.mxu0
    %v983 = vadd.f32 %v705, %v982
    %984 = vdwg.mxu0
    %v985 = vadd.f32 %v482, %v943
    %v986 = vxor.u32 %v985, 2147483648
    %v987 = vmul.f32 %v986, 1.442695
    %v988 = vpow.pop %v987
    %v989 = vadd.f32 %v988, 1.0
    %v990 = vrcp.pop %v989
    %v991 = vmul.f32 %v989, %v990
    %v992 = vsub.f32 1.0, %v991
    %v993 = vmul.f32 %v990, %v992
    %v994 = vadd.f32 %v990, %v993
    %vm995 = vweird.f32 %v989
    %vm996 = vweird.f32 %v990
    %vm997 = vmor %vm995, %vm996
    %v998 = vsel %vm997, %v990, %v994
    %v999 = vand.u32 2147483647, %v989
    %vm1000 = vcmp.eq.f32.partialorder %v999, 8.507059e+37
    %v1001 = vand.u32 %v989, 2147483648
    %v1002 = vor.u32 1.1754944e-38, %v1001
    %v1003 = vsel %vm1000, %v1002, %v998
    %v1004 = vmul.f32 1.0, %v1003
    %v1005 = vadd.f32 %v483, %v963
    %v1006 = vxor.u32 %v1005, 2147483648
    %v1007 = vmul.f32 %v1006, 1.442695
    %v1008 = vpow.pop %v1007
    %v1009 = vadd.f32 %v1008, 1.0
    %v1010 = vrcp.pop %v1009
    %v1011 = vmul.f32 %v1009, %v1010
    %v1012 = vsub.f32 1.0, %v1011
    %v1013 = vmul.f32 %v1010, %v1012
    %v1014 = vadd.f32 %v1010, %v1013
    %vm1015 = vweird.f32 %v1009
    %vm1016 = vweird.f32 %v1010
    %vm1017 = vmor %vm1015, %vm1016
    %v1018 = vsel %vm1017, %v1010, %v1014
    %v1019 = vand.u32 2147483647, %v1009
    %vm1020 = vcmp.eq.f32.partialorder %v1019, 8.507059e+37
    %v1021 = vand.u32 %v1009, 2147483648
    %v1022 = vor.u32 1.1754944e-38, %v1021
    %v1023 = vsel %vm1020, %v1022, %v1018
    %v1024 = vmul.f32 1.0, %v1023
    %v1025 = vmul.f32 %v1004, %v983
    %v1026 = vadd.f32 %v484, %v1025
    %v1027 = vtanh.pop %v1026
    %v1028 = vsub.f32 1.0, %v1024
    %v1029 = vmul.f32 %v1028, %v1027
    %v1030 = vmul.f32 %v1024, %v815
    %v1031 = vadd.f32 %v1029, %v1030
    %1032 = vst [vmem:[#allocation9 + $0x8] sm:$0xff] %v924
    %1033 = vst [vmem:[#allocation10 + $0x30] sm:$0xff] %v1031
    %1034 = vmatpush.msra.mxu0 %v533
    %1035 = vmatpush.msra.mxu0 %v530
    %1036 = vmatpush.msra.mxu0 %v527
    %1037 = vmatpush.msra.mxu0 %v524
    %1038 = vmatpush.msra.mxu0 %v521
    %1039 = vmatpush.msra.mxu0 %v518
    %1040 = vmatpush.msra.mxu0 %v515
    %1041 = vmatpush.msra.mxu0 %v512
    %1042 = vmatpush.msra.mxu0 %v509
    %1043 = vmatpush.msra.mxu0 %v506
    %1044 = vmatpush.msra.mxu0 %v503
    %1045 = vmatpush.msra.mxu0 %v500
    %1046 = vmatpush.msra.mxu0 %v497
    %1047 = vmatpush.msra.mxu0 %v494
    %1048 = vmatpush.msra.mxu0 %v491
    %1049 = vmatpush.msra.mxu0 %v488
    %1050 = vmatmul.f32.gmra.mxu0 %v924
    %v1051 = vpop.f32.mrf.mxu0
    %v1052 = vadd.f32 %v589, %v1051
    %1053 = vdwg.mxu0
    %1054 = vmatpush.msra.mxu0 %v534
    %1055 = vmatpush.msra.mxu0 %v531
    %1056 = vmatpush.msra.mxu0 %v528
    %1057 = vmatpush.msra.mxu0 %v525
    %1058 = vmatpush.msra.mxu0 %v522
    %1059 = vmatpush.msra.mxu0 %v519
    %1060 = vmatpush.msra.mxu0 %v516
    %1061 = vmatpush.msra.mxu0 %v513
    %1062 = vmatpush.msra.mxu0 %v510
    %1063 = vmatpush.msra.mxu0 %v507
    %1064 = vmatpush.msra.mxu0 %v504
    %1065 = vmatpush.msra.mxu0 %v501
    %1066 = vmatpush.msra.mxu0 %v498
    %1067 = vmatpush.msra.mxu0 %v495
    %1068 = vmatpush.msra.mxu0 %v492
    %1069 = vmatpush.msra.mxu0 %v489
    %1070 = vmatmul.f32.gmra.mxu0 %v924
    %v1071 = vpop.f32.mrf.mxu0
    %v1072 = vadd.f32 %v590, %v1071
    %1073 = vdwg.mxu0
    %1074 = vmatpush.msra.mxu0 %v535
    %1075 = vmatpush.msra.mxu0 %v532
    %1076 = vmatpush.msra.mxu0 %v529
    %1077 = vmatpush.msra.mxu0 %v526
    %1078 = vmatpush.msra.mxu0 %v523
    %1079 = vmatpush.msra.mxu0 %v520
    %1080 = vmatpush.msra.mxu0 %v517
    %1081 = vmatpush.msra.mxu0 %v514
    %1082 = vmatpush.msra.mxu0 %v511
    %1083 = vmatpush.msra.mxu0 %v508
    %1084 = vmatpush.msra.mxu0 %v505
    %1085 = vmatpush.msra.mxu0 %v502
    %1086 = vmatpush.msra.mxu0 %v499
    %1087 = vmatpush.msra.mxu0 %v496
    %1088 = vmatpush.msra.mxu0 %v493
    %1089 = vmatpush.msra.mxu0 %v490
    %1090 = vmatmul.f32.gmra.mxu0 %v924
    %v1091 = vpop.f32.mrf.mxu0
    %v1092 = vadd.f32 %v591, %v1091
    %1093 = vdwg.mxu0
    %v1094 = vadd.f32 %v278, %v1052
    %v1095 = vxor.u32 %v1094, 2147483648
    %v1096 = vmul.f32 %v1095, 1.442695
    %v1097 = vpow.pop %v1096
    %v1098 = vadd.f32 %v1097, 1.0
    %v1099 = vrcp.pop %v1098
    %v1100 = vmul.f32 %v1098, %v1099
    %v1101 = vsub.f32 1.0, %v1100
    %v1102 = vmul.f32 %v1099, %v1101
    %v1103 = vadd.f32 %v1099, %v1102
    %vm1104 = vweird.f32 %v1098
    %vm1105 = vweird.f32 %v1099
    %vm1106 = vmor %vm1104, %vm1105
    %v1107 = vsel %vm1106, %v1099, %v1103
    %v1108 = vand.u32 2147483647, %v1098
    %vm1109 = vcmp.eq.f32.partialorder %v1108, 8.507059e+37
    %v1110 = vand.u32 %v1098, 2147483648
    %v1111 = vor.u32 1.1754944e-38, %v1110
    %v1112 = vsel %vm1109, %v1111, %v1107
    %v1113 = vmul.f32 1.0, %v1112
    %v1114 = vadd.f32 %v279, %v1072
    %v1115 = vxor.u32 %v1114, 2147483648
    %v1116 = vmul.f32 %v1115, 1.442695
    %v1117 = vpow.pop %v1116
    %v1118 = vadd.f32 %v1117, 1.0
    %v1119 = vrcp.pop %v1118
    %v1120 = vmul.f32 %v1118, %v1119
    %v1121 = vsub.f32 1.0, %v1120
    %v1122 = vmul.f32 %v1119, %v1121
    %v1123 = vadd.f32 %v1119, %v1122
    %vm1124 = vweird.f32 %v1118
    %vm1125 = vweird.f32 %v1119
    %vm1126 = vmor %vm1124, %vm1125
    %v1127 = vsel %vm1126, %v1119, %v1123
    %v1128 = vand.u32 2147483647, %v1118
    %vm1129 = vcmp.eq.f32.partialorder %v1128, 8.507059e+37
    %v1130 = vand.u32 %v1118, 2147483648
    %v1131 = vor.u32 1.1754944e-38, %v1130
    %v1132 = vsel %vm1129, %v1131, %v1127
    %v1133 = vmul.f32 1.0, %v1132
    %v1134 = vmul.f32 %v1113, %v1092
    %v1135 = vadd.f32 %v280, %v1134
    %v1136 = vtanh.pop %v1135
    %v1137 = vsub.f32 1.0, %v1133
    %v1138 = vmul.f32 %v1137, %v1136
    %v1139 = vmul.f32 %v1133, %v924
    %v1140 = vadd.f32 %v1138, %v1139
    %1141 = vmatpush.msra.mxu0 %v581
    %1142 = vmatpush.msra.mxu0 %v578
    %1143 = vmatpush.msra.mxu0 %v575
    %1144 = vmatpush.msra.mxu0 %v572
    %1145 = vmatpush.msra.mxu0 %v569
    %1146 = vmatpush.msra.mxu0 %v566
    %1147 = vmatpush.msra.mxu0 %v563
    %1148 = vmatpush.msra.mxu0 %v560
    %1149 = vmatpush.msra.mxu0 %v557
    %1150 = vmatpush.msra.mxu0 %v554
    %1151 = vmatpush.msra.mxu0 %v551
    %1152 = vmatpush.msra.mxu0 %v548
    %1153 = vmatpush.msra.mxu0 %v545
    %1154 = vmatpush.msra.mxu0 %v542
    %1155 = vmatpush.msra.mxu0 %v539
    %1156 = vmatpush.msra.mxu0 %v536
    %1157 = vmatmul.f32.gmra.mxu0 %v1031
    %v1158 = vpop.f32.mrf.mxu0
    %v1159 = vadd.f32 %v703, %v1158
    %1160 = vdwg.mxu0
    %1161 = vmatpush.msra.mxu0 %v582
    %1162 = vmatpush.msra.mxu0 %v579
    %1163 = vmatpush.msra.mxu0 %v576
    %1164 = vmatpush.msra.mxu0 %v573
    %1165 = vmatpush.msra.mxu0 %v570
    %1166 = vmatpush.msra.mxu0 %v567
    %1167 = vmatpush.msra.mxu0 %v564
    %1168 = vmatpush.msra.mxu0 %v561
    %1169 = vmatpush.msra.mxu0 %v558
    %1170 = vmatpush.msra.mxu0 %v555
    %1171 = vmatpush.msra.mxu0 %v552
    %1172 = vmatpush.msra.mxu0 %v549
    %1173 = vmatpush.msra.mxu0 %v546
    %1174 = vmatpush.msra.mxu0 %v543
    %1175 = vmatpush.msra.mxu0 %v540
    %1176 = vmatpush.msra.mxu0 %v537
    %1177 = vmatmul.f32.gmra.mxu0 %v1031
    %v1178 = vpop.f32.mrf.mxu0
    %v1179 = vadd.f32 %v704, %v1178
    %1180 = vdwg.mxu0
    %1181 = vmatpush.msra.mxu0 %v583
    %1182 = vmatpush.msra.mxu0 %v580
    %1183 = vmatpush.msra.mxu0 %v577
    %1184 = vmatpush.msra.mxu0 %v574
    %1185 = vmatpush.msra.mxu0 %v571
    %1186 = vmatpush.msra.mxu0 %v568
    %1187 = vmatpush.msra.mxu0 %v565
    %1188 = vmatpush.msra.mxu0 %v562
    %1189 = vmatpush.msra.mxu0 %v559
    %1190 = vmatpush.msra.mxu0 %v556
    %1191 = vmatpush.msra.mxu0 %v553
    %1192 = vmatpush.msra.mxu0 %v550
    %1193 = vmatpush.msra.mxu0 %v547
    %1194 = vmatpush.msra.mxu0 %v544
    %1195 = vmatpush.msra.mxu0 %v541
    %1196 = vmatpush.msra.mxu0 %v538
    %1197 = vmatmul.f32.gmra.mxu0 %v1031
    %v1198 = vpop.f32.mrf.mxu0
    %v1199 = vadd.f32 %v705, %v1198
    %1200 = vdwg.mxu0
    %v1201 = vadd.f32 %v479, %v1159
    %v1202 = vxor.u32 %v1201, 2147483648
    %v1203 = vmul.f32 %v1202, 1.442695
    %v1204 = vpow.pop %v1203
    %v1205 = vadd.f32 %v1204, 1.0
    %v1206 = vrcp.pop %v1205
    %v1207 = vmul.f32 %v1205, %v1206
    %v1208 = vsub.f32 1.0, %v1207
    %v1209 = vmul.f32 %v1206, %v1208
    %v1210 = vadd.f32 %v1206, %v1209
    %vm1211 = vweird.f32 %v1205
    %vm1212 = vweird.f32 %v1206
    %vm1213 = vmor %vm1211, %vm1212
    %v1214 = vsel %vm1213, %v1206, %v1210
    %v1215 = vand.u32 2147483647, %v1205
    %vm1216 = vcmp.eq.f32.partialorder %v1215, 8.507059e+37
    %v1217 = vand.u32 %v1205, 2147483648
    %v1218 = vor.u32 1.1754944e-38, %v1217
    %v1219 = vsel %vm1216, %v1218, %v1214
    %v1220 = vmul.f32 1.0, %v1219
    %v1221 = vadd.f32 %v480, %v1179
    %v1222 = vxor.u32 %v1221, 2147483648
    %v1223 = vmul.f32 %v1222, 1.442695
    %v1224 = vpow.pop %v1223
    %v1225 = vadd.f32 %v1224, 1.0
    %v1226 = vrcp.pop %v1225
    %v1227 = vmul.f32 %v1225, %v1226
    %v1228 = vsub.f32 1.0, %v1227
    %v1229 = vmul.f32 %v1226, %v1228
    %v1230 = vadd.f32 %v1226, %v1229
    %vm1231 = vweird.f32 %v1225
    %vm1232 = vweird.f32 %v1226
    %vm1233 = vmor %vm1231, %vm1232
    %v1234 = vsel %vm1233, %v1226, %v1230
    %v1235 = vand.u32 2147483647, %v1225
    %vm1236 = vcmp.eq.f32.partialorder %v1235, 8.507059e+37
    %v1237 = vand.u32 %v1225, 2147483648
    %v1238 = vor.u32 1.1754944e-38, %v1237
    %v1239 = vsel %vm1236, %v1238, %v1234
    %v1240 = vmul.f32 1.0, %v1239
    %v1241 = vmul.f32 %v1220, %v1199
    %v1242 = vadd.f32 %v481, %v1241
    %v1243 = vtanh.pop %v1242
    %v1244 = vsub.f32 1.0, %v1240
    %v1245 = vmul.f32 %v1244, %v1243
    %v1246 = vmul.f32 %v1240, %v1031
    %v1247 = vadd.f32 %v1245, %v1246
    %1248 = vst [vmem:[#allocation9 + $0x10] sm:$0xff] %v1140
    %1249 = vst [vmem:[#allocation10 + $0x28] sm:$0xff] %v1247
    %1250 = vmatpush.msra.mxu0 %v533
    %1251 = vmatpush.msra.mxu0 %v530
    %1252 = vmatpush.msra.mxu0 %v527
    %1253 = vmatpush.msra.mxu0 %v524
    %1254 = vmatpush.msra.mxu0 %v521
    %1255 = vmatpush.msra.mxu0 %v518
    %1256 = vmatpush.msra.mxu0 %v515
    %1257 = vmatpush.msra.mxu0 %v512
    %1258 = vmatpush.msra.mxu0 %v509
    %1259 = vmatpush.msra.mxu0 %v506
    %1260 = vmatpush.msra.mxu0 %v503
    %1261 = vmatpush.msra.mxu0 %v500
    %1262 = vmatpush.msra.mxu0 %v497
    %1263 = vmatpush.msra.mxu0 %v494
    %1264 = vmatpush.msra.mxu0 %v491
    %1265 = vmatpush.msra.mxu0 %v488
    %1266 = vmatmul.f32.gmra.mxu0 %v1140
    %v1267 = vpop.f32.mrf.mxu0
    %v1268 = vadd.f32 %v589, %v1267
    %1269 = vdwg.mxu0
    %1270 = vmatpush.msra.mxu0 %v534
    %1271 = vmatpush.msra.mxu0 %v531
    %1272 = vmatpush.msra.mxu0 %v528
    %1273 = vmatpush.msra.mxu0 %v525
    %1274 = vmatpush.msra.mxu0 %v522
    %1275 = vmatpush.msra.mxu0 %v519
    %1276 = vmatpush.msra.mxu0 %v516
    %1277 = vmatpush.msra.mxu0 %v513
    %1278 = vmatpush.msra.mxu0 %v510
    %1279 = vmatpush.msra.mxu0 %v507
    %1280 = vmatpush.msra.mxu0 %v504
    %1281 = vmatpush.msra.mxu0 %v501
    %1282 = vmatpush.msra.mxu0 %v498
    %1283 = vmatpush.msra.mxu0 %v495
    %1284 = vmatpush.msra.mxu0 %v492
    %1285 = vmatpush.msra.mxu0 %v489
    %1286 = vmatmul.f32.gmra.mxu0 %v1140
    %v1287 = vpop.f32.mrf.mxu0
    %v1288 = vadd.f32 %v590, %v1287
    %1289 = vdwg.mxu0
    %1290 = vmatpush.msra.mxu0 %v535
    %1291 = vmatpush.msra.mxu0 %v532
    %1292 = vmatpush.msra.mxu0 %v529
    %1293 = vmatpush.msra.mxu0 %v526
    %1294 = vmatpush.msra.mxu0 %v523
    %1295 = vmatpush.msra.mxu0 %v520
    %1296 = vmatpush.msra.mxu0 %v517
    %1297 = vmatpush.msra.mxu0 %v514
    %1298 = vmatpush.msra.mxu0 %v511
    %1299 = vmatpush.msra.mxu0 %v508
    %1300 = vmatpush.msra.mxu0 %v505
    %1301 = vmatpush.msra.mxu0 %v502
    %1302 = vmatpush.msra.mxu0 %v499
    %1303 = vmatpush.msra.mxu0 %v496
    %1304 = vmatpush.msra.mxu0 %v493
    %1305 = vmatpush.msra.mxu0 %v490
    %1306 = vmatmul.f32.gmra.mxu0 %v1140
    %v1307 = vpop.f32.mrf.mxu0
    %v1308 = vadd.f32 %v591, %v1307
    %1309 = vdwg.mxu0
    %v1310 = vadd.f32 %v281, %v1268
    %v1311 = vxor.u32 %v1310, 2147483648
    %v1312 = vmul.f32 %v1311, 1.442695
    %v1313 = vpow.pop %v1312
    %v1314 = vadd.f32 %v1313, 1.0
    %v1315 = vrcp.pop %v1314
    %v1316 = vmul.f32 %v1314, %v1315
    %v1317 = vsub.f32 1.0, %v1316
    %v1318 = vmul.f32 %v1315, %v1317
    %v1319 = vadd.f32 %v1315, %v1318
    %vm1320 = vweird.f32 %v1314
    %vm1321 = vweird.f32 %v1315
    %vm1322 = vmor %vm1320, %vm1321
    %v1323 = vsel %vm1322, %v1315, %v1319
    %v1324 = vand.u32 2147483647, %v1314
    %vm1325 = vcmp.eq.f32.partialorder %v1324, 8.507059e+37
    %v1326 = vand.u32 %v1314, 2147483648
    %v1327 = vor.u32 1.1754944e-38, %v1326
    %v1328 = vsel %vm1325, %v1327, %v1323
    %v1329 = vmul.f32 1.0, %v1328
    %v1330 = vadd.f32 %v282, %v1288
    %v1331 = vxor.u32 %v1330, 2147483648
    %v1332 = vmul.f32 %v1331, 1.442695
    %v1333 = vpow.pop %v1332
    %v1334 = vadd.f32 %v1333, 1.0
    %v1335 = vrcp.pop %v1334
    %v1336 = vmul.f32 %v1334, %v1335
    %v1337 = vsub.f32 1.0, %v1336
    %v1338 = vmul.f32 %v1335, %v1337
    %v1339 = vadd.f32 %v1335, %v1338
    %vm1340 = vweird.f32 %v1334
    %vm1341 = vweird.f32 %v1335
    %vm1342 = vmor %vm1340, %vm1341
    %v1343 = vsel %vm1342, %v1335, %v1339
    %v1344 = vand.u32 2147483647, %v1334
    %vm1345 = vcmp.eq.f32.partialorder %v1344, 8.507059e+37
    %v1346 = vand.u32 %v1334, 2147483648
    %v1347 = vor.u32 1.1754944e-38, %v1346
    %v1348 = vsel %vm1345, %v1347, %v1343
    %v1349 = vmul.f32 1.0, %v1348
    %v1350 = vmul.f32 %v1329, %v1308
    %v1351 = vadd.f32 %v283, %v1350
    %v1352 = vtanh.pop %v1351
    %v1353 = vsub.f32 1.0, %v1349
    %v1354 = vmul.f32 %v1353, %v1352
    %v1355 = vmul.f32 %v1349, %v1140
    %v1356 = vadd.f32 %v1354, %v1355
    %1357 = vmatpush.msra.mxu0 %v581
    %1358 = vmatpush.msra.mxu0 %v578
    %1359 = vmatpush.msra.mxu0 %v575
    %1360 = vmatpush.msra.mxu0 %v572
    %1361 = vmatpush.msra.mxu0 %v569
    %1362 = vmatpush.msra.mxu0 %v566
    %1363 = vmatpush.msra.mxu0 %v563
    %1364 = vmatpush.msra.mxu0 %v560
    %1365 = vmatpush.msra.mxu0 %v557
    %1366 = vmatpush.msra.mxu0 %v554
    %1367 = vmatpush.msra.mxu0 %v551
    %1368 = vmatpush.msra.mxu0 %v548
    %1369 = vmatpush.msra.mxu0 %v545
    %1370 = vmatpush.msra.mxu0 %v542
    %1371 = vmatpush.msra.mxu0 %v539
    %1372 = vmatpush.msra.mxu0 %v536
    %1373 = vmatmul.f32.gmra.mxu0 %v1247
    %v1374 = vpop.f32.mrf.mxu0
    %v1375 = vadd.f32 %v703, %v1374
    %1376 = vdwg.mxu0
    %1377 = vmatpush.msra.mxu0 %v582
    %1378 = vmatpush.msra.mxu0 %v579
    %1379 = vmatpush.msra.mxu0 %v576
    %1380 = vmatpush.msra.mxu0 %v573
    %1381 = vmatpush.msra.mxu0 %v570
    %1382 = vmatpush.msra.mxu0 %v567
    %1383 = vmatpush.msra.mxu0 %v564
    %1384 = vmatpush.msra.mxu0 %v561
    %1385 = vmatpush.msra.mxu0 %v558
    %1386 = vmatpush.msra.mxu0 %v555
    %1387 = vmatpush.msra.mxu0 %v552
    %1388 = vmatpush.msra.mxu0 %v549
    %1389 = vmatpush.msra.mxu0 %v546
    %1390 = vmatpush.msra.mxu0 %v543
    %1391 = vmatpush.msra.mxu0 %v540
    %1392 = vmatpush.msra.mxu0 %v537
    %1393 = vmatmul.f32.gmra.mxu0 %v1247
    %v1394 = vpop.f32.mrf.mxu0
    %v1395 = vadd.f32 %v704, %v1394
    %1396 = vdwg.mxu0
    %1397 = vmatpush.msra.mxu0 %v583
    %1398 = vmatpush.msra.mxu0 %v580
    %1399 = vmatpush.msra.mxu0 %v577
    %1400 = vmatpush.msra.mxu0 %v574
    %1401 = vmatpush.msra.mxu0 %v571
    %1402 = vmatpush.msra.mxu0 %v568
    %1403 = vmatpush.msra.mxu0 %v565
    %1404 = vmatpush.msra.mxu0 %v562
    %1405 = vmatpush.msra.mxu0 %v559
    %1406 = vmatpush.msra.mxu0 %v556
    %1407 = vmatpush.msra.mxu0 %v553
    %1408 = vmatpush.msra.mxu0 %v550
    %1409 = vmatpush.msra.mxu0 %v547
    %1410 = vmatpush.msra.mxu0 %v544
    %1411 = vmatpush.msra.mxu0 %v541
    %1412 = vmatpush.msra.mxu0 %v538
    %1413 = vmatmul.f32.gmra.mxu0 %v1247
    %v1414 = vpop.f32.mrf.mxu0
    %v1415 = vadd.f32 %v705, %v1414
    %1416 = vdwg.mxu0
    %v1417 = vadd.f32 %v476, %v1375
    %v1418 = vxor.u32 %v1417, 2147483648
    %v1419 = vmul.f32 %v1418, 1.442695
    %v1420 = vpow.pop %v1419
    %v1421 = vadd.f32 %v1420, 1.0
    %v1422 = vrcp.pop %v1421
    %v1423 = vmul.f32 %v1421, %v1422
    %v1424 = vsub.f32 1.0, %v1423
    %v1425 = vmul.f32 %v1422, %v1424
    %v1426 = vadd.f32 %v1422, %v1425
    %vm1427 = vweird.f32 %v1421
    %vm1428 = vweird.f32 %v1422
    %vm1429 = vmor %vm1427, %vm1428
    %v1430 = vsel %vm1429, %v1422, %v1426
    %v1431 = vand.u32 2147483647, %v1421
    %vm1432 = vcmp.eq.f32.partialorder %v1431, 8.507059e+37
    %v1433 = vand.u32 %v1421, 2147483648
    %v1434 = vor.u32 1.1754944e-38, %v1433
    %v1435 = vsel %vm1432, %v1434, %v1430
    %v1436 = vmul.f32 1.0, %v1435
    %v1437 = vadd.f32 %v477, %v1395
    %v1438 = vxor.u32 %v1437, 2147483648
    %v1439 = vmul.f32 %v1438, 1.442695
    %v1440 = vpow.pop %v1439
    %v1441 = vadd.f32 %v1440, 1.0
    %v1442 = vrcp.pop %v1441
    %v1443 = vmul.f32 %v1441, %v1442
    %v1444 = vsub.f32 1.0, %v1443
    %v1445 = vmul.f32 %v1442, %v1444
    %v1446 = vadd.f32 %v1442, %v1445
    %vm1447 = vweird.f32 %v1441
    %vm1448 = vweird.f32 %v1442
    %vm1449 = vmor %vm1447, %vm1448
    %v1450 = vsel %vm1449, %v1442, %v1446
    %v1451 = vand.u32 2147483647, %v1441
    %vm1452 = vcmp.eq.f32.partialorder %v1451, 8.507059e+37
    %v1453 = vand.u32 %v1441, 2147483648
    %v1454 = vor.u32 1.1754944e-38, %v1453
    %v1455 = vsel %vm1452, %v1454, %v1450
    %v1456 = vmul.f32 1.0, %v1455
    %v1457 = vmul.f32 %v1436, %v1415
    %v1458 = vadd.f32 %v478, %v1457
    %v1459 = vtanh.pop %v1458
    %v1460 = vsub.f32 1.0, %v1456
    %v1461 = vmul.f32 %v1460, %v1459
    %v1462 = vmul.f32 %v1456, %v1247
    %v1463 = vadd.f32 %v1461, %v1462
    %1464 = vst [vmem:[#allocation9 + $0x18] sm:$0xff] %v1356
    %1465 = vst [vmem:[#allocation10 + $0x20] sm:$0xff] %v1463
    %1466 = vmatpush.msra.mxu0 %v533
    %1467 = vmatpush.msra.mxu0 %v530
    %1468 = vmatpush.msra.mxu0 %v527
    %1469 = vmatpush.msra.mxu0 %v524
    %1470 = vmatpush.msra.mxu0 %v521
    %1471 = vmatpush.msra.mxu0 %v518
    %1472 = vmatpush.msra.mxu0 %v515
    %1473 = vmatpush.msra.mxu0 %v512
    %1474 = vmatpush.msra.mxu0 %v509
    %1475 = vmatpush.msra.mxu0 %v506
    %1476 = vmatpush.msra.mxu0 %v503
    %1477 = vmatpush.msra.mxu0 %v500
    %1478 = vmatpush.msra.mxu0 %v497
    %1479 = vmatpush.msra.mxu0 %v494
    %1480 = vmatpush.msra.mxu0 %v491
    %1481 = vmatpush.msra.mxu0 %v488
    %1482 = vmatmul.f32.gmra.mxu0 %v1356
    %v1483 = vpop.f32.mrf.mxu0
    %v1484 = vadd.f32 %v589, %v1483
    %1485 = vdwg.mxu0
    %1486 = vmatpush.msra.mxu0 %v534
    %1487 = vmatpush.msra.mxu0 %v531
    %1488 = vmatpush.msra.mxu0 %v528
    %1489 = vmatpush.msra.mxu0 %v525
    %1490 = vmatpush.msra.mxu0 %v522
    %1491 = vmatpush.msra.mxu0 %v519
    %1492 = vmatpush.msra.mxu0 %v516
    %1493 = vmatpush.msra.mxu0 %v513
    %1494 = vmatpush.msra.mxu0 %v510
    %1495 = vmatpush.msra.mxu0 %v507
    %1496 = vmatpush.msra.mxu0 %v504
    %1497 = vmatpush.msra.mxu0 %v501
    %1498 = vmatpush.msra.mxu0 %v498
    %1499 = vmatpush.msra.mxu0 %v495
    %1500 = vmatpush.msra.mxu0 %v492
    %1501 = vmatpush.msra.mxu0 %v489
    %1502 = vmatmul.f32.gmra.mxu0 %v1356
    %v1503 = vpop.f32.mrf.mxu0
    %v1504 = vadd.f32 %v590, %v1503
    %1505 = vdwg.mxu0
    %1506 = vmatpush.msra.mxu0 %v535
    %1507 = vmatpush.msra.mxu0 %v532
    %1508 = vmatpush.msra.mxu0 %v529
    %1509 = vmatpush.msra.mxu0 %v526
    %1510 = vmatpush.msra.mxu0 %v523
    %1511 = vmatpush.msra.mxu0 %v520
    %1512 = vmatpush.msra.mxu0 %v517
    %1513 = vmatpush.msra.mxu0 %v514
    %1514 = vmatpush.msra.mxu0 %v511
    %1515 = vmatpush.msra.mxu0 %v508
    %1516 = vmatpush.msra.mxu0 %v505
    %1517 = vmatpush.msra.mxu0 %v502
    %1518 = vmatpush.msra.mxu0 %v499
    %1519 = vmatpush.msra.mxu0 %v496
    %1520 = vmatpush.msra.mxu0 %v493
    %1521 = vmatpush.msra.mxu0 %v490
    %1522 = vmatmul.f32.gmra.mxu0 %v1356
    %v1523 = vpop.f32.mrf.mxu0
    %v1524 = vadd.f32 %v591, %v1523
    %1525 = vdwg.mxu0
    %v1526 = vadd.f32 %v284, %v1484
    %v1527 = vxor.u32 %v1526, 2147483648
    %v1528 = vmul.f32 %v1527, 1.442695
    %v1529 = vpow.pop %v1528
    %v1530 = vadd.f32 %v1529, 1.0
    %v1531 = vrcp.pop %v1530
    %v1532 = vmul.f32 %v1530, %v1531
    %v1533 = vsub.f32 1.0, %v1532
    %v1534 = vmul.f32 %v1531, %v1533
    %v1535 = vadd.f32 %v1531, %v1534
    %vm1536 = vweird.f32 %v1530
    %vm1537 = vweird.f32 %v1531
    %vm1538 = vmor %vm1536, %vm1537
    %v1539 = vsel %vm1538, %v1531, %v1535
    %v1540 = vand.u32 2147483647, %v1530
    %vm1541 = vcmp.eq.f32.partialorder %v1540, 8.507059e+37
    %v1542 = vand.u32 %v1530, 2147483648
    %v1543 = vor.u32 1.1754944e-38, %v1542
    %v1544 = vsel %vm1541, %v1543, %v1539
    %v1545 = vmul.f32 1.0, %v1544
    %v1546 = vadd.f32 %v285, %v1504
    %v1547 = vxor.u32 %v1546, 2147483648
    %v1548 = vmul.f32 %v1547, 1.442695
    %v1549 = vpow.pop %v1548
    %v1550 = vadd.f32 %v1549, 1.0
    %v1551 = vrcp.pop %v1550
    %v1552 = vmul.f32 %v1550, %v1551
    %v1553 = vsub.f32 1.0, %v1552
    %v1554 = vmul.f32 %v1551, %v1553
    %v1555 = vadd.f32 %v1551, %v1554
    %vm1556 = vweird.f32 %v1550
    %vm1557 = vweird.f32 %v1551
    %vm1558 = vmor %vm1556, %vm1557
    %v1559 = vsel %vm1558, %v1551, %v1555
    %v1560 = vand.u32 2147483647, %v1550
    %vm1561 = vcmp.eq.f32.partialorder %v1560, 8.507059e+37
    %v1562 = vand.u32 %v1550, 2147483648
    %v1563 = vor.u32 1.1754944e-38, %v1562
    %v1564 = vsel %vm1561, %v1563, %v1559
    %v1565 = vmul.f32 1.0, %v1564
    %v1566 = vmul.f32 %v1545, %v1524
    %v1567 = vadd.f32 %v286, %v1566
    %v1568 = vtanh.pop %v1567
    %v1569 = vsub.f32 1.0, %v1565
    %v1570 = vmul.f32 %v1569, %v1568
    %v1571 = vmul.f32 %v1565, %v1356
    %v1572 = vadd.f32 %v1570, %v1571
    %1573 = vmatpush.msra.mxu0 %v581
    %1574 = vmatpush.msra.mxu0 %v578
    %1575 = vmatpush.msra.mxu0 %v575
    %1576 = vmatpush.msra.mxu0 %v572
    %1577 = vmatpush.msra.mxu0 %v569
    %1578 = vmatpush.msra.mxu0 %v566
    %1579 = vmatpush.msra.mxu0 %v563
    %1580 = vmatpush.msra.mxu0 %v560
    %1581 = vmatpush.msra.mxu0 %v557
    %1582 = vmatpush.msra.mxu0 %v554
    %1583 = vmatpush.msra.mxu0 %v551
    %1584 = vmatpush.msra.mxu0 %v548
    %1585 = vmatpush.msra.mxu0 %v545
    %1586 = vmatpush.msra.mxu0 %v542
    %1587 = vmatpush.msra.mxu0 %v539
    %1588 = vmatpush.msra.mxu0 %v536
    %1589 = vmatmul.f32.gmra.mxu0 %v1463
    %v1590 = vpop.f32.mrf.mxu0
    %v1591 = vadd.f32 %v703, %v1590
    %1592 = vdwg.mxu0
    %1593 = vmatpush.msra.mxu0 %v582
    %1594 = vmatpush.msra.mxu0 %v579
    %1595 = vmatpush.msra.mxu0 %v576
    %1596 = vmatpush.msra.mxu0 %v573
    %1597 = vmatpush.msra.mxu0 %v570
    %1598 = vmatpush.msra.mxu0 %v567
    %1599 = vmatpush.msra.mxu0 %v564
    %1600 = vmatpush.msra.mxu0 %v561
    %1601 = vmatpush.msra.mxu0 %v558
    %1602 = vmatpush.msra.mxu0 %v555
    %1603 = vmatpush.msra.mxu0 %v552
    %1604 = vmatpush.msra.mxu0 %v549
    %1605 = vmatpush.msra.mxu0 %v546
    %1606 = vmatpush.msra.mxu0 %v543
    %1607 = vmatpush.msra.mxu0 %v540
    %1608 = vmatpush.msra.mxu0 %v537
    %1609 = vmatmul.f32.gmra.mxu0 %v1463
    %v1610 = vpop.f32.mrf.mxu0
    %v1611 = vadd.f32 %v704, %v1610
    %1612 = vdwg.mxu0
    %1613 = vmatpush.msra.mxu0 %v583
    %1614 = vmatpush.msra.mxu0 %v580
    %1615 = vmatpush.msra.mxu0 %v577
    %1616 = vmatpush.msra.mxu0 %v574
    %1617 = vmatpush.msra.mxu0 %v571
    %1618 = vmatpush.msra.mxu0 %v568
    %1619 = vmatpush.msra.mxu0 %v565
    %1620 = vmatpush.msra.mxu0 %v562
    %1621 = vmatpush.msra.mxu0 %v559
    %1622 = vmatpush.msra.mxu0 %v556
    %1623 = vmatpush.msra.mxu0 %v553
    %1624 = vmatpush.msra.mxu0 %v550
    %1625 = vmatpush.msra.mxu0 %v547
    %1626 = vmatpush.msra.mxu0 %v544
    %1627 = vmatpush.msra.mxu0 %v541
    %1628 = vmatpush.msra.mxu0 %v538
    %1629 = vmatmul.f32.gmra.mxu0 %v1463
    %v1630 = vpop.f32.mrf.mxu0
    %v1631 = vadd.f32 %v705, %v1630
    %1632 = vdwg.mxu0
    %v1633 = vadd.f32 %v473, %v1591
    %v1634 = vxor.u32 %v1633, 2147483648
    %v1635 = vmul.f32 %v1634, 1.442695
    %v1636 = vpow.pop %v1635
    %v1637 = vadd.f32 %v1636, 1.0
    %v1638 = vrcp.pop %v1637
    %v1639 = vmul.f32 %v1637, %v1638
    %v1640 = vsub.f32 1.0, %v1639
    %v1641 = vmul.f32 %v1638, %v1640
    %v1642 = vadd.f32 %v1638, %v1641
    %vm1643 = vweird.f32 %v1637
    %vm1644 = vweird.f32 %v1638
    %vm1645 = vmor %vm1643, %vm1644
    %v1646 = vsel %vm1645, %v1638, %v1642
    %v1647 = vand.u32 2147483647, %v1637
    %vm1648 = vcmp.eq.f32.partialorder %v1647, 8.507059e+37
    %v1649 = vand.u32 %v1637, 2147483648
    %v1650 = vor.u32 1.1754944e-38, %v1649
    %v1651 = vsel %vm1648, %v1650, %v1646
    %v1652 = vmul.f32 1.0, %v1651
    %v1653 = vadd.f32 %v474, %v1611
    %v1654 = vxor.u32 %v1653, 2147483648
    %v1655 = vmul.f32 %v1654, 1.442695
    %v1656 = vpow.pop %v1655
    %v1657 = vadd.f32 %v1656, 1.0
    %v1658 = vrcp.pop %v1657
    %v1659 = vmul.f32 %v1657, %v1658
    %v1660 = vsub.f32 1.0, %v1659
    %v1661 = vmul.f32 %v1658, %v1660
    %v1662 = vadd.f32 %v1658, %v1661
    %vm1663 = vweird.f32 %v1657
    %vm1664 = vweird.f32 %v1658
    %vm1665 = vmor %vm1663, %vm1664
    %v1666 = vsel %vm1665, %v1658, %v1662
    %v1667 = vand.u32 2147483647, %v1657
    %vm1668 = vcmp.eq.f32.partialorder %v1667, 8.507059e+37
    %v1669 = vand.u32 %v1657, 2147483648
    %v1670 = vor.u32 1.1754944e-38, %v1669
    %v1671 = vsel %vm1668, %v1670, %v1666
    %v1672 = vmul.f32 1.0, %v1671
    %v1673 = vmul.f32 %v1652, %v1631
    %v1674 = vadd.f32 %v475, %v1673
    %v1675 = vtanh.pop %v1674
    %v1676 = vsub.f32 1.0, %v1672
    %v1677 = vmul.f32 %v1676, %v1675
    %v1678 = vmul.f32 %v1672, %v1463
    %v1679 = vadd.f32 %v1677, %v1678
    %1680 = vst [vmem:[#allocation9 + $0x20] sm:$0xff] %v1572
    %1681 = vst [vmem:[#allocation10 + $0x18] sm:$0xff] %v1679
    %1682 = vmatpush.msra.mxu0 %v533
    %1683 = vmatpush.msra.mxu0 %v530
    %1684 = vmatpush.msra.mxu0 %v527
    %1685 = vmatpush.msra.mxu0 %v524
    %1686 = vmatpush.msra.mxu0 %v521
    %1687 = vmatpush.msra.mxu0 %v518
    %1688 = vmatpush.msra.mxu0 %v515
    %1689 = vmatpush.msra.mxu0 %v512
    %1690 = vmatpush.msra.mxu0 %v509
    %1691 = vmatpush.msra.mxu0 %v506
    %1692 = vmatpush.msra.mxu0 %v503
    %1693 = vmatpush.msra.mxu0 %v500
    %1694 = vmatpush.msra.mxu0 %v497
    %1695 = vmatpush.msra.mxu0 %v494
    %1696 = vmatpush.msra.mxu0 %v491
    %1697 = vmatpush.msra.mxu0 %v488
    %1698 = vmatmul.f32.gmra.mxu0 %v1572
    %v1699 = vpop.f32.mrf.mxu0
    %v1700 = vadd.f32 %v589, %v1699
    %1701 = vdwg.mxu0
    %1702 = vmatpush.msra.mxu0 %v534
    %1703 = vmatpush.msra.mxu0 %v531
    %1704 = vmatpush.msra.mxu0 %v528
    %1705 = vmatpush.msra.mxu0 %v525
    %1706 = vmatpush.msra.mxu0 %v522
    %1707 = vmatpush.msra.mxu0 %v519
    %1708 = vmatpush.msra.mxu0 %v516
    %1709 = vmatpush.msra.mxu0 %v513
    %1710 = vmatpush.msra.mxu0 %v510
    %1711 = vmatpush.msra.mxu0 %v507
    %1712 = vmatpush.msra.mxu0 %v504
    %1713 = vmatpush.msra.mxu0 %v501
    %1714 = vmatpush.msra.mxu0 %v498
    %1715 = vmatpush.msra.mxu0 %v495
    %1716 = vmatpush.msra.mxu0 %v492
    %1717 = vmatpush.msra.mxu0 %v489
    %1718 = vmatmul.f32.gmra.mxu0 %v1572
    %v1719 = vpop.f32.mrf.mxu0
    %v1720 = vadd.f32 %v590, %v1719
    %1721 = vdwg.mxu0
    %1722 = vmatpush.msra.mxu0 %v535
    %1723 = vmatpush.msra.mxu0 %v532
    %1724 = vmatpush.msra.mxu0 %v529
    %1725 = vmatpush.msra.mxu0 %v526
    %1726 = vmatpush.msra.mxu0 %v523
    %1727 = vmatpush.msra.mxu0 %v520
    %1728 = vmatpush.msra.mxu0 %v517
    %1729 = vmatpush.msra.mxu0 %v514
    %1730 = vmatpush.msra.mxu0 %v511
    %1731 = vmatpush.msra.mxu0 %v508
    %1732 = vmatpush.msra.mxu0 %v505
    %1733 = vmatpush.msra.mxu0 %v502
    %1734 = vmatpush.msra.mxu0 %v499
    %1735 = vmatpush.msra.mxu0 %v496
    %1736 = vmatpush.msra.mxu0 %v493
    %1737 = vmatpush.msra.mxu0 %v490
    %1738 = vmatmul.f32.gmra.mxu0 %v1572
    %v1739 = vpop.f32.mrf.mxu0
    %v1740 = vadd.f32 %v591, %v1739
    %1741 = vdwg.mxu0
    %v1742 = vadd.f32 %v287, %v1700
    %v1743 = vxor.u32 %v1742, 2147483648
    %v1744 = vmul.f32 %v1743, 1.442695
    %v1745 = vpow.pop %v1744
    %v1746 = vadd.f32 %v1745, 1.0
    %v1747 = vrcp.pop %v1746
    %v1748 = vmul.f32 %v1746, %v1747
    %v1749 = vsub.f32 1.0, %v1748
    %v1750 = vmul.f32 %v1747, %v1749
    %v1751 = vadd.f32 %v1747, %v1750
    %vm1752 = vweird.f32 %v1746
    %vm1753 = vweird.f32 %v1747
    %vm1754 = vmor %vm1752, %vm1753
    %v1755 = vsel %vm1754, %v1747, %v1751
    %v1756 = vand.u32 2147483647, %v1746
    %vm1757 = vcmp.eq.f32.partialorder %v1756, 8.507059e+37
    %v1758 = vand.u32 %v1746, 2147483648
    %v1759 = vor.u32 1.1754944e-38, %v1758
    %v1760 = vsel %vm1757, %v1759, %v1755
    %v1761 = vmul.f32 1.0, %v1760
    %v1762 = vadd.f32 %v288, %v1720
    %v1763 = vxor.u32 %v1762, 2147483648
    %v1764 = vmul.f32 %v1763, 1.442695
    %v1765 = vpow.pop %v1764
    %v1766 = vadd.f32 %v1765, 1.0
    %v1767 = vrcp.pop %v1766
    %v1768 = vmul.f32 %v1766, %v1767
    %v1769 = vsub.f32 1.0, %v1768
    %v1770 = vmul.f32 %v1767, %v1769
    %v1771 = vadd.f32 %v1767, %v1770
    %vm1772 = vweird.f32 %v1766
    %vm1773 = vweird.f32 %v1767
    %vm1774 = vmor %vm1772, %vm1773
    %v1775 = vsel %vm1774, %v1767, %v1771
    %v1776 = vand.u32 2147483647, %v1766
    %vm1777 = vcmp.eq.f32.partialorder %v1776, 8.507059e+37
    %v1778 = vand.u32 %v1766, 2147483648
    %v1779 = vor.u32 1.1754944e-38, %v1778
    %v1780 = vsel %vm1777, %v1779, %v1775
    %v1781 = vmul.f32 1.0, %v1780
    %v1782 = vmul.f32 %v1761, %v1740
    %v1783 = vadd.f32 %v289, %v1782
    %v1784 = vtanh.pop %v1783
    %v1785 = vsub.f32 1.0, %v1781
    %v1786 = vmul.f32 %v1785, %v1784
    %v1787 = vmul.f32 %v1781, %v1572
    %v1788 = vadd.f32 %v1786, %v1787
    %1789 = vmatpush.msra.mxu0 %v581
    %1790 = vmatpush.msra.mxu0 %v578
    %1791 = vmatpush.msra.mxu0 %v575
    %1792 = vmatpush.msra.mxu0 %v572
    %1793 = vmatpush.msra.mxu0 %v569
    %1794 = vmatpush.msra.mxu0 %v566
    %1795 = vmatpush.msra.mxu0 %v563
    %1796 = vmatpush.msra.mxu0 %v560
    %1797 = vmatpush.msra.mxu0 %v557
    %1798 = vmatpush.msra.mxu0 %v554
    %1799 = vmatpush.msra.mxu0 %v551
    %1800 = vmatpush.msra.mxu0 %v548
    %1801 = vmatpush.msra.mxu0 %v545
    %1802 = vmatpush.msra.mxu0 %v542
    %1803 = vmatpush.msra.mxu0 %v539
    %1804 = vmatpush.msra.mxu0 %v536
    %1805 = vmatmul.f32.gmra.mxu0 %v1679
    %v1806 = vpop.f32.mrf.mxu0
    %v1807 = vadd.f32 %v703, %v1806
    %1808 = vdwg.mxu0
    %1809 = vmatpush.msra.mxu0 %v582
    %1810 = vmatpush.msra.mxu0 %v579
    %1811 = vmatpush.msra.mxu0 %v576
    %1812 = vmatpush.msra.mxu0 %v573
    %1813 = vmatpush.msra.mxu0 %v570
    %1814 = vmatpush.msra.mxu0 %v567
    %1815 = vmatpush.msra.mxu0 %v564
    %1816 = vmatpush.msra.mxu0 %v561
    %1817 = vmatpush.msra.mxu0 %v558
    %1818 = vmatpush.msra.mxu0 %v555
    %1819 = vmatpush.msra.mxu0 %v552
    %1820 = vmatpush.msra.mxu0 %v549
    %1821 = vmatpush.msra.mxu0 %v546
    %1822 = vmatpush.msra.mxu0 %v543
    %1823 = vmatpush.msra.mxu0 %v540
    %1824 = vmatpush.msra.mxu0 %v537
    %1825 = vmatmul.f32.gmra.mxu0 %v1679
    %v1826 = vpop.f32.mrf.mxu0
    %v1827 = vadd.f32 %v704, %v1826
    %1828 = vdwg.mxu0
    %1829 = vmatpush.msra.mxu0 %v583
    %1830 = vmatpush.msra.mxu0 %v580
    %1831 = vmatpush.msra.mxu0 %v577
    %1832 = vmatpush.msra.mxu0 %v574
    %1833 = vmatpush.msra.mxu0 %v571
    %1834 = vmatpush.msra.mxu0 %v568
    %1835 = vmatpush.msra.mxu0 %v565
    %1836 = vmatpush.msra.mxu0 %v562
    %1837 = vmatpush.msra.mxu0 %v559
    %1838 = vmatpush.msra.mxu0 %v556
    %1839 = vmatpush.msra.mxu0 %v553
    %1840 = vmatpush.msra.mxu0 %v550
    %1841 = vmatpush.msra.mxu0 %v547
    %1842 = vmatpush.msra.mxu0 %v544
    %1843 = vmatpush.msra.mxu0 %v541
    %1844 = vmatpush.msra.mxu0 %v538
    %1845 = vmatmul.f32.gmra.mxu0 %v1679
    %v1846 = vpop.f32.mrf.mxu0
    %v1847 = vadd.f32 %v705, %v1846
    %1848 = vdwg.mxu0
    %v1849 = vadd.f32 %v470, %v1807
    %v1850 = vxor.u32 %v1849, 2147483648
    %v1851 = vmul.f32 %v1850, 1.442695
    %v1852 = vpow.pop %v1851
    %v1853 = vadd.f32 %v1852, 1.0
    %v1854 = vrcp.pop %v1853
    %v1855 = vmul.f32 %v1853, %v1854
    %v1856 = vsub.f32 1.0, %v1855
    %v1857 = vmul.f32 %v1854, %v1856
    %v1858 = vadd.f32 %v1854, %v1857
    %vm1859 = vweird.f32 %v1853
    %vm1860 = vweird.f32 %v1854
    %vm1861 = vmor %vm1859, %vm1860
    %v1862 = vsel %vm1861, %v1854, %v1858
    %v1863 = vand.u32 2147483647, %v1853
    %vm1864 = vcmp.eq.f32.partialorder %v1863, 8.507059e+37
    %v1865 = vand.u32 %v1853, 2147483648
    %v1866 = vor.u32 1.1754944e-38, %v1865
    %v1867 = vsel %vm1864, %v1866, %v1862
    %v1868 = vmul.f32 1.0, %v1867
    %v1869 = vadd.f32 %v471, %v1827
    %v1870 = vxor.u32 %v1869, 2147483648
    %v1871 = vmul.f32 %v1870, 1.442695
    %v1872 = vpow.pop %v1871
    %v1873 = vadd.f32 %v1872, 1.0
    %v1874 = vrcp.pop %v1873
    %v1875 = vmul.f32 %v1873, %v1874
    %v1876 = vsub.f32 1.0, %v1875
    %v1877 = vmul.f32 %v1874, %v1876
    %v1878 = vadd.f32 %v1874, %v1877
    %vm1879 = vweird.f32 %v1873
    %vm1880 = vweird.f32 %v1874
    %vm1881 = vmor %vm1879, %vm1880
    %v1882 = vsel %vm1881, %v1874, %v1878
    %v1883 = vand.u32 2147483647, %v1873
    %vm1884 = vcmp.eq.f32.partialorder %v1883, 8.507059e+37
    %v1885 = vand.u32 %v1873, 2147483648
    %v1886 = vor.u32 1.1754944e-38, %v1885
    %v1887 = vsel %vm1884, %v1886, %v1882
    %v1888 = vmul.f32 1.0, %v1887
    %v1889 = vmul.f32 %v1868, %v1847
    %v1890 = vadd.f32 %v472, %v1889
    %v1891 = vtanh.pop %v1890
    %v1892 = vsub.f32 1.0, %v1888
    %v1893 = vmul.f32 %v1892, %v1891
    %v1894 = vmul.f32 %v1888, %v1679
    %v1895 = vadd.f32 %v1893, %v1894
    %1896 = vst [vmem:[#allocation9 + $0x28] sm:$0xff] %v1788
    %1897 = vst [vmem:[#allocation10 + $0x10] sm:$0xff] %v1895
    %1898 = vmatpush.msra.mxu0 %v533
    %1899 = vmatpush.msra.mxu0 %v530
    %1900 = vmatpush.msra.mxu0 %v527
    %1901 = vmatpush.msra.mxu0 %v524
    %1902 = vmatpush.msra.mxu0 %v521
    %1903 = vmatpush.msra.mxu0 %v518
    %1904 = vmatpush.msra.mxu0 %v515
    %1905 = vmatpush.msra.mxu0 %v512
    %1906 = vmatpush.msra.mxu0 %v509
    %1907 = vmatpush.msra.mxu0 %v506
    %1908 = vmatpush.msra.mxu0 %v503
    %1909 = vmatpush.msra.mxu0 %v500
    %1910 = vmatpush.msra.mxu0 %v497
    %1911 = vmatpush.msra.mxu0 %v494
    %1912 = vmatpush.msra.mxu0 %v491
    %1913 = vmatpush.msra.mxu0 %v488
    %1914 = vmatmul.f32.gmra.mxu0 %v1788
    %v1915 = vpop.f32.mrf.mxu0
    %v1916 = vadd.f32 %v589, %v1915
    %1917 = vdwg.mxu0
    %1918 = vmatpush.msra.mxu0 %v534
    %1919 = vmatpush.msra.mxu0 %v531
    %1920 = vmatpush.msra.mxu0 %v528
    %1921 = vmatpush.msra.mxu0 %v525
    %1922 = vmatpush.msra.mxu0 %v522
    %1923 = vmatpush.msra.mxu0 %v519
    %1924 = vmatpush.msra.mxu0 %v516
    %1925 = vmatpush.msra.mxu0 %v513
    %1926 = vmatpush.msra.mxu0 %v510
    %1927 = vmatpush.msra.mxu0 %v507
    %1928 = vmatpush.msra.mxu0 %v504
    %1929 = vmatpush.msra.mxu0 %v501
    %1930 = vmatpush.msra.mxu0 %v498
    %1931 = vmatpush.msra.mxu0 %v495
    %1932 = vmatpush.msra.mxu0 %v492
    %1933 = vmatpush.msra.mxu0 %v489
    %1934 = vmatmul.f32.gmra.mxu0 %v1788
    %v1935 = vpop.f32.mrf.mxu0
    %v1936 = vadd.f32 %v590, %v1935
    %1937 = vdwg.mxu0
    %1938 = vmatpush.msra.mxu0 %v535
    %1939 = vmatpush.msra.mxu0 %v532
    %1940 = vmatpush.msra.mxu0 %v529
    %1941 = vmatpush.msra.mxu0 %v526
    %1942 = vmatpush.msra.mxu0 %v523
    %1943 = vmatpush.msra.mxu0 %v520
    %1944 = vmatpush.msra.mxu0 %v517
    %1945 = vmatpush.msra.mxu0 %v514
    %1946 = vmatpush.msra.mxu0 %v511
    %1947 = vmatpush.msra.mxu0 %v508
    %1948 = vmatpush.msra.mxu0 %v505
    %1949 = vmatpush.msra.mxu0 %v502
    %1950 = vmatpush.msra.mxu0 %v499
    %1951 = vmatpush.msra.mxu0 %v496
    %1952 = vmatpush.msra.mxu0 %v493
    %1953 = vmatpush.msra.mxu0 %v490
    %1954 = vmatmul.f32.gmra.mxu0 %v1788
    %v1955 = vpop.f32.mrf.mxu0
    %v1956 = vadd.f32 %v591, %v1955
    %1957 = vdwg.mxu0
    %v1958 = vadd.f32 %v290, %v1916
    %v1959 = vxor.u32 %v1958, 2147483648
    %v1960 = vmul.f32 %v1959, 1.442695
    %v1961 = vpow.pop %v1960
    %v1962 = vadd.f32 %v1961, 1.0
    %v1963 = vrcp.pop %v1962
    %v1964 = vmul.f32 %v1962, %v1963
    %v1965 = vsub.f32 1.0, %v1964
    %v1966 = vmul.f32 %v1963, %v1965
    %v1967 = vadd.f32 %v1963, %v1966
    %vm1968 = vweird.f32 %v1962
    %vm1969 = vweird.f32 %v1963
    %vm1970 = vmor %vm1968, %vm1969
    %v1971 = vsel %vm1970, %v1963, %v1967
    %v1972 = vand.u32 2147483647, %v1962
    %vm1973 = vcmp.eq.f32.partialorder %v1972, 8.507059e+37
    %v1974 = vand.u32 %v1962, 2147483648
    %v1975 = vor.u32 1.1754944e-38, %v1974
    %v1976 = vsel %vm1973, %v1975, %v1971
    %v1977 = vmul.f32 1.0, %v1976
    %v1978 = vadd.f32 %v291, %v1936
    %v1979 = vxor.u32 %v1978, 2147483648
    %v1980 = vmul.f32 %v1979, 1.442695
    %v1981 = vpow.pop %v1980
    %v1982 = vadd.f32 %v1981, 1.0
    %v1983 = vrcp.pop %v1982
    %v1984 = vmul.f32 %v1982, %v1983
    %v1985 = vsub.f32 1.0, %v1984
    %v1986 = vmul.f32 %v1983, %v1985
    %v1987 = vadd.f32 %v1983, %v1986
    %vm1988 = vweird.f32 %v1982
    %vm1989 = vweird.f32 %v1983
    %vm1990 = vmor %vm1988, %vm1989
    %v1991 = vsel %vm1990, %v1983, %v1987
    %v1992 = vand.u32 2147483647, %v1982
    %vm1993 = vcmp.eq.f32.partialorder %v1992, 8.507059e+37
    %v1994 = vand.u32 %v1982, 2147483648
    %v1995 = vor.u32 1.1754944e-38, %v1994
    %v1996 = vsel %vm1993, %v1995, %v1991
    %v1997 = vmul.f32 1.0, %v1996
    %v1998 = vmul.f32 %v1977, %v1956
    %v1999 = vadd.f32 %v292, %v1998
    %v2000 = vtanh.pop %v1999
    %v2001 = vsub.f32 1.0, %v1997
    %v2002 = vmul.f32 %v2001, %v2000
    %v2003 = vmul.f32 %v1997, %v1788
    %v2004 = vadd.f32 %v2002, %v2003
    %2005 = vmatpush.msra.mxu0 %v581
    %2006 = vmatpush.msra.mxu0 %v578
    %2007 = vmatpush.msra.mxu0 %v575
    %2008 = vmatpush.msra.mxu0 %v572
    %2009 = vmatpush.msra.mxu0 %v569
    %2010 = vmatpush.msra.mxu0 %v566
    %2011 = vmatpush.msra.mxu0 %v563
    %2012 = vmatpush.msra.mxu0 %v560
    %2013 = vmatpush.msra.mxu0 %v557
    %2014 = vmatpush.msra.mxu0 %v554
    %2015 = vmatpush.msra.mxu0 %v551
    %2016 = vmatpush.msra.mxu0 %v548
    %2017 = vmatpush.msra.mxu0 %v545
    %2018 = vmatpush.msra.mxu0 %v542
    %2019 = vmatpush.msra.mxu0 %v539
    %2020 = vmatpush.msra.mxu0 %v536
    %2021 = vmatmul.f32.gmra.mxu0 %v1895
    %v2022 = vpop.f32.mrf.mxu0
    %v2023 = vadd.f32 %v703, %v2022
    %2024 = vdwg.mxu0
    %2025 = vmatpush.msra.mxu0 %v582
    %2026 = vmatpush.msra.mxu0 %v579
    %2027 = vmatpush.msra.mxu0 %v576
    %2028 = vmatpush.msra.mxu0 %v573
    %2029 = vmatpush.msra.mxu0 %v570
    %2030 = vmatpush.msra.mxu0 %v567
    %2031 = vmatpush.msra.mxu0 %v564
    %2032 = vmatpush.msra.mxu0 %v561
    %2033 = vmatpush.msra.mxu0 %v558
    %2034 = vmatpush.msra.mxu0 %v555
    %2035 = vmatpush.msra.mxu0 %v552
    %2036 = vmatpush.msra.mxu0 %v549
    %2037 = vmatpush.msra.mxu0 %v546
    %2038 = vmatpush.msra.mxu0 %v543
    %2039 = vmatpush.msra.mxu0 %v540
    %2040 = vmatpush.msra.mxu0 %v537
    %2041 = vmatmul.f32.gmra.mxu0 %v1895
    %v2042 = vpop.f32.mrf.mxu0
    %v2043 = vadd.f32 %v704, %v2042
    %2044 = vdwg.mxu0
    %2045 = vmatpush.msra.mxu0 %v583
    %2046 = vmatpush.msra.mxu0 %v580
    %2047 = vmatpush.msra.mxu0 %v577
    %2048 = vmatpush.msra.mxu0 %v574
    %2049 = vmatpush.msra.mxu0 %v571
    %2050 = vmatpush.msra.mxu0 %v568
    %2051 = vmatpush.msra.mxu0 %v565
    %2052 = vmatpush.msra.mxu0 %v562
    %2053 = vmatpush.msra.mxu0 %v559
    %2054 = vmatpush.msra.mxu0 %v556
    %2055 = vmatpush.msra.mxu0 %v553
    %2056 = vmatpush.msra.mxu0 %v550
    %2057 = vmatpush.msra.mxu0 %v547
    %2058 = vmatpush.msra.mxu0 %v544
    %2059 = vmatpush.msra.mxu0 %v541
    %2060 = vmatpush.msra.mxu0 %v538
    %2061 = vmatmul.f32.gmra.mxu0 %v1895
    %v2062 = vpop.f32.mrf.mxu0
    %v2063 = vadd.f32 %v705, %v2062
    %2064 = vdwg.mxu0
    %v2065 = vadd.f32 %v467, %v2023
    %v2066 = vxor.u32 %v2065, 2147483648
    %v2067 = vmul.f32 %v2066, 1.442695
    %v2068 = vpow.pop %v2067
    %v2069 = vadd.f32 %v2068, 1.0
    %v2070 = vrcp.pop %v2069
    %v2071 = vmul.f32 %v2069, %v2070
    %v2072 = vsub.f32 1.0, %v2071
    %v2073 = vmul.f32 %v2070, %v2072
    %v2074 = vadd.f32 %v2070, %v2073
    %vm2075 = vweird.f32 %v2069
    %vm2076 = vweird.f32 %v2070
    %vm2077 = vmor %vm2075, %vm2076
    %v2078 = vsel %vm2077, %v2070, %v2074
    %v2079 = vand.u32 2147483647, %v2069
    %vm2080 = vcmp.eq.f32.partialorder %v2079, 8.507059e+37
    %v2081 = vand.u32 %v2069, 2147483648
    %v2082 = vor.u32 1.1754944e-38, %v2081
    %v2083 = vsel %vm2080, %v2082, %v2078
    %v2084 = vmul.f32 1.0, %v2083
    %v2085 = vadd.f32 %v468, %v2043
    %v2086 = vxor.u32 %v2085, 2147483648
    %v2087 = vmul.f32 %v2086, 1.442695
    %v2088 = vpow.pop %v2087
    %v2089 = vadd.f32 %v2088, 1.0
    %v2090 = vrcp.pop %v2089
    %v2091 = vmul.f32 %v2089, %v2090
    %v2092 = vsub.f32 1.0, %v2091
    %v2093 = vmul.f32 %v2090, %v2092
    %v2094 = vadd.f32 %v2090, %v2093
    %vm2095 = vweird.f32 %v2089
    %vm2096 = vweird.f32 %v2090
    %vm2097 = vmor %vm2095, %vm2096
    %v2098 = vsel %vm2097, %v2090, %v2094
    %v2099 = vand.u32 2147483647, %v2089
    %vm2100 = vcmp.eq.f32.partialorder %v2099, 8.507059e+37
    %v2101 = vand.u32 %v2089, 2147483648
    %v2102 = vor.u32 1.1754944e-38, %v2101
    %v2103 = vsel %vm2100, %v2102, %v2098
    %v2104 = vmul.f32 1.0, %v2103
    %v2105 = vmul.f32 %v2084, %v2063
    %v2106 = vadd.f32 %v469, %v2105
    %v2107 = vtanh.pop %v2106
    %v2108 = vsub.f32 1.0, %v2104
    %v2109 = vmul.f32 %v2108, %v2107
    %v2110 = vmul.f32 %v2104, %v1895
    %v2111 = vadd.f32 %v2109, %v2110
    %2112 = vst [vmem:[#allocation9 + $0x30] sm:$0xff] %v2004
    %2113 = vst [vmem:[#allocation10 + $0x8] sm:$0xff] %v2111
    %2114 = vmatpush.msra.mxu0 %v533
    %2115 = vmatpush.msra.mxu0 %v530
    %2116 = vmatpush.msra.mxu0 %v527
    %2117 = vmatpush.msra.mxu0 %v524
    %2118 = vmatpush.msra.mxu0 %v521
    %2119 = vmatpush.msra.mxu0 %v518
    %2120 = vmatpush.msra.mxu0 %v515
    %2121 = vmatpush.msra.mxu0 %v512
    %2122 = vmatpush.msra.mxu0 %v509
    %2123 = vmatpush.msra.mxu0 %v506
    %2124 = vmatpush.msra.mxu0 %v503
    %2125 = vmatpush.msra.mxu0 %v500
    %2126 = vmatpush.msra.mxu0 %v497
    %2127 = vmatpush.msra.mxu0 %v494
    %2128 = vmatpush.msra.mxu0 %v491
    %2129 = vmatpush.msra.mxu0 %v488
    %2130 = vmatmul.f32.gmra.mxu0 %v2004
    %v2131 = vpop.f32.mrf.mxu0
    %v2132 = vadd.f32 %v589, %v2131
    %2133 = vdwg.mxu0
    %2134 = vmatpush.msra.mxu0 %v534
    %2135 = vmatpush.msra.mxu0 %v531
    %2136 = vmatpush.msra.mxu0 %v528
    %2137 = vmatpush.msra.mxu0 %v525
    %2138 = vmatpush.msra.mxu0 %v522
    %2139 = vmatpush.msra.mxu0 %v519
    %2140 = vmatpush.msra.mxu0 %v516
    %2141 = vmatpush.msra.mxu0 %v513
    %2142 = vmatpush.msra.mxu0 %v510
    %2143 = vmatpush.msra.mxu0 %v507
    %2144 = vmatpush.msra.mxu0 %v504
    %2145 = vmatpush.msra.mxu0 %v501
    %2146 = vmatpush.msra.mxu0 %v498
    %2147 = vmatpush.msra.mxu0 %v495
    %2148 = vmatpush.msra.mxu0 %v492
    %2149 = vmatpush.msra.mxu0 %v489
    %2150 = vmatmul.f32.gmra.mxu0 %v2004
    %v2151 = vpop.f32.mrf.mxu0
    %v2152 = vadd.f32 %v590, %v2151
    %2153 = vdwg.mxu0
    %2154 = vmatpush.msra.mxu0 %v535
    %2155 = vmatpush.msra.mxu0 %v532
    %2156 = vmatpush.msra.mxu0 %v529
    %2157 = vmatpush.msra.mxu0 %v526
    %2158 = vmatpush.msra.mxu0 %v523
    %2159 = vmatpush.msra.mxu0 %v520
    %2160 = vmatpush.msra.mxu0 %v517
    %2161 = vmatpush.msra.mxu0 %v514
    %2162 = vmatpush.msra.mxu0 %v511
    %2163 = vmatpush.msra.mxu0 %v508
    %2164 = vmatpush.msra.mxu0 %v505
    %2165 = vmatpush.msra.mxu0 %v502
    %2166 = vmatpush.msra.mxu0 %v499
    %2167 = vmatpush.msra.mxu0 %v496
    %2168 = vmatpush.msra.mxu0 %v493
    %2169 = vmatpush.msra.mxu0 %v490
    %2170 = vmatmul.f32.gmra.mxu0 %v2004
    %v2171 = vpop.f32.mrf.mxu0
    %v2172 = vadd.f32 %v591, %v2171
    %2173 = vdwg.mxu0
    %v2174 = vadd.f32 %v293, %v2132
    %v2175 = vxor.u32 %v2174, 2147483648
    %v2176 = vmul.f32 %v2175, 1.442695
    %v2177 = vpow.pop %v2176
    %v2178 = vadd.f32 %v2177, 1.0
    %v2179 = vrcp.pop %v2178
    %v2180 = vmul.f32 %v2178, %v2179
    %v2181 = vsub.f32 1.0, %v2180
    %v2182 = vmul.f32 %v2179, %v2181
    %v2183 = vadd.f32 %v2179, %v2182
    %vm2184 = vweird.f32 %v2178
    %vm2185 = vweird.f32 %v2179
    %vm2186 = vmor %vm2184, %vm2185
    %v2187 = vsel %vm2186, %v2179, %v2183
    %v2188 = vand.u32 2147483647, %v2178
    %vm2189 = vcmp.eq.f32.partialorder %v2188, 8.507059e+37
    %v2190 = vand.u32 %v2178, 2147483648
    %v2191 = vor.u32 1.1754944e-38, %v2190
    %v2192 = vsel %vm2189, %v2191, %v2187
    %v2193 = vmul.f32 1.0, %v2192
    %v2194 = vadd.f32 %v294, %v2152
    %v2195 = vxor.u32 %v2194, 2147483648
    %v2196 = vmul.f32 %v2195, 1.442695
    %v2197 = vpow.pop %v2196
    %v2198 = vadd.f32 %v2197, 1.0
    %v2199 = vrcp.pop %v2198
    %v2200 = vmul.f32 %v2198, %v2199
    %v2201 = vsub.f32 1.0, %v2200
    %v2202 = vmul.f32 %v2199, %v2201
    %v2203 = vadd.f32 %v2199, %v2202
    %vm2204 = vweird.f32 %v2198
    %vm2205 = vweird.f32 %v2199
    %vm2206 = vmor %vm2204, %vm2205
    %v2207 = vsel %vm2206, %v2199, %v2203
    %v2208 = vand.u32 2147483647, %v2198
    %vm2209 = vcmp.eq.f32.partialorder %v2208, 8.507059e+37
    %v2210 = vand.u32 %v2198, 2147483648
    %v2211 = vor.u32 1.1754944e-38, %v2210
    %v2212 = vsel %vm2209, %v2211, %v2207
    %v2213 = vmul.f32 1.0, %v2212
    %v2214 = vmul.f32 %v2193, %v2172
    %v2215 = vadd.f32 %v295, %v2214
    %v2216 = vtanh.pop %v2215
    %v2217 = vsub.f32 1.0, %v2213
    %v2218 = vmul.f32 %v2217, %v2216
    %v2219 = vmul.f32 %v2213, %v2004
    %v2220 = vadd.f32 %v2218, %v2219
    %2221 = vmatpush.msra.mxu0 %v581
    %2222 = vmatpush.msra.mxu0 %v578
    %2223 = vmatpush.msra.mxu0 %v575
    %2224 = vmatpush.msra.mxu0 %v572
    %2225 = vmatpush.msra.mxu0 %v569
    %2226 = vmatpush.msra.mxu0 %v566
    %2227 = vmatpush.msra.mxu0 %v563
    %2228 = vmatpush.msra.mxu0 %v560
    %2229 = vmatpush.msra.mxu0 %v557
    %2230 = vmatpush.msra.mxu0 %v554
    %2231 = vmatpush.msra.mxu0 %v551
    %2232 = vmatpush.msra.mxu0 %v548
    %2233 = vmatpush.msra.mxu0 %v545
    %2234 = vmatpush.msra.mxu0 %v542
    %2235 = vmatpush.msra.mxu0 %v539
    %2236 = vmatpush.msra.mxu0 %v536
    %2237 = vmatmul.f32.gmra.mxu0 %v2111
    %v2238 = vpop.f32.mrf.mxu0
    %v2239 = vadd.f32 %v703, %v2238
    %2240 = vdwg.mxu0
    %2241 = vmatpush.msra.mxu0 %v582
    %2242 = vmatpush.msra.mxu0 %v579
    %2243 = vmatpush.msra.mxu0 %v576
    %2244 = vmatpush.msra.mxu0 %v573
    %2245 = vmatpush.msra.mxu0 %v570
    %2246 = vmatpush.msra.mxu0 %v567
    %2247 = vmatpush.msra.mxu0 %v564
    %2248 = vmatpush.msra.mxu0 %v561
    %2249 = vmatpush.msra.mxu0 %v558
    %2250 = vmatpush.msra.mxu0 %v555
    %2251 = vmatpush.msra.mxu0 %v552
    %2252 = vmatpush.msra.mxu0 %v549
    %2253 = vmatpush.msra.mxu0 %v546
    %2254 = vmatpush.msra.mxu0 %v543
    %2255 = vmatpush.msra.mxu0 %v540
    %2256 = vmatpush.msra.mxu0 %v537
    %2257 = vmatmul.f32.gmra.mxu0 %v2111
    %v2258 = vpop.f32.mrf.mxu0
    %v2259 = vadd.f32 %v704, %v2258
    %2260 = vdwg.mxu0
    %2261 = vmatpush.msra.mxu0 %v583
    %2262 = vmatpush.msra.mxu0 %v580
    %2263 = vmatpush.msra.mxu0 %v577
    %2264 = vmatpush.msra.mxu0 %v574
    %2265 = vmatpush.msra.mxu0 %v571
    %2266 = vmatpush.msra.mxu0 %v568
    %2267 = vmatpush.msra.mxu0 %v565
    %2268 = vmatpush.msra.mxu0 %v562
    %2269 = vmatpush.msra.mxu0 %v559
    %2270 = vmatpush.msra.mxu0 %v556
    %2271 = vmatpush.msra.mxu0 %v553
    %2272 = vmatpush.msra.mxu0 %v550
    %2273 = vmatpush.msra.mxu0 %v547
    %2274 = vmatpush.msra.mxu0 %v544
    %2275 = vmatpush.msra.mxu0 %v541
    %2276 = vmatpush.msra.mxu0 %v538
    %2277 = vmatmul.f32.gmra.mxu0 %v2111
    %v2278 = vpop.f32.mrf.mxu0
    %v2279 = vadd.f32 %v705, %v2278
    %2280 = vdwg.mxu0
    %v2281 = vadd.f32 %v464, %v2239
    %v2282 = vxor.u32 %v2281, 2147483648
    %v2283 = vmul.f32 %v2282, 1.442695
    %v2284 = vpow.pop %v2283
    %v2285 = vadd.f32 %v2284, 1.0
    %v2286 = vrcp.pop %v2285
    %v2287 = vmul.f32 %v2285, %v2286
    %v2288 = vsub.f32 1.0, %v2287
    %v2289 = vmul.f32 %v2286, %v2288
    %v2290 = vadd.f32 %v2286, %v2289
    %vm2291 = vweird.f32 %v2285
    %vm2292 = vweird.f32 %v2286
    %vm2293 = vmor %vm2291, %vm2292
    %v2294 = vsel %vm2293, %v2286, %v2290
    %v2295 = vand.u32 2147483647, %v2285
    %vm2296 = vcmp.eq.f32.partialorder %v2295, 8.507059e+37
    %v2297 = vand.u32 %v2285, 2147483648
    %v2298 = vor.u32 1.1754944e-38, %v2297
    %v2299 = vsel %vm2296, %v2298, %v2294
    %v2300 = vmul.f32 1.0, %v2299
    %v2301 = vadd.f32 %v465, %v2259
    %v2302 = vxor.u32 %v2301, 2147483648
    %v2303 = vmul.f32 %v2302, 1.442695
    %v2304 = vpow.pop %v2303
    %v2305 = vadd.f32 %v2304, 1.0
    %v2306 = vrcp.pop %v2305
    %v2307 = vmul.f32 %v2305, %v2306
    %v2308 = vsub.f32 1.0, %v2307
    %v2309 = vmul.f32 %v2306, %v2308
    %v2310 = vadd.f32 %v2306, %v2309
    %vm2311 = vweird.f32 %v2305
    %vm2312 = vweird.f32 %v2306
    %vm2313 = vmor %vm2311, %vm2312
    %v2314 = vsel %vm2313, %v2306, %v2310
    %v2315 = vand.u32 2147483647, %v2305
    %vm2316 = vcmp.eq.f32.partialorder %v2315, 8.507059e+37
    %v2317 = vand.u32 %v2305, 2147483648
    %v2318 = vor.u32 1.1754944e-38, %v2317
    %v2319 = vsel %vm2316, %v2318, %v2314
    %v2320 = vmul.f32 1.0, %v2319
    %v2321 = vmul.f32 %v2300, %v2279
    %v2322 = vadd.f32 %v466, %v2321
    %v2323 = vtanh.pop %v2322
    %v2324 = vsub.f32 1.0, %v2320
    %v2325 = vmul.f32 %v2324, %v2323
    %v2326 = vmul.f32 %v2320, %v2111
    %v2327 = vadd.f32 %v2325, %v2326
    %2328 = vst [vmem:[#allocation9 + $0x38] sm:$0xff] %v2220
    %2329 = vst [vmem:[#allocation10] sm:$0xff] %v2327
    %2330 = vst [vmem:[#allocation2] sm:$0xff] %v2220
    %2331 = vst [vmem:[#allocation3] sm:$0xff] %v2327
    // Predicated region
    $region54: #{gru_layer.1} parent=1 // pred_check
      _
    $region55: #{gru_layer.1} parent=1 // pred_check_branch
      %2333 = sbr.rel (0) target = $region57
    $region56: #{gru_layer.1} parent=1 // pred_region
      %2335 = vsyncadd [#allocation6], 0
      %s2336 = sshll.u32 [#allocation9], 4
      %s2337 = int_to_ptr.vmem [resolvable:$true] %s2336
      %s2338 = sshll.u32 %s10, 4
      %s2339 = int_to_ptr.hbm [resolvable:$true] %s2338
      %2344 = dma.vmem_to_hbm [thread:$0]  %s2337, 1024, %s2339, [#allocation6], 128, 128, 8
    $region57: #{gru_layer.1} parent=1 // pred_fallthru
      _
    // Predicated region
    $region58: #{gru_layer.1} parent=1 // pred_check
      _
    $region59: #{gru_layer.1} parent=1 // pred_check_branch
      %2346 = sbr.rel (0) target = $region61
    $region60: #{gru_layer.1} parent=1 // pred_region
      %s2347 = ssub.s32 0, 0
      %s2348 = smul.u32 8, %s2347
      %2350 = vsyncadd [#allocation11], 0
      %s2351 = smul.addr %s2348, 8
      %s2352 = scalar_lea.hbm %s11, %s2351
      %s2353 = sshll.u32 [#allocation10], 4
      %s2354 = int_to_ptr.vmem [resolvable:$true] %s2353
      %s2355 = sshll.u32 %s2352, 4
      %s2356 = int_to_ptr.hbm [resolvable:$true] %s2355
      %2361 = dma.vmem_to_hbm [thread:$0]  %s2354, 1024, %s2356, [#allocation11], 128, 128, 8
    $region61: #{gru_layer.1} parent=1 // pred_fallthru
      _
    // Predicated region
    $region62: #{gru_layer.1} parent=1 // pred_check
      _
    $region63: #{gru_layer.1} parent=1 // pred_check_branch
      %2363 = sbr.rel (0) target = $region65
    $region64: #{gru_layer.1} parent=1 // pred_region
      %2365 = dma.done [#allocation6], 1024
    $region65: #{gru_layer.1} parent=1 // pred_fallthru
      _
    // Predicated region
    $region66: #{gru_layer.1} parent=1 // pred_check
      _
    $region67: #{gru_layer.1} parent=1 // pred_check_branch
      %2367 = sbr.rel (0) target = $region69
    $region68: #{gru_layer.1} parent=1 // pred_region
      %2369 = dma.done [#allocation11], 1024
    $region69: #{gru_layer.1} parent=1 // pred_fallthru
      _
    %2370 = vsyncpa [#allocation5], 1
    %2371 = vsyncpa [#allocation8], 1
    %2372 = vsyncpa [#allocation6], 1
    %2373 = vsyncpa [#allocation11], 1

</llo_original>
